<compile_context>
chip_gen: v7x
topology: tpu7x:2x2x1
jax: 0.10.0
libtpu: 0.0.40
codegen_flags: <defaults>
</compile_context>

<pallas_src>
import jax
import jax.numpy as jnp
from jax.experimental import pallas as pl
from jax.experimental.pallas import tpu as pltpu


def _linear_kernel(x_ref, w_ref, b_ref, o_ref):
    # x_ref: (M, K) resident (bf16 or f32); w_ref: (K, tn) streamed (bf16/f32);
    # b_ref: (1, N) resident f32; o_ref: (M, tn) f32, written once per step.
    j = pl.program_id(0)
    tn = o_ref.shape[-1]
    start = pl.multiple_of(j * tn, 128)          # lane-aligned bias window
    b_tile = b_ref[:, pl.ds(start, tn)]          # (1, tn) f32

    acc = jnp.dot(x_ref[...], w_ref[...], preferred_element_type=jnp.float32)
    o_ref[...] = (acc + b_tile).astype(o_ref.dtype)


def linear_pallas(x2d, w, b, *, tn=384):
    """x2d: (M, K), w: (K, N) (same dtype as x2d), b: (N,) f32 -> (M, N) f32."""
    M, K = x2d.shape
    K2, N = w.shape
    assert K == K2 and N % tn == 0 and tn % 128 == 0
    b2d = b.reshape(1, N).astype(jnp.float32)

    itemsize = jnp.dtype(x2d.dtype).itemsize
    w_itemsize = jnp.dtype(w.dtype).itemsize
    cost = pl.CostEstimate(
        flops=2 * M * K * N,
        transcendentals=0,
        bytes_accessed=M * K * itemsize + K * N * w_itemsize + N * 4 + M * N * 4,
    )

    return pl.pallas_call(
        _linear_kernel,
        out_shape=jax.ShapeDtypeStruct((M, N), jnp.float32),
        grid_spec=pltpu.PrefetchScalarGridSpec(
            num_scalar_prefetch=0,
            grid=(N // tn,),
            in_specs=[
                pl.BlockSpec((M, K), lambda j: (0, 0)),    # x: fully resident
                pl.BlockSpec((K, tn), lambda j: (0, j)),   # w: stream over N
                pl.BlockSpec((1, N), lambda j: (0, 0)),    # bias: resident
            ],
            out_specs=pl.BlockSpec((M, tn), lambda j: (0, j)),
        ),
        compiler_params=pltpu.CompilerParams(
            dimension_semantics=("parallel",),  # N-blocks are independent
        ),
        cost_estimate=cost,
    )(x2d, w, b2d)


def forward(x, w, b, *, weight_dtype=jnp.bfloat16):
    """x: (1, 7, 7, 3072) -> (1, 7, 7, 768). Dropouts (p=0) are identities.

    weight_dtype=jnp.bfloat16 halves weight HBM traffic (~2x faster kernel,
    ~1e-3 relative numeric change); pass jnp.float32 for exact module numerics.
    """
    lead = x.shape[:-1]
    K = x.shape[-1]
    N = w.shape[-1]
    x2d = x.reshape(-1, K).astype(weight_dtype)
    w_c = w.astype(weight_dtype)
    y2d = linear_pallas(x2d, w_c, b)
    return y2d.reshape(*lead, N)


if __name__ == "__main__":
    key = jax.random.PRNGKey(0)
    k_x, k_w, k_b = jax.random.split(key, 3)

    in_features, out_features = 3072, 768
    x = jax.random.normal(k_x, (1, 7, 7, in_features), dtype=jnp.float32)

    # Linear parameters (PyTorch stores weight as (out, in); kernel uses
    # (in, out) so the matmul is row-major friendly).
    bound = 1.0 / (in_features ** 0.5)
    w = jax.random.uniform(
        k_w, (in_features, out_features), minval=-bound, maxval=bound,
        dtype=jnp.float32,
    )
    b = jax.random.uniform(
        k_b, (out_features,), minval=-bound, maxval=bound, dtype=jnp.float32
    )

    y = forward(x, w, b)
    jax.block_until_ready(y)
    assert y.shape == (1, 7, 7, out_features)

    # 1) Bit-matched reference: same bf16-cast operands, f32 accumulation.
    x2d = x.reshape(-1, in_features)
    xb = x2d.astype(jnp.bfloat16).astype(jnp.float32)
    wb = w.astype(jnp.bfloat16).astype(jnp.float32)
    y_match = (xb @ wb + b).reshape(1, 7, 7, out_features)
    assert jnp.allclose(y, y_match, atol=1e-4, rtol=1e-4)

    # 2) Original f32 module semantics (loose tolerance covers bf16 rounding).
    y_f32 = (x2d @ w + b).reshape(1, 7, 7, out_features)
    assert jnp.allclose(y, y_f32, atol=3e-2, rtol=3e-2)

    print("KERNEL_OK")
</pallas_src>

<mosaic_0001>
module attributes {stable_mosaic.version = 11 : i64} {
  func.func @_linear_kernel(%arg0: i32, %arg1: memref<49x3072xbf16, #tpu.memory_space<vmem>>, %arg2: memref<3072x384xbf16, #tpu.memory_space<vmem>>, %arg3: memref<1x768xf32, #tpu.memory_space<vmem>>, %arg4: memref<49x384xf32, #tpu.memory_space<vmem>>) attributes {dimension_semantics = [#tpu.dimension_semantics<parallel>], iteration_bounds = array<i64: 2>, scalar_prefetch = 0 : i64, scratch_operands = 0 : i64, tpu.core_type = #tpu.core_type<tc>, window_params = [{pipeline_mode = #tpu.pipeline_mode<synchronous>, transform_indices = @transform_0, window_bounds = array<i64: 49, 3072>}, {transform_indices = @transform_1, window_bounds = array<i64: 3072, 384>}, {pipeline_mode = #tpu.pipeline_mode<synchronous>, transform_indices = @transform_2, window_bounds = array<i64: 1, 768>}, {transform_indices = @transform_3, window_bounds = array<i64: 49, 384>}]} {
    %c384_i32 = arith.constant 384 : i32
    %0 = arith.muli %arg0, %c384_i32 : i32
    %1 = tpu.assume_multiple %0, 128 : i32
    %c0 = arith.constant 0 : index
    %2 = arith.index_cast %1 : i32 to index
    %3 = vector.load %arg3[%c0, %2] : memref<1x768xf32, #tpu.memory_space<vmem>>, vector<1x384xf32>
    %c0_0 = arith.constant 0 : index
    %c0_1 = arith.constant 0 : index
    %4 = vector.load %arg1[%c0_0, %c0_1] : memref<49x3072xbf16, #tpu.memory_space<vmem>>, vector<49x3072xbf16>
    %c0_2 = arith.constant 0 : index
    %c0_3 = arith.constant 0 : index
    %5 = vector.load %arg2[%c0_2, %c0_3] : memref<3072x384xbf16, #tpu.memory_space<vmem>>, vector<3072x384xbf16>
    %cst = arith.constant dense<0.000000e+00> : vector<49x384xf32>
    %6 = tpu.matmul %4, %5, %cst {dimension_numbers = #tpu.dot_dimension_numbers<[1], [0], [0], [1], [0, 0, 1, 1], [], []>} : vector<49x3072xbf16>, vector<3072x384xbf16>, vector<49x384xf32> -> vector<49x384xf32>
    %7 = vector.broadcast %3 : vector<1x384xf32> to vector<49x384xf32>
    %8 = arith.addf %6, %7 : vector<49x384xf32>
    %c0_4 = arith.constant 0 : index
    %c0_5 = arith.constant 0 : index
    %9 = vector.load %arg4[%c0_4, %c0_5] : memref<49x384xf32, #tpu.memory_space<vmem>>, vector<49x384xf32>
    tpu.vector_store %arg4[%c0_4, %c0_5], %8 {strides = array<i32>} : memref<49x384xf32, #tpu.memory_space<vmem>>, vector<49x384xf32>,
    return
  }
  func.func @transform_0(%arg0: i32) -> (i32, i32) {
    %c0_i32 = arith.constant 0 : i32
    %c0_i32_0 = arith.constant 0 : i32
    %c0_i32_1 = arith.constant 0 : i32
    return %c0_i32, %c0_i32_0 : i32, i32
  }
  func.func @transform_1(%arg0: i32) -> (i32, i32) {
    %c0_i32 = arith.constant 0 : i32
    %c0_i32_0 = arith.constant 0 : i32
    return %c0_i32, %arg0 : i32, i32
  }
  func.func @transform_2(%arg0: i32) -> (i32, i32) {
    %c0_i32 = arith.constant 0 : i32
    %c0_i32_0 = arith.constant 0 : i32
    %c0_i32_1 = arith.constant 0 : i32
    return %c0_i32, %c0_i32_0 : i32, i32
  }
  func.func @transform_3(%arg0: i32) -> (i32, i32) {
    %c0_i32 = arith.constant 0 : i32
    %c0_i32_0 = arith.constant 0 : i32
    return %c0_i32, %arg0 : i32, i32
  }
}

</mosaic_0001>

<llo_original>
// kernel: tpu_custom_call.1
$region0: #{tpu_custom_call.1}
  #allocation0 [shape = 'u32[]', space=smem, size = 0x4, offset = 0x4, fixed_abs, tag = 'smem constant byte address 0x4 - core index']
  #allocation1 [shape = 'u32[144,128]{1,0:T(1,128)}', space=vmem, size = 0x12000, scoped, tag = 'internal scratch']
  %s0 = inlined_call_operand.hbm [shape: bf16[49,3072], index: 0, kind: input, shape index: {}]
  %s1 = inlined_call_operand.hbm [shape: bf16[3072,768], index: 1, kind: input, shape index: {}]
  %s2 = inlined_call_operand.hbm [shape: f32[1,768], index: 2, kind: input, shape index: {}]
  %s3 = inlined_call_operand.hbm [shape: f32[49,768], index: 3, kind: output, shape index: {}]
  %s4 = sld [smem:[#allocation0]]
  $region57: #{tpu_custom_call.1} parent=0
    _
  %s6 = ssub.s32 1, %s4
  %s7 = scalar_select 0, %s6, %s4
  $region1: #{tpu_custom_call.1} parent=0
    #allocation2 [shape = 'u8[344064]{0}', space=vmem, size = 0x54000, scoped, tag = 'input window, operand 0, single buffered']
    #allocation3 [shape = 's32[2]{0}', space=sflag, size = 0x8, scoped, tag = 'scoped memory for tpu_custom_call.1']
    #allocation4 [shape = 's32[2]{0}', space=sflag, size = 0x8, scoped, tag = 'scoped memory for tpu_custom_call.1']
    #allocation5 [shape = 'u8[4718592]{0}', space=vmem, size = 0x480000, scoped, tag = 'input window, operand 1']
    #allocation6 [shape = 's32[2]{0}', space=sflag, size = 0x8, scoped, tag = 'scoped memory for tpu_custom_call.1']
    #allocation7 [shape = 'u8[3072]{0}', space=vmem, size = 0xc00, scoped, tag = 'input window, operand 2, single buffered']
    #allocation8 [shape = 'u8[172032]{0}', space=vmem, size = 0x2a000, scoped, tag = 'output window, operand 0']
    %8 = vsyncpa [#allocation3], 0
    %9 = vsyncpa [#allocation6], 0
    %s10 = scalar_lea.sflag [#allocation6], 1
    %11 = vsyncpa %s10, 0
    %12 = vsyncpa [#allocation4], 0
    %s13 = scalar_lea.sflag [#allocation4], 1
    %14 = vsyncpa %s13, 0
    loop: start=0, step=1, limit=4
    $region2: #{tpu_custom_call.1} parent=1 // loop_pre_header
      _
    $region3: #{tpu_custom_call.1} parent=1 // loop_header
      %s16 = sphi 0, %s20
      %p17 = scmp.ge.s32.totalorder %s16, 4
      %s24 = sphi 0, %s24
      %s26 = sphi 0, %s24
      %s27 = sphi 0, %s26
      %s41 = sphi 0, %s27
      %s47 = sphi 0, %s49
      %s50 = sphi 0, %s47
      %s51 = sphi 0, %s50
      %s67 = sphi 0, %s51
      %s71 = sphi 0, %s71
      %s73 = sphi 0, %s71
      %s74 = sphi 0, %s73
      %s88 = sphi 0, %s74
      %s94 = sphi 0, %s96
      %s97 = sphi 0, %s94
      %s98 = sphi 0, %s97
      %s114 = sphi 0, %s98
    $region4: #{tpu_custom_call.1} parent=1 // loop_header_branch
      %19 = sbr.rel (%p17) target = $region8
    $region5: #{tpu_custom_call.1} parent=1 // loop_body
      %s21 = ssub.s32 %s16, 1
      %s22 = ssub.s32 %s16, 2
      %s23 = sadd.s32 %s16, 1
      %s25 = sadd.s32 %s24, 1
      %p28 = scmp.eq.s32.totalorder %s16, 1
      %p29 = scmp.ne.s32.totalorder %s24, %s26
      %p30 = scmp.eq.s32.totalorder %s16, 0
      %p31 = por %p29, %p30
      %p32 = scmp.ne.s32.totalorder %s24, %s26
      %p33 = scmp.eq.s32.totalorder %s21, 1
      %p34 = por %p32, %p33
      %p35 = scmp.ne.s32.totalorder %s26, %s27
      %p36 = scmp.eq.s32.totalorder %s21, 0
      %p37 = por %p35, %p36
      %p38 = scmp.ne.s32.totalorder %s26, %s27
      %p39 = scmp.eq.s32.totalorder %s22, 1
      %p40 = por %p38, %p39
      %p42 = scmp.ne.s32.totalorder %s27, %s41
      %p43 = scmp.eq.s32.totalorder %s22, 0
      %p44 = por %p42, %p43
      %s45 = ssub.s32 %s16, %s23
      %p46 = scmp.eq.s32.totalorder %s45, 0
      %s48 = sadd.s32 %s47, 1
      %s49 = scalar_select %p46, %s47, %s48
      %p52 = pneg %p46
      %p53 = scmp.eq.s32.totalorder %s16, 1
      %p54 = por %p52, %p53
      %p55 = scmp.ne.s32.totalorder %s47, %s50
      %p56 = scmp.eq.s32.totalorder %s16, 0
      %p57 = por %p55, %p56
      %p58 = scmp.ne.s32.totalorder %s47, %s50
      %p59 = scmp.eq.s32.totalorder %s21, 1
      %p60 = por %p58, %p59
      %p61 = scmp.ne.s32.totalorder %s50, %s51
      %p62 = scmp.eq.s32.totalorder %s21, 0
      %p63 = por %p61, %p62
      %p64 = scmp.ne.s32.totalorder %s50, %s51
      %p65 = scmp.eq.s32.totalorder %s22, 1
      %p66 = por %p64, %p65
      %p68 = scmp.ne.s32.totalorder %s51, %s67
      %p69 = scmp.eq.s32.totalorder %s22, 0
      %p70 = por %p68, %p69
      %s72 = sadd.s32 %s71, 1
      %p75 = scmp.eq.s32.totalorder %s16, 1
      %p76 = scmp.ne.s32.totalorder %s71, %s73
      %p77 = scmp.eq.s32.totalorder %s16, 0
      %p78 = por %p76, %p77
      %p79 = scmp.ne.s32.totalorder %s71, %s73
      %p80 = scmp.eq.s32.totalorder %s21, 1
      %p81 = por %p79, %p80
      %p82 = scmp.ne.s32.totalorder %s73, %s74
      %p83 = scmp.eq.s32.totalorder %s21, 0
      %p84 = por %p82, %p83
      %p85 = scmp.ne.s32.totalorder %s73, %s74
      %p86 = scmp.eq.s32.totalorder %s22, 1
      %p87 = por %p85, %p86
      %p89 = scmp.ne.s32.totalorder %s74, %s88
      %p90 = scmp.eq.s32.totalorder %s22, 0
      %p91 = por %p89, %p90
      %s92 = ssub.s32 %s16, %s23
      %p93 = scmp.eq.s32.totalorder %s92, 0
      %s95 = sadd.s32 %s94, 1
      %s96 = scalar_select %p93, %s94, %s95
      %p99 = pneg %p93
      %p100 = scmp.eq.s32.totalorder %s16, 1
      %p101 = por %p99, %p100
      %p102 = scmp.ne.s32.totalorder %s94, %s97
      %p103 = scmp.eq.s32.totalorder %s16, 0
      %p104 = por %p102, %p103
      %p105 = scmp.ne.s32.totalorder %s94, %s97
      %p106 = scmp.eq.s32.totalorder %s21, 1
      %p107 = por %p105, %p106
      %p108 = scmp.ne.s32.totalorder %s97, %s98
      %p109 = scmp.eq.s32.totalorder %s21, 0
      %p110 = por %p108, %p109
      %p111 = scmp.ne.s32.totalorder %s97, %s98
      %p112 = scmp.eq.s32.totalorder %s22, 1
      %p113 = por %p111, %p112
      %p115 = scmp.ne.s32.totalorder %s98, %s114
      %p116 = scmp.eq.s32.totalorder %s22, 0
      %p117 = por %p115, %p116
      %p118 = scmp.le.s32.totalorder 1, %s16
      %p119 = scmp.lt.s32.totalorder %s16, 3
      %p120 = pnand %p118, %p119
      %p121 = pneg %p120
      // Predicated region
      $region9: #{tpu_custom_call.1} parent=5 // pred_check
        _
      $region10: #{tpu_custom_call.1} parent=5 // pred_check_branch
        %123 = sbr.rel (%p120) target = $region12
      $region11: #{tpu_custom_call.1} parent=5 // pred_region
        %s124 = ssub.s32 %s16, 1
        // Predicated region
        $region13: #{tpu_custom_call.1} parent=11 // pred_check
          %p125 = pneg %p37
        $region14: #{tpu_custom_call.1} parent=11 // pred_check_branch
          %127 = sbr.rel (%p125) target = $region16
        $region15: #{tpu_custom_call.1} parent=11 // pred_region
          %s129 = ssub.s32 10752, 10752
          %130 = vsyncadd [#allocation3], %s129
          %s131 = sshll.u32 [#allocation2], 4
          %s132 = int_to_ptr.vmem [resolvable:$true] %s131
          %137 = dma.hbm_to_vmem [thread:$0]  %s0, 10752, %s132, [#allocation3], 1536, 1536, 96
        $region16: #{tpu_custom_call.1} parent=11 // pred_fallthru
          _
        // Predicated region
        $region17: #{tpu_custom_call.1} parent=11 // pred_check
          %p138 = pneg %p84
        $region18: #{tpu_custom_call.1} parent=11 // pred_check_branch
          %140 = sbr.rel (%p138) target = $region20
        $region19: #{tpu_custom_call.1} parent=11 // pred_region
          %s142 = ssub.s32 96, 96
          %143 = vsyncadd [#allocation6], %s142
          %s145 = sshll.u32 [#allocation7], 4
          %s146 = int_to_ptr.vmem [resolvable:$true] %s145
          %148 = dma.hbm_to_vmem [thread:$0]  %s2, 96, %s146, [#allocation6]
        $region20: #{tpu_custom_call.1} parent=11 // pred_fallthru
          _
      $region12: #{tpu_custom_call.1} parent=5 // pred_fallthru
        _
      %p149 = scmp.lt.s32.totalorder %s16, 2
      // Predicated region
      $region21: #{tpu_custom_call.1} parent=5 // pred_check
        %p150 = pneg %p149
      $region22: #{tpu_custom_call.1} parent=5 // pred_check_branch
        %152 = sbr.rel (%p150) target = $region24
      $region23: #{tpu_custom_call.1} parent=5 // pred_region
        // Predicated region
        $region25: #{tpu_custom_call.1} parent=23 // pred_check
          %p153 = pneg %p57
        $region26: #{tpu_custom_call.1} parent=23 // pred_check_branch
          %155 = sbr.rel (%p153) target = $region28
        $region27: #{tpu_custom_call.1} parent=23 // pred_region
          %s156 = sand.u32 %s16, 1
          %s157 = scalar_lea.sflag [#allocation6], %s156
          %s158 = sand.u32 %s47, 1
          %s159 = smul.addr %s158, 4608
          %s160 = scalar_lea.vmem [#allocation5], %s159
          %s161 = smul.u32 3, %s16
          %s163 = ssub.s32 73728, 73728
          %164 = vsyncadd %s157, %s163
          %s165 = smul.addr %s161, 64
          %s166 = scalar_lea.hbm %s1, %s165
          %s167 = sshll.u32 %s160, 4
          %s168 = int_to_ptr.vmem [resolvable:$true] %s167
          %173 = dma.hbm_to_vmem [thread:$0]  %s166, 73728, %s168, %s157, 384, 192, 12
        $region28: #{tpu_custom_call.1} parent=23 // pred_fallthru
          _
      $region24: #{tpu_custom_call.1} parent=5 // pred_fallthru
        _
      %p174 = scmp.le.s32.totalorder 1, %s16
      %p175 = scmp.lt.s32.totalorder %s16, 3
      %p176 = pnand %p174, %p175
      %p177 = pneg %p176
      // Predicated region
      $region29: #{tpu_custom_call.1} parent=5 // pred_check
        _
      $region30: #{tpu_custom_call.1} parent=5 // pred_check_branch
        %179 = sbr.rel (%p176) target = $region32
      $region31: #{tpu_custom_call.1} parent=5 // pred_region
        %s180 = ssub.s32 %s16, 1
        // Predicated region
        $region33: #{tpu_custom_call.1} parent=31 // pred_check
          %p181 = pneg %p37
        $region34: #{tpu_custom_call.1} parent=31 // pred_check_branch
          %183 = sbr.rel (%p181) target = $region36
        $region35: #{tpu_custom_call.1} parent=31 // pred_region
          %184 = dma.done [#allocation3], 10752
        $region36: #{tpu_custom_call.1} parent=31 // pred_fallthru
          _
        %s185 = sand.u32 %s21, 1
        %s186 = scalar_lea.sflag [#allocation6], %s185
        %s187 = sand.u32 %s50, 1
        %s188 = smul.addr %s187, 4608
        %s189 = scalar_lea.vmem [#allocation5], %s188
        // Predicated region
        $region37: #{tpu_custom_call.1} parent=31 // pred_check
          %p190 = pneg %p63
        $region38: #{tpu_custom_call.1} parent=31 // pred_check_branch
          %192 = sbr.rel (%p190) target = $region40
        $region39: #{tpu_custom_call.1} parent=31 // pred_region
          %193 = dma.done %s186, 73728
        $region40: #{tpu_custom_call.1} parent=31 // pred_fallthru
          _
        // Predicated region
        $region41: #{tpu_custom_call.1} parent=31 // pred_check
          %p194 = pneg %p84
        $region42: #{tpu_custom_call.1} parent=31 // pred_check_branch
          %196 = sbr.rel (%p194) target = $region44
        $region43: #{tpu_custom_call.1} parent=31 // pred_region
          %197 = dma.done [#allocation6], 96
        $region44: #{tpu_custom_call.1} parent=31 // pred_fallthru
          _
        %p198 = pneg %p37
        %p199 = pneg %p34
        %s200 = sand.u32 %s21, 1
        %s201 = scalar_lea.sflag [#allocation6], %s200
        %s202 = sand.u32 %s50, 1
        %s203 = smul.addr %s202, 4608
        %s204 = scalar_lea.vmem [#allocation5], %s203
        %p205 = pneg %p63
        %p206 = pneg %p60
        %p207 = pneg %p84
        %p208 = pneg %p81
        %p209 = pneg %p110
        %p210 = pneg %p107
        %s211 = sand.u32 %s97, 1
        %s212 = scalar_lea.sflag [#allocation4], %s211
        %s213 = sand.u32 %s97, 1
        %s214 = smul.addr %s213, 168
        %s215 = scalar_lea.vmem [#allocation8], %s214
        %s216 = smul.u32 3, %s21
        %s217 = smul.u32 3, %s21
        %s219 = smul.u32 %s21, 384
        %s220 = sshra.s32 %s219, 7
        %s221 = sand.u32 %s219, 127
        %s222 = scalar_lea.vmem [#allocation7], %s220
        %v223 = vld [vmem:[%s222] sm:$0x7]
        %v224 = vld [vmem:[#allocation2] sm:$0xff]
        %v225 = vld [vmem:[#allocation2 + $0x8] sm:$0xff]
        %v226 = vld [vmem:[#allocation2 + $0x10] sm:$0xff]
        %v227 = vld [vmem:[#allocation2 + $0x18] sm:$0xff]
        %v228 = vld [vmem:[#allocation2 + $0x20] sm:$0xff]
        %v229 = vld [vmem:[#allocation2 + $0x28] sm:$0xff]
        %v230 = vld [vmem:[#allocation2 + $0x30] sm:$0xff]
        %v231 = vld [vmem:[#allocation2 + $0x38] sm:$0xff]
        %v232 = vld [vmem:[#allocation2 + $0x40] sm:$0xff]
        %v233 = vld [vmem:[#allocation2 + $0x48] sm:$0xff]
        %v234 = vld [vmem:[#allocation2 + $0x50] sm:$0xff]
        %v235 = vld [vmem:[#allocation2 + $0x58] sm:$0xff]
        %v236 = vld [vmem:[#allocation2 + $0x60] sm:$0xff]
        %v237 = vld [vmem:[#allocation2 + $0x68] sm:$0xff]
        %v238 = vld [vmem:[#allocation2 + $0x70] sm:$0xff]
        %v239 = vld [vmem:[#allocation2 + $0x78] sm:$0xff]
        %v240 = vld [vmem:[#allocation2 + $0x80] sm:$0xff]
        %v241 = vld [vmem:[#allocation2 + $0x88] sm:$0xff]
        %v242 = vld [vmem:[#allocation2 + $0x90] sm:$0xff]
        %v243 = vld [vmem:[#allocation2 + $0x98] sm:$0xff]
        %v244 = vld [vmem:[#allocation2 + $0xa0] sm:$0xff]
        %v245 = vld [vmem:[#allocation2 + $0xa8] sm:$0xff]
        %v246 = vld [vmem:[#allocation2 + $0xb0] sm:$0xff]
        %v247 = vld [vmem:[#allocation2 + $0xb8] sm:$0xff]
        %v248 = vld [vmem:[#allocation2 + $0xc0] sm:$0xff]
        %v249 = vld [vmem:[#allocation2 + $0xc8] sm:$0xff]
        %v250 = vld [vmem:[#allocation2 + $0xd0] sm:$0xff]
        %v251 = vld [vmem:[#allocation2 + $0xd8] sm:$0xff]
        %v252 = vld [vmem:[#allocation2 + $0xe0] sm:$0xff]
        %v253 = vld [vmem:[#allocation2 + $0xe8] sm:$0xff]
        %v254 = vld [vmem:[#allocation2 + $0xf0] sm:$0xff]
        %v255 = vld [vmem:[#allocation2 + $0xf8] sm:$0xff]
        %v256 = vld [vmem:[#allocation2 + $0x100] sm:$0xff]
        %v257 = vld [vmem:[#allocation2 + $0x108] sm:$0xff]
        %v258 = vld [vmem:[#allocation2 + $0x110] sm:$0xff]
        %v259 = vld [vmem:[#allocation2 + $0x118] sm:$0xff]
        %v260 = vld [vmem:[#allocation2 + $0x120] sm:$0xff]
        %v261 = vld [vmem:[#allocation2 + $0x128] sm:$0xff]
        %v262 = vld [vmem:[#allocation2 + $0x130] sm:$0xff]
        %v263 = vld [vmem:[#allocation2 + $0x138] sm:$0xff]
        %v264 = vld [vmem:[#allocation2 + $0x140] sm:$0xff]
        %v265 = vld [vmem:[#allocation2 + $0x148] sm:$0xff]
        %v266 = vld [vmem:[#allocation2 + $0x150] sm:$0xff]
        %v267 = vld [vmem:[#allocation2 + $0x158] sm:$0xff]
        %v268 = vld [vmem:[#allocation2 + $0x160] sm:$0xff]
        %v269 = vld [vmem:[#allocation2 + $0x168] sm:$0xff]
        %v270 = vld [vmem:[#allocation2 + $0x170] sm:$0xff]
        %v271 = vld [vmem:[#allocation2 + $0x178] sm:$0xff]
        %v272 = vld [vmem:[#allocation2 + $0x180] sm:$0xff]
        %v273 = vld [vmem:[#allocation2 + $0x188] sm:$0xff]
        %v274 = vld [vmem:[#allocation2 + $0x190] sm:$0xff]
        %v275 = vld [vmem:[#allocation2 + $0x198] sm:$0xff]
        %v276 = vld [vmem:[#allocation2 + $0x1a0] sm:$0xff]
        %v277 = vld [vmem:[#allocation2 + $0x1a8] sm:$0xff]
        %v278 = vld [vmem:[#allocation2 + $0x1b0] sm:$0xff]
        %v279 = vld [vmem:[#allocation2 + $0x1b8] sm:$0xff]
        %v280 = vld [vmem:[#allocation2 + $0x1c0] sm:$0xff]
        %v281 = vld [vmem:[#allocation2 + $0x1c8] sm:$0xff]
        %v282 = vld [vmem:[#allocation2 + $0x1d0] sm:$0xff]
        %v283 = vld [vmem:[#allocation2 + $0x1d8] sm:$0xff]
        %v284 = vld [vmem:[#allocation2 + $0x1e0] sm:$0xff]
        %v285 = vld [vmem:[#allocation2 + $0x1e8] sm:$0xff]
        %v286 = vld [vmem:[#allocation2 + $0x1f0] sm:$0xff]
        %v287 = vld [vmem:[#allocation2 + $0x1f8] sm:$0xff]
        %v288 = vld [vmem:[#allocation2 + $0x200] sm:$0xff]
        %v289 = vld [vmem:[#allocation2 + $0x208] sm:$0xff]
        %v290 = vld [vmem:[#allocation2 + $0x210] sm:$0xff]
        %v291 = vld [vmem:[#allocation2 + $0x218] sm:$0xff]
        %v292 = vld [vmem:[#allocation2 + $0x220] sm:$0xff]
        %v293 = vld [vmem:[#allocation2 + $0x228] sm:$0xff]
        %v294 = vld [vmem:[#allocation2 + $0x230] sm:$0xff]
        %v295 = vld [vmem:[#allocation2 + $0x238] sm:$0xff]
        %v296 = vld [vmem:[#allocation2 + $0x240] sm:$0x11]
        %v297 = vld [vmem:[#allocation2 + $0x248] sm:$0x11]
        %v298 = vld [vmem:[#allocation2 + $0x250] sm:$0x11]
        %v299 = vld [vmem:[#allocation2 + $0x258] sm:$0x11]
        %v300 = vld [vmem:[#allocation2 + $0x260] sm:$0x11]
        %v301 = vld [vmem:[#allocation2 + $0x268] sm:$0x11]
        %v302 = vld [vmem:[#allocation2 + $0x270] sm:$0x11]
        %v303 = vld [vmem:[#allocation2 + $0x278] sm:$0x11]
        %v304 = vld [vmem:[#allocation2 + $0x280] sm:$0x11]
        %v305 = vld [vmem:[#allocation2 + $0x288] sm:$0x11]
        %v306 = vld [vmem:[#allocation2 + $0x290] sm:$0x11]
        %v307 = vld [vmem:[#allocation2 + $0x298] sm:$0x11]
        %v308 = vld [vmem:[%s189] sm:$0xff]
        %v309 = vld [vmem:[%s189 + $0x8] sm:$0xf]
        %v310 = vld [vmem:[%s189 + $0xc] sm:$0xff]
        %v311 = vld [vmem:[%s189 + $0x14] sm:$0xf]
        %v312 = vld [vmem:[%s189 + $0x18] sm:$0xff]
        %v313 = vld [vmem:[%s189 + $0x20] sm:$0xf]
        %v314 = vld [vmem:[%s189 + $0x24] sm:$0xff]
        %v315 = vld [vmem:[%s189 + $0x2c] sm:$0xf]
        %v316 = vld [vmem:[%s189 + $0x30] sm:$0xff]
        %v317 = vld [vmem:[%s189 + $0x38] sm:$0xf]
        %v318 = vld [vmem:[%s189 + $0x3c] sm:$0xff]
        %v319 = vld [vmem:[%s189 + $0x44] sm:$0xf]
        %v320 = vld [vmem:[%s189 + $0x48] sm:$0xff]
        %v321 = vld [vmem:[%s189 + $0x50] sm:$0xf]
        %v322 = vld [vmem:[%s189 + $0x54] sm:$0xff]
        %v323 = vld [vmem:[%s189 + $0x5c] sm:$0xf]
        %v324 = vld [vmem:[%s189 + $0x60] sm:$0xff]
        %v325 = vld [vmem:[%s189 + $0x68] sm:$0xf]
        %v326 = vld [vmem:[%s189 + $0x6c] sm:$0xff]
        %v327 = vld [vmem:[%s189 + $0x74] sm:$0xf]
        %v328 = vld [vmem:[%s189 + $0x78] sm:$0xff]
        %v329 = vld [vmem:[%s189 + $0x80] sm:$0xf]
        %v330 = vld [vmem:[%s189 + $0x84] sm:$0xff]
        %v331 = vld [vmem:[%s189 + $0x8c] sm:$0xf]
        %v332 = vld [vmem:[%s189 + $0x90] sm:$0xff]
        %v333 = vld [vmem:[%s189 + $0x98] sm:$0xf]
        %v334 = vld [vmem:[%s189 + $0x9c] sm:$0xff]
        %v335 = vld [vmem:[%s189 + $0xa4] sm:$0xf]
        %v336 = vld [vmem:[%s189 + $0xa8] sm:$0xff]
        %v337 = vld [vmem:[%s189 + $0xb0] sm:$0xf]
        %v338 = vld [vmem:[%s189 + $0xb4] sm:$0xff]
        %v339 = vld [vmem:[%s189 + $0xbc] sm:$0xf]
        %v340 = vld [vmem:[%s189 + $0xc0] sm:$0xff]
        %v341 = vld [vmem:[%s189 + $0xc8] sm:$0xf]
        %v342 = vld [vmem:[%s189 + $0xcc] sm:$0xff]
        %v343 = vld [vmem:[%s189 + $0xd4] sm:$0xf]
        %v344 = vld [vmem:[%s189 + $0xd8] sm:$0xff]
        %v345 = vld [vmem:[%s189 + $0xe0] sm:$0xf]
        %v346 = vld [vmem:[%s189 + $0xe4] sm:$0xff]
        %v347 = vld [vmem:[%s189 + $0xec] sm:$0xf]
        %v348 = vld [vmem:[%s189 + $0xf0] sm:$0xff]
        %v349 = vld [vmem:[%s189 + $0xf8] sm:$0xf]
        %v350 = vld [vmem:[%s189 + $0xfc] sm:$0xff]
        %v351 = vld [vmem:[%s189 + $0x104] sm:$0xf]
        %v352 = vld [vmem:[%s189 + $0x108] sm:$0xff]
        %v353 = vld [vmem:[%s189 + $0x110] sm:$0xf]
        %v354 = vld [vmem:[%s189 + $0x114] sm:$0xff]
        %v355 = vld [vmem:[%s189 + $0x11c] sm:$0xf]
        %v356 = vld [vmem:[%s189 + $0x120] sm:$0xff]
        %v357 = vld [vmem:[%s189 + $0x128] sm:$0xf]
        %v358 = vld [vmem:[%s189 + $0x12c] sm:$0xff]
        %v359 = vld [vmem:[%s189 + $0x134] sm:$0xf]
        %v360 = vld [vmem:[%s189 + $0x138] sm:$0xff]
        %v361 = vld [vmem:[%s189 + $0x140] sm:$0xf]
        %v362 = vld [vmem:[%s189 + $0x144] sm:$0xff]
        %v363 = vld [vmem:[%s189 + $0x14c] sm:$0xf]
        %v364 = vld [vmem:[%s189 + $0x150] sm:$0xff]
        %v365 = vld [vmem:[%s189 + $0x158] sm:$0xf]
        %v366 = vld [vmem:[%s189 + $0x15c] sm:$0xff]
        %v367 = vld [vmem:[%s189 + $0x164] sm:$0xf]
        %v368 = vld [vmem:[%s189 + $0x168] sm:$0xff]
        %v369 = vld [vmem:[%s189 + $0x170] sm:$0xf]
        %v370 = vld [vmem:[%s189 + $0x174] sm:$0xff]
        %v371 = vld [vmem:[%s189 + $0x17c] sm:$0xf]
        %v372 = vld [vmem:[%s189 + $0x180] sm:$0xff]
        %v373 = vld [vmem:[%s189 + $0x188] sm:$0xf]
        %v374 = vld [vmem:[%s189 + $0x18c] sm:$0xff]
        %v375 = vld [vmem:[%s189 + $0x194] sm:$0xf]
        %v376 = vld [vmem:[%s189 + $0x198] sm:$0xff]
        %v377 = vld [vmem:[%s189 + $0x1a0] sm:$0xf]
        %v378 = vld [vmem:[%s189 + $0x1a4] sm:$0xff]
        %v379 = vld [vmem:[%s189 + $0x1ac] sm:$0xf]
        %v380 = vld [vmem:[%s189 + $0x1b0] sm:$0xff]
        %v381 = vld [vmem:[%s189 + $0x1b8] sm:$0xf]
        %v382 = vld [vmem:[%s189 + $0x1bc] sm:$0xff]
        %v383 = vld [vmem:[%s189 + $0x1c4] sm:$0xf]
        %v384 = vld [vmem:[%s189 + $0x1c8] sm:$0xff]
        %v385 = vld [vmem:[%s189 + $0x1d0] sm:$0xf]
        %v386 = vld [vmem:[%s189 + $0x1d4] sm:$0xff]
        %v387 = vld [vmem:[%s189 + $0x1dc] sm:$0xf]
        %v388 = vld [vmem:[%s189 + $0x1e0] sm:$0xff]
        %v389 = vld [vmem:[%s189 + $0x1e8] sm:$0xf]
        %v390 = vld [vmem:[%s189 + $0x1ec] sm:$0xff]
        %v391 = vld [vmem:[%s189 + $0x1f4] sm:$0xf]
        %v392 = vld [vmem:[%s189 + $0x1f8] sm:$0xff]
        %v393 = vld [vmem:[%s189 + $0x200] sm:$0xf]
        %v394 = vld [vmem:[%s189 + $0x204] sm:$0xff]
        %v395 = vld [vmem:[%s189 + $0x20c] sm:$0xf]
        %v396 = vld [vmem:[%s189 + $0x210] sm:$0xff]
        %v397 = vld [vmem:[%s189 + $0x218] sm:$0xf]
        %v398 = vld [vmem:[%s189 + $0x21c] sm:$0xff]
        %v399 = vld [vmem:[%s189 + $0x224] sm:$0xf]
        %v400 = vld [vmem:[%s189 + $0x228] sm:$0xff]
        %v401 = vld [vmem:[%s189 + $0x230] sm:$0xf]
        %v402 = vld [vmem:[%s189 + $0x234] sm:$0xff]
        %v403 = vld [vmem:[%s189 + $0x23c] sm:$0xf]
        %v404 = vld [vmem:[%s189 + $0x240] sm:$0xff]
        %v405 = vld [vmem:[%s189 + $0x248] sm:$0xf]
        %v406 = vld [vmem:[%s189 + $0x24c] sm:$0xff]
        %v407 = vld [vmem:[%s189 + $0x254] sm:$0xf]
        %v408 = vld [vmem:[%s189 + $0x258] sm:$0xff]
        %v409 = vld [vmem:[%s189 + $0x260] sm:$0xf]
        %v410 = vld [vmem:[%s189 + $0x264] sm:$0xff]
        %v411 = vld [vmem:[%s189 + $0x26c] sm:$0xf]
        %v412 = vld [vmem:[%s189 + $0x270] sm:$0xff]
        %v413 = vld [vmem:[%s189 + $0x278] sm:$0xf]
        %v414 = vld [vmem:[%s189 + $0x27c] sm:$0xff]
        %v415 = vld [vmem:[%s189 + $0x284] sm:$0xf]
        %v416 = vld [vmem:[%s189 + $0x288] sm:$0xff]
        %v417 = vld [vmem:[%s189 + $0x290] sm:$0xf]
        %v418 = vld [vmem:[%s189 + $0x294] sm:$0xff]
        %v419 = vld [vmem:[%s189 + $0x29c] sm:$0xf]
        %v420 = vld [vmem:[%s189 + $0x2a0] sm:$0xff]
        %v421 = vld [vmem:[%s189 + $0x2a8] sm:$0xf]
        %v422 = vld [vmem:[%s189 + $0x2ac] sm:$0xff]
        %v423 = vld [vmem:[%s189 + $0x2b4] sm:$0xf]
        %v424 = vld [vmem:[%s189 + $0x2b8] sm:$0xff]
        %v425 = vld [vmem:[%s189 + $0x2c0] sm:$0xf]
        %v426 = vld [vmem:[%s189 + $0x2c4] sm:$0xff]
        %v427 = vld [vmem:[%s189 + $0x2cc] sm:$0xf]
        %v428 = vld [vmem:[%s189 + $0x2d0] sm:$0xff]
        %v429 = vld [vmem:[%s189 + $0x2d8] sm:$0xf]
        %v430 = vld [vmem:[%s189 + $0x2dc] sm:$0xff]
        %v431 = vld [vmem:[%s189 + $0x2e4] sm:$0xf]
        %v432 = vld [vmem:[%s189 + $0x2e8] sm:$0xff]
        %v433 = vld [vmem:[%s189 + $0x2f0] sm:$0xf]
        %v434 = vld [vmem:[%s189 + $0x2f4] sm:$0xff]
        %v435 = vld [vmem:[%s189 + $0x2fc] sm:$0xf]
        %v436 = vld [vmem:[%s189 + $0x300] sm:$0xff]
        %v437 = vld [vmem:[%s189 + $0x308] sm:$0xf]
        %v438 = vld [vmem:[%s189 + $0x30c] sm:$0xff]
        %v439 = vld [vmem:[%s189 + $0x314] sm:$0xf]
        %v440 = vld [vmem:[%s189 + $0x318] sm:$0xff]
        %v441 = vld [vmem:[%s189 + $0x320] sm:$0xf]
        %v442 = vld [vmem:[%s189 + $0x324] sm:$0xff]
        %v443 = vld [vmem:[%s189 + $0x32c] sm:$0xf]
        %v444 = vld [vmem:[%s189 + $0x330] sm:$0xff]
        %v445 = vld [vmem:[%s189 + $0x338] sm:$0xf]
        %v446 = vld [vmem:[%s189 + $0x33c] sm:$0xff]
        %v447 = vld [vmem:[%s189 + $0x344] sm:$0xf]
        %v448 = vld [vmem:[%s189 + $0x348] sm:$0xff]
        %v449 = vld [vmem:[%s189 + $0x350] sm:$0xf]
        %v450 = vld [vmem:[%s189 + $0x354] sm:$0xff]
        %v451 = vld [vmem:[%s189 + $0x35c] sm:$0xf]
        %v452 = vld [vmem:[%s189 + $0x360] sm:$0xff]
        %v453 = vld [vmem:[%s189 + $0x368] sm:$0xf]
        %v454 = vld [vmem:[%s189 + $0x36c] sm:$0xff]
        %v455 = vld [vmem:[%s189 + $0x374] sm:$0xf]
        %v456 = vld [vmem:[%s189 + $0x378] sm:$0xff]
        %v457 = vld [vmem:[%s189 + $0x380] sm:$0xf]
        %v458 = vld [vmem:[%s189 + $0x384] sm:$0xff]
        %v459 = vld [vmem:[%s189 + $0x38c] sm:$0xf]
        %v460 = vld [vmem:[%s189 + $0x390] sm:$0xff]
        %v461 = vld [vmem:[%s189 + $0x398] sm:$0xf]
        %v462 = vld [vmem:[%s189 + $0x39c] sm:$0xff]
        %v463 = vld [vmem:[%s189 + $0x3a4] sm:$0xf]
        %v464 = vld [vmem:[%s189 + $0x3a8] sm:$0xff]
        %v465 = vld [vmem:[%s189 + $0x3b0] sm:$0xf]
        %v466 = vld [vmem:[%s189 + $0x3b4] sm:$0xff]
        %v467 = vld [vmem:[%s189 + $0x3bc] sm:$0xf]
        %v468 = vld [vmem:[%s189 + $0x3c0] sm:$0xff]
        %v469 = vld [vmem:[%s189 + $0x3c8] sm:$0xf]
        %v470 = vld [vmem:[%s189 + $0x3cc] sm:$0xff]
        %v471 = vld [vmem:[%s189 + $0x3d4] sm:$0xf]
        %v472 = vld [vmem:[%s189 + $0x3d8] sm:$0xff]
        %v473 = vld [vmem:[%s189 + $0x3e0] sm:$0xf]
        %v474 = vld [vmem:[%s189 + $0x3e4] sm:$0xff]
        %v475 = vld [vmem:[%s189 + $0x3ec] sm:$0xf]
        %v476 = vld [vmem:[%s189 + $0x3f0] sm:$0xff]
        %v477 = vld [vmem:[%s189 + $0x3f8] sm:$0xf]
        %v478 = vld [vmem:[%s189 + $0x3fc] sm:$0xff]
        %v479 = vld [vmem:[%s189 + $0x404] sm:$0xf]
        %v480 = vld [vmem:[%s189 + $0x408] sm:$0xff]
        %v481 = vld [vmem:[%s189 + $0x410] sm:$0xf]
        %v482 = vld [vmem:[%s189 + $0x414] sm:$0xff]
        %v483 = vld [vmem:[%s189 + $0x41c] sm:$0xf]
        %v484 = vld [vmem:[%s189 + $0x420] sm:$0xff]
        %v485 = vld [vmem:[%s189 + $0x428] sm:$0xf]
        %v486 = vld [vmem:[%s189 + $0x42c] sm:$0xff]
        %v487 = vld [vmem:[%s189 + $0x434] sm:$0xf]
        %v488 = vld [vmem:[%s189 + $0x438] sm:$0xff]
        %v489 = vld [vmem:[%s189 + $0x440] sm:$0xf]
        %v490 = vld [vmem:[%s189 + $0x444] sm:$0xff]
        %v491 = vld [vmem:[%s189 + $0x44c] sm:$0xf]
        %v492 = vld [vmem:[%s189 + $0x450] sm:$0xff]
        %v493 = vld [vmem:[%s189 + $0x458] sm:$0xf]
        %v494 = vld [vmem:[%s189 + $0x45c] sm:$0xff]
        %v495 = vld [vmem:[%s189 + $0x464] sm:$0xf]
        %v496 = vld [vmem:[%s189 + $0x468] sm:$0xff]
        %v497 = vld [vmem:[%s189 + $0x470] sm:$0xf]
        %v498 = vld [vmem:[%s189 + $0x474] sm:$0xff]
        %v499 = vld [vmem:[%s189 + $0x47c] sm:$0xf]
        %v500 = vld [vmem:[%s189 + $0x480] sm:$0xff]
        %v501 = vld [vmem:[%s189 + $0x488] sm:$0xf]
        %v502 = vld [vmem:[%s189 + $0x48c] sm:$0xff]
        %v503 = vld [vmem:[%s189 + $0x494] sm:$0xf]
        %v504 = vld [vmem:[%s189 + $0x498] sm:$0xff]
        %v505 = vld [vmem:[%s189 + $0x4a0] sm:$0xf]
        %v506 = vld [vmem:[%s189 + $0x4a4] sm:$0xff]
        %v507 = vld [vmem:[%s189 + $0x4ac] sm:$0xf]
        %v508 = vld [vmem:[%s189 + $0x4b0] sm:$0xff]
        %v509 = vld [vmem:[%s189 + $0x4b8] sm:$0xf]
        %v510 = vld [vmem:[%s189 + $0x4bc] sm:$0xff]
        %v511 = vld [vmem:[%s189 + $0x4c4] sm:$0xf]
        %v512 = vld [vmem:[%s189 + $0x4c8] sm:$0xff]
        %v513 = vld [vmem:[%s189 + $0x4d0] sm:$0xf]
        %v514 = vld [vmem:[%s189 + $0x4d4] sm:$0xff]
        %v515 = vld [vmem:[%s189 + $0x4dc] sm:$0xf]
        %v516 = vld [vmem:[%s189 + $0x4e0] sm:$0xff]
        %v517 = vld [vmem:[%s189 + $0x4e8] sm:$0xf]
        %v518 = vld [vmem:[%s189 + $0x4ec] sm:$0xff]
        %v519 = vld [vmem:[%s189 + $0x4f4] sm:$0xf]
        %v520 = vld [vmem:[%s189 + $0x4f8] sm:$0xff]
        %v521 = vld [vmem:[%s189 + $0x500] sm:$0xf]
        %v522 = vld [vmem:[%s189 + $0x504] sm:$0xff]
        %v523 = vld [vmem:[%s189 + $0x50c] sm:$0xf]
        %v524 = vld [vmem:[%s189 + $0x510] sm:$0xff]
        %v525 = vld [vmem:[%s189 + $0x518] sm:$0xf]
        %v526 = vld [vmem:[%s189 + $0x51c] sm:$0xff]
        %v527 = vld [vmem:[%s189 + $0x524] sm:$0xf]
        %v528 = vld [vmem:[%s189 + $0x528] sm:$0xff]
        %v529 = vld [vmem:[%s189 + $0x530] sm:$0xf]
        %v530 = vld [vmem:[%s189 + $0x534] sm:$0xff]
        %v531 = vld [vmem:[%s189 + $0x53c] sm:$0xf]
        %v532 = vld [vmem:[%s189 + $0x540] sm:$0xff]
        %v533 = vld [vmem:[%s189 + $0x548] sm:$0xf]
        %v534 = vld [vmem:[%s189 + $0x54c] sm:$0xff]
        %v535 = vld [vmem:[%s189 + $0x554] sm:$0xf]
        %v536 = vld [vmem:[%s189 + $0x558] sm:$0xff]
        %v537 = vld [vmem:[%s189 + $0x560] sm:$0xf]
        %v538 = vld [vmem:[%s189 + $0x564] sm:$0xff]
        %v539 = vld [vmem:[%s189 + $0x56c] sm:$0xf]
        %v540 = vld [vmem:[%s189 + $0x570] sm:$0xff]
        %v541 = vld [vmem:[%s189 + $0x578] sm:$0xf]
        %v542 = vld [vmem:[%s189 + $0x57c] sm:$0xff]
        %v543 = vld [vmem:[%s189 + $0x584] sm:$0xf]
        %v544 = vld [vmem:[%s189 + $0x588] sm:$0xff]
        %v545 = vld [vmem:[%s189 + $0x590] sm:$0xf]
        %v546 = vld [vmem:[%s189 + $0x594] sm:$0xff]
        %v547 = vld [vmem:[%s189 + $0x59c] sm:$0xf]
        %v548 = vld [vmem:[%s189 + $0x5a0] sm:$0xff]
        %v549 = vld [vmem:[%s189 + $0x5a8] sm:$0xf]
        %v550 = vld [vmem:[%s189 + $0x5ac] sm:$0xff]
        %v551 = vld [vmem:[%s189 + $0x5b4] sm:$0xf]
        %v552 = vld [vmem:[%s189 + $0x5b8] sm:$0xff]
        %v553 = vld [vmem:[%s189 + $0x5c0] sm:$0xf]
        %v554 = vld [vmem:[%s189 + $0x5c4] sm:$0xff]
        %v555 = vld [vmem:[%s189 + $0x5cc] sm:$0xf]
        %v556 = vld [vmem:[%s189 + $0x5d0] sm:$0xff]
        %v557 = vld [vmem:[%s189 + $0x5d8] sm:$0xf]
        %v558 = vld [vmem:[%s189 + $0x5dc] sm:$0xff]
        %v559 = vld [vmem:[%s189 + $0x5e4] sm:$0xf]
        %v560 = vld [vmem:[%s189 + $0x5e8] sm:$0xff]
        %v561 = vld [vmem:[%s189 + $0x5f0] sm:$0xf]
        %v562 = vld [vmem:[%s189 + $0x5f4] sm:$0xff]
        %v563 = vld [vmem:[%s189 + $0x5fc] sm:$0xf]
        %v564 = vld [vmem:[%s189 + $0x600] sm:$0xff]
        %v565 = vld [vmem:[%s189 + $0x608] sm:$0xf]
        %v566 = vld [vmem:[%s189 + $0x60c] sm:$0xff]
        %v567 = vld [vmem:[%s189 + $0x614] sm:$0xf]
        %v568 = vld [vmem:[%s189 + $0x618] sm:$0xff]
        %v569 = vld [vmem:[%s189 + $0x620] sm:$0xf]
        %v570 = vld [vmem:[%s189 + $0x624] sm:$0xff]
        %v571 = vld [vmem:[%s189 + $0x62c] sm:$0xf]
        %v572 = vld [vmem:[%s189 + $0x630] sm:$0xff]
        %v573 = vld [vmem:[%s189 + $0x638] sm:$0xf]
        %v574 = vld [vmem:[%s189 + $0x63c] sm:$0xff]
        %v575 = vld [vmem:[%s189 + $0x644] sm:$0xf]
        %v576 = vld [vmem:[%s189 + $0x648] sm:$0xff]
        %v577 = vld [vmem:[%s189 + $0x650] sm:$0xf]
        %v578 = vld [vmem:[%s189 + $0x654] sm:$0xff]
        %v579 = vld [vmem:[%s189 + $0x65c] sm:$0xf]
        %v580 = vld [vmem:[%s189 + $0x660] sm:$0xff]
        %v581 = vld [vmem:[%s189 + $0x668] sm:$0xf]
        %v582 = vld [vmem:[%s189 + $0x66c] sm:$0xff]
        %v583 = vld [vmem:[%s189 + $0x674] sm:$0xf]
        %v584 = vld [vmem:[%s189 + $0x678] sm:$0xff]
        %v585 = vld [vmem:[%s189 + $0x680] sm:$0xf]
        %v586 = vld [vmem:[%s189 + $0x684] sm:$0xff]
        %v587 = vld [vmem:[%s189 + $0x68c] sm:$0xf]
        %v588 = vld [vmem:[%s189 + $0x690] sm:$0xff]
        %v589 = vld [vmem:[%s189 + $0x698] sm:$0xf]
        %v590 = vld [vmem:[%s189 + $0x69c] sm:$0xff]
        %v591 = vld [vmem:[%s189 + $0x6a4] sm:$0xf]
        %v592 = vld [vmem:[%s189 + $0x6a8] sm:$0xff]
        %v593 = vld [vmem:[%s189 + $0x6b0] sm:$0xf]
        %v594 = vld [vmem:[%s189 + $0x6b4] sm:$0xff]
        %v595 = vld [vmem:[%s189 + $0x6bc] sm:$0xf]
        %v596 = vld [vmem:[%s189 + $0x6c0] sm:$0xff]
        %v597 = vld [vmem:[%s189 + $0x6c8] sm:$0xf]
        %v598 = vld [vmem:[%s189 + $0x6cc] sm:$0xff]
        %v599 = vld [vmem:[%s189 + $0x6d4] sm:$0xf]
        %v600 = vld [vmem:[%s189 + $0x6d8] sm:$0xff]
        %v601 = vld [vmem:[%s189 + $0x6e0] sm:$0xf]
        %v602 = vld [vmem:[%s189 + $0x6e4] sm:$0xff]
        %v603 = vld [vmem:[%s189 + $0x6ec] sm:$0xf]
        %v604 = vld [vmem:[%s189 + $0x6f0] sm:$0xff]
        %v605 = vld [vmem:[%s189 + $0x6f8] sm:$0xf]
        %v606 = vld [vmem:[%s189 + $0x6fc] sm:$0xff]
        %v607 = vld [vmem:[%s189 + $0x704] sm:$0xf]
        %v608 = vld [vmem:[%s189 + $0x708] sm:$0xff]
        %v609 = vld [vmem:[%s189 + $0x710] sm:$0xf]
        %v610 = vld [vmem:[%s189 + $0x714] sm:$0xff]
        %v611 = vld [vmem:[%s189 + $0x71c] sm:$0xf]
        %v612 = vld [vmem:[%s189 + $0x720] sm:$0xff]
        %v613 = vld [vmem:[%s189 + $0x728] sm:$0xf]
        %v614 = vld [vmem:[%s189 + $0x72c] sm:$0xff]
        %v615 = vld [vmem:[%s189 + $0x734] sm:$0xf]
        %v616 = vld [vmem:[%s189 + $0x738] sm:$0xff]
        %v617 = vld [vmem:[%s189 + $0x740] sm:$0xf]
        %v618 = vld [vmem:[%s189 + $0x744] sm:$0xff]
        %v619 = vld [vmem:[%s189 + $0x74c] sm:$0xf]
        %v620 = vld [vmem:[%s189 + $0x750] sm:$0xff]
        %v621 = vld [vmem:[%s189 + $0x758] sm:$0xf]
        %v622 = vld [vmem:[%s189 + $0x75c] sm:$0xff]
        %v623 = vld [vmem:[%s189 + $0x764] sm:$0xf]
        %v624 = vld [vmem:[%s189 + $0x768] sm:$0xff]
        %v625 = vld [vmem:[%s189 + $0x770] sm:$0xf]
        %v626 = vld [vmem:[%s189 + $0x774] sm:$0xff]
        %v627 = vld [vmem:[%s189 + $0x77c] sm:$0xf]
        %v628 = vld [vmem:[%s189 + $0x780] sm:$0xff]
        %v629 = vld [vmem:[%s189 + $0x788] sm:$0xf]
        %v630 = vld [vmem:[%s189 + $0x78c] sm:$0xff]
        %v631 = vld [vmem:[%s189 + $0x794] sm:$0xf]
        %v632 = vld [vmem:[%s189 + $0x798] sm:$0xff]
        %v633 = vld [vmem:[%s189 + $0x7a0] sm:$0xf]
        %v634 = vld [vmem:[%s189 + $0x7a4] sm:$0xff]
        %v635 = vld [vmem:[%s189 + $0x7ac] sm:$0xf]
        %v636 = vld [vmem:[%s189 + $0x7b0] sm:$0xff]
        %v637 = vld [vmem:[%s189 + $0x7b8] sm:$0xf]
        %v638 = vld [vmem:[%s189 + $0x7bc] sm:$0xff]
        %v639 = vld [vmem:[%s189 + $0x7c4] sm:$0xf]
        %v640 = vld [vmem:[%s189 + $0x7c8] sm:$0xff]
        %v641 = vld [vmem:[%s189 + $0x7d0] sm:$0xf]
        %v642 = vld [vmem:[%s189 + $0x7d4] sm:$0xff]
        %v643 = vld [vmem:[%s189 + $0x7dc] sm:$0xf]
        %v644 = vld [vmem:[%s189 + $0x7e0] sm:$0xff]
        %v645 = vld [vmem:[%s189 + $0x7e8] sm:$0xf]
        %v646 = vld [vmem:[%s189 + $0x7ec] sm:$0xff]
        %v647 = vld [vmem:[%s189 + $0x7f4] sm:$0xf]
        %v648 = vld [vmem:[%s189 + $0x7f8] sm:$0xff]
        %v649 = vld [vmem:[%s189 + $0x800] sm:$0xf]
        %v650 = vld [vmem:[%s189 + $0x804] sm:$0xff]
        %v651 = vld [vmem:[%s189 + $0x80c] sm:$0xf]
        %v652 = vld [vmem:[%s189 + $0x810] sm:$0xff]
        %v653 = vld [vmem:[%s189 + $0x818] sm:$0xf]
        %v654 = vld [vmem:[%s189 + $0x81c] sm:$0xff]
        %v655 = vld [vmem:[%s189 + $0x824] sm:$0xf]
        %v656 = vld [vmem:[%s189 + $0x828] sm:$0xff]
        %v657 = vld [vmem:[%s189 + $0x830] sm:$0xf]
        %v658 = vld [vmem:[%s189 + $0x834] sm:$0xff]
        %v659 = vld [vmem:[%s189 + $0x83c] sm:$0xf]
        %v660 = vld [vmem:[%s189 + $0x840] sm:$0xff]
        %v661 = vld [vmem:[%s189 + $0x848] sm:$0xf]
        %v662 = vld [vmem:[%s189 + $0x84c] sm:$0xff]
        %v663 = vld [vmem:[%s189 + $0x854] sm:$0xf]
        %v664 = vld [vmem:[%s189 + $0x858] sm:$0xff]
        %v665 = vld [vmem:[%s189 + $0x860] sm:$0xf]
        %v666 = vld [vmem:[%s189 + $0x864] sm:$0xff]
        %v667 = vld [vmem:[%s189 + $0x86c] sm:$0xf]
        %v668 = vld [vmem:[%s189 + $0x870] sm:$0xff]
        %v669 = vld [vmem:[%s189 + $0x878] sm:$0xf]
        %v670 = vld [vmem:[%s189 + $0x87c] sm:$0xff]
        %v671 = vld [vmem:[%s189 + $0x884] sm:$0xf]
        %v672 = vld [vmem:[%s189 + $0x888] sm:$0xff]
        %v673 = vld [vmem:[%s189 + $0x890] sm:$0xf]
        %v674 = vld [vmem:[%s189 + $0x894] sm:$0xff]
        %v675 = vld [vmem:[%s189 + $0x89c] sm:$0xf]
        %v676 = vld [vmem:[%s189 + $0x8a0] sm:$0xff]
        %v677 = vld [vmem:[%s189 + $0x8a8] sm:$0xf]
        %v678 = vld [vmem:[%s189 + $0x8ac] sm:$0xff]
        %v679 = vld [vmem:[%s189 + $0x8b4] sm:$0xf]
        %v680 = vld [vmem:[%s189 + $0x8b8] sm:$0xff]
        %v681 = vld [vmem:[%s189 + $0x8c0] sm:$0xf]
        %v682 = vld [vmem:[%s189 + $0x8c4] sm:$0xff]
        %v683 = vld [vmem:[%s189 + $0x8cc] sm:$0xf]
        %v684 = vld [vmem:[%s189 + $0x8d0] sm:$0xff]
        %v685 = vld [vmem:[%s189 + $0x8d8] sm:$0xf]
        %v686 = vld [vmem:[%s189 + $0x8dc] sm:$0xff]
        %v687 = vld [vmem:[%s189 + $0x8e4] sm:$0xf]
        %v688 = vld [vmem:[%s189 + $0x8e8] sm:$0xff]
        %v689 = vld [vmem:[%s189 + $0x8f0] sm:$0xf]
        %v690 = vld [vmem:[%s189 + $0x8f4] sm:$0xff]
        %v691 = vld [vmem:[%s189 + $0x8fc] sm:$0xf]
        %v692 = vld [vmem:[%s189 + $0x900] sm:$0xff]
        %v693 = vld [vmem:[%s189 + $0x908] sm:$0xf]
        %v694 = vld [vmem:[%s189 + $0x90c] sm:$0xff]
        %v695 = vld [vmem:[%s189 + $0x914] sm:$0xf]
        %v696 = vld [vmem:[%s189 + $0x918] sm:$0xff]
        %v697 = vld [vmem:[%s189 + $0x920] sm:$0xf]
        %v698 = vld [vmem:[%s189 + $0x924] sm:$0xff]
        %v699 = vld [vmem:[%s189 + $0x92c] sm:$0xf]
        %v700 = vld [vmem:[%s189 + $0x930] sm:$0xff]
        %v701 = vld [vmem:[%s189 + $0x938] sm:$0xf]
        %v702 = vld [vmem:[%s189 + $0x93c] sm:$0xff]
        %v703 = vld [vmem:[%s189 + $0x944] sm:$0xf]
        %v704 = vld [vmem:[%s189 + $0x948] sm:$0xff]
        %v705 = vld [vmem:[%s189 + $0x950] sm:$0xf]
        %v706 = vld [vmem:[%s189 + $0x954] sm:$0xff]
        %v707 = vld [vmem:[%s189 + $0x95c] sm:$0xf]
        %v708 = vld [vmem:[%s189 + $0x960] sm:$0xff]
        %v709 = vld [vmem:[%s189 + $0x968] sm:$0xf]
        %v710 = vld [vmem:[%s189 + $0x96c] sm:$0xff]
        %v711 = vld [vmem:[%s189 + $0x974] sm:$0xf]
        %v712 = vld [vmem:[%s189 + $0x978] sm:$0xff]
        %v713 = vld [vmem:[%s189 + $0x980] sm:$0xf]
        %v714 = vld [vmem:[%s189 + $0x984] sm:$0xff]
        %v715 = vld [vmem:[%s189 + $0x98c] sm:$0xf]
        %v716 = vld [vmem:[%s189 + $0x990] sm:$0xff]
        %v717 = vld [vmem:[%s189 + $0x998] sm:$0xf]
        %v718 = vld [vmem:[%s189 + $0x99c] sm:$0xff]
        %v719 = vld [vmem:[%s189 + $0x9a4] sm:$0xf]
        %v720 = vld [vmem:[%s189 + $0x9a8] sm:$0xff]
        %v721 = vld [vmem:[%s189 + $0x9b0] sm:$0xf]
        %v722 = vld [vmem:[%s189 + $0x9b4] sm:$0xff]
        %v723 = vld [vmem:[%s189 + $0x9bc] sm:$0xf]
        %v724 = vld [vmem:[%s189 + $0x9c0] sm:$0xff]
        %v725 = vld [vmem:[%s189 + $0x9c8] sm:$0xf]
        %v726 = vld [vmem:[%s189 + $0x9cc] sm:$0xff]
        %v727 = vld [vmem:[%s189 + $0x9d4] sm:$0xf]
        %v728 = vld [vmem:[%s189 + $0x9d8] sm:$0xff]
        %v729 = vld [vmem:[%s189 + $0x9e0] sm:$0xf]
        %v730 = vld [vmem:[%s189 + $0x9e4] sm:$0xff]
        %v731 = vld [vmem:[%s189 + $0x9ec] sm:$0xf]
        %v732 = vld [vmem:[%s189 + $0x9f0] sm:$0xff]
        %v733 = vld [vmem:[%s189 + $0x9f8] sm:$0xf]
        %v734 = vld [vmem:[%s189 + $0x9fc] sm:$0xff]
        %v735 = vld [vmem:[%s189 + $0xa04] sm:$0xf]
        %v736 = vld [vmem:[%s189 + $0xa08] sm:$0xff]
        %v737 = vld [vmem:[%s189 + $0xa10] sm:$0xf]
        %v738 = vld [vmem:[%s189 + $0xa14] sm:$0xff]
        %v739 = vld [vmem:[%s189 + $0xa1c] sm:$0xf]
        %v740 = vld [vmem:[%s189 + $0xa20] sm:$0xff]
        %v741 = vld [vmem:[%s189 + $0xa28] sm:$0xf]
        %v742 = vld [vmem:[%s189 + $0xa2c] sm:$0xff]
        %v743 = vld [vmem:[%s189 + $0xa34] sm:$0xf]
        %v744 = vld [vmem:[%s189 + $0xa38] sm:$0xff]
        %v745 = vld [vmem:[%s189 + $0xa40] sm:$0xf]
        %v746 = vld [vmem:[%s189 + $0xa44] sm:$0xff]
        %v747 = vld [vmem:[%s189 + $0xa4c] sm:$0xf]
        %v748 = vld [vmem:[%s189 + $0xa50] sm:$0xff]
        %v749 = vld [vmem:[%s189 + $0xa58] sm:$0xf]
        %v750 = vld [vmem:[%s189 + $0xa5c] sm:$0xff]
        %v751 = vld [vmem:[%s189 + $0xa64] sm:$0xf]
        %v752 = vld [vmem:[%s189 + $0xa68] sm:$0xff]
        %v753 = vld [vmem:[%s189 + $0xa70] sm:$0xf]
        %v754 = vld [vmem:[%s189 + $0xa74] sm:$0xff]
        %v755 = vld [vmem:[%s189 + $0xa7c] sm:$0xf]
        %v756 = vld [vmem:[%s189 + $0xa80] sm:$0xff]
        %v757 = vld [vmem:[%s189 + $0xa88] sm:$0xf]
        %v758 = vld [vmem:[%s189 + $0xa8c] sm:$0xff]
        %v759 = vld [vmem:[%s189 + $0xa94] sm:$0xf]
        %v760 = vld [vmem:[%s189 + $0xa98] sm:$0xff]
        %v761 = vld [vmem:[%s189 + $0xaa0] sm:$0xf]
        %v762 = vld [vmem:[%s189 + $0xaa4] sm:$0xff]
        %v763 = vld [vmem:[%s189 + $0xaac] sm:$0xf]
        %v764 = vld [vmem:[%s189 + $0xab0] sm:$0xff]
        %v765 = vld [vmem:[%s189 + $0xab8] sm:$0xf]
        %v766 = vld [vmem:[%s189 + $0xabc] sm:$0xff]
        %v767 = vld [vmem:[%s189 + $0xac4] sm:$0xf]
        %v768 = vld [vmem:[%s189 + $0xac8] sm:$0xff]
        %v769 = vld [vmem:[%s189 + $0xad0] sm:$0xf]
        %v770 = vld [vmem:[%s189 + $0xad4] sm:$0xff]
        %v771 = vld [vmem:[%s189 + $0xadc] sm:$0xf]
        %v772 = vld [vmem:[%s189 + $0xae0] sm:$0xff]
        %v773 = vld [vmem:[%s189 + $0xae8] sm:$0xf]
        %v774 = vld [vmem:[%s189 + $0xaec] sm:$0xff]
        %v775 = vld [vmem:[%s189 + $0xaf4] sm:$0xf]
        %v776 = vld [vmem:[%s189 + $0xaf8] sm:$0xff]
        %v777 = vld [vmem:[%s189 + $0xb00] sm:$0xf]
        %v778 = vld [vmem:[%s189 + $0xb04] sm:$0xff]
        %v779 = vld [vmem:[%s189 + $0xb0c] sm:$0xf]
        %v780 = vld [vmem:[%s189 + $0xb10] sm:$0xff]
        %v781 = vld [vmem:[%s189 + $0xb18] sm:$0xf]
        %v782 = vld [vmem:[%s189 + $0xb1c] sm:$0xff]
        %v783 = vld [vmem:[%s189 + $0xb24] sm:$0xf]
        %v784 = vld [vmem:[%s189 + $0xb28] sm:$0xff]
        %v785 = vld [vmem:[%s189 + $0xb30] sm:$0xf]
        %v786 = vld [vmem:[%s189 + $0xb34] sm:$0xff]
        %v787 = vld [vmem:[%s189 + $0xb3c] sm:$0xf]
        %v788 = vld [vmem:[%s189 + $0xb40] sm:$0xff]
        %v789 = vld [vmem:[%s189 + $0xb48] sm:$0xf]
        %v790 = vld [vmem:[%s189 + $0xb4c] sm:$0xff]
        %v791 = vld [vmem:[%s189 + $0xb54] sm:$0xf]
        %v792 = vld [vmem:[%s189 + $0xb58] sm:$0xff]
        %v793 = vld [vmem:[%s189 + $0xb60] sm:$0xf]
        %v794 = vld [vmem:[%s189 + $0xb64] sm:$0xff]
        %v795 = vld [vmem:[%s189 + $0xb6c] sm:$0xf]
        %v796 = vld [vmem:[%s189 + $0xb70] sm:$0xff]
        %v797 = vld [vmem:[%s189 + $0xb78] sm:$0xf]
        %v798 = vld [vmem:[%s189 + $0xb7c] sm:$0xff]
        %v799 = vld [vmem:[%s189 + $0xb84] sm:$0xf]
        %v800 = vld [vmem:[%s189 + $0xb88] sm:$0xff]
        %v801 = vld [vmem:[%s189 + $0xb90] sm:$0xf]
        %v802 = vld [vmem:[%s189 + $0xb94] sm:$0xff]
        %v803 = vld [vmem:[%s189 + $0xb9c] sm:$0xf]
        %v804 = vld [vmem:[%s189 + $0xba0] sm:$0xff]
        %v805 = vld [vmem:[%s189 + $0xba8] sm:$0xf]
        %v806 = vld [vmem:[%s189 + $0xbac] sm:$0xff]
        %v807 = vld [vmem:[%s189 + $0xbb4] sm:$0xf]
        %v808 = vld [vmem:[%s189 + $0xbb8] sm:$0xff]
        %v809 = vld [vmem:[%s189 + $0xbc0] sm:$0xf]
        %v810 = vld [vmem:[%s189 + $0xbc4] sm:$0xff]
        %v811 = vld [vmem:[%s189 + $0xbcc] sm:$0xf]
        %v812 = vld [vmem:[%s189 + $0xbd0] sm:$0xff]
        %v813 = vld [vmem:[%s189 + $0xbd8] sm:$0xf]
        %v814 = vld [vmem:[%s189 + $0xbdc] sm:$0xff]
        %v815 = vld [vmem:[%s189 + $0xbe4] sm:$0xf]
        %v816 = vld [vmem:[%s189 + $0xbe8] sm:$0xff]
        %v817 = vld [vmem:[%s189 + $0xbf0] sm:$0xf]
        %v818 = vld [vmem:[%s189 + $0xbf4] sm:$0xff]
        %v819 = vld [vmem:[%s189 + $0xbfc] sm:$0xf]
        %v820 = vld [vmem:[%s189 + $0xc00] sm:$0xff]
        %v821 = vld [vmem:[%s189 + $0xc08] sm:$0xf]
        %v822 = vld [vmem:[%s189 + $0xc0c] sm:$0xff]
        %v823 = vld [vmem:[%s189 + $0xc14] sm:$0xf]
        %v824 = vld [vmem:[%s189 + $0xc18] sm:$0xff]
        %v825 = vld [vmem:[%s189 + $0xc20] sm:$0xf]
        %v826 = vld [vmem:[%s189 + $0xc24] sm:$0xff]
        %v827 = vld [vmem:[%s189 + $0xc2c] sm:$0xf]
        %v828 = vld [vmem:[%s189 + $0xc30] sm:$0xff]
        %v829 = vld [vmem:[%s189 + $0xc38] sm:$0xf]
        %v830 = vld [vmem:[%s189 + $0xc3c] sm:$0xff]
        %v831 = vld [vmem:[%s189 + $0xc44] sm:$0xf]
        %v832 = vld [vmem:[%s189 + $0xc48] sm:$0xff]
        %v833 = vld [vmem:[%s189 + $0xc50] sm:$0xf]
        %v834 = vld [vmem:[%s189 + $0xc54] sm:$0xff]
        %v835 = vld [vmem:[%s189 + $0xc5c] sm:$0xf]
        %v836 = vld [vmem:[%s189 + $0xc60] sm:$0xff]
        %v837 = vld [vmem:[%s189 + $0xc68] sm:$0xf]
        %v838 = vld [vmem:[%s189 + $0xc6c] sm:$0xff]
        %v839 = vld [vmem:[%s189 + $0xc74] sm:$0xf]
        %v840 = vld [vmem:[%s189 + $0xc78] sm:$0xff]
        %v841 = vld [vmem:[%s189 + $0xc80] sm:$0xf]
        %v842 = vld [vmem:[%s189 + $0xc84] sm:$0xff]
        %v843 = vld [vmem:[%s189 + $0xc8c] sm:$0xf]
        %v844 = vld [vmem:[%s189 + $0xc90] sm:$0xff]
        %v845 = vld [vmem:[%s189 + $0xc98] sm:$0xf]
        %v846 = vld [vmem:[%s189 + $0xc9c] sm:$0xff]
        %v847 = vld [vmem:[%s189 + $0xca4] sm:$0xf]
        %v848 = vld [vmem:[%s189 + $0xca8] sm:$0xff]
        %v849 = vld [vmem:[%s189 + $0xcb0] sm:$0xf]
        %v850 = vld [vmem:[%s189 + $0xcb4] sm:$0xff]
        %v851 = vld [vmem:[%s189 + $0xcbc] sm:$0xf]
        %v852 = vld [vmem:[%s189 + $0xcc0] sm:$0xff]
        %v853 = vld [vmem:[%s189 + $0xcc8] sm:$0xf]
        %v854 = vld [vmem:[%s189 + $0xccc] sm:$0xff]
        %v855 = vld [vmem:[%s189 + $0xcd4] sm:$0xf]
        %v856 = vld [vmem:[%s189 + $0xcd8] sm:$0xff]
        %v857 = vld [vmem:[%s189 + $0xce0] sm:$0xf]
        %v858 = vld [vmem:[%s189 + $0xce4] sm:$0xff]
        %v859 = vld [vmem:[%s189 + $0xcec] sm:$0xf]
        %v860 = vld [vmem:[%s189 + $0xcf0] sm:$0xff]
        %v861 = vld [vmem:[%s189 + $0xcf8] sm:$0xf]
        %v862 = vld [vmem:[%s189 + $0xcfc] sm:$0xff]
        %v863 = vld [vmem:[%s189 + $0xd04] sm:$0xf]
        %v864 = vld [vmem:[%s189 + $0xd08] sm:$0xff]
        %v865 = vld [vmem:[%s189 + $0xd10] sm:$0xf]
        %v866 = vld [vmem:[%s189 + $0xd14] sm:$0xff]
        %v867 = vld [vmem:[%s189 + $0xd1c] sm:$0xf]
        %v868 = vld [vmem:[%s189 + $0xd20] sm:$0xff]
        %v869 = vld [vmem:[%s189 + $0xd28] sm:$0xf]
        %v870 = vld [vmem:[%s189 + $0xd2c] sm:$0xff]
        %v871 = vld [vmem:[%s189 + $0xd34] sm:$0xf]
        %v872 = vld [vmem:[%s189 + $0xd38] sm:$0xff]
        %v873 = vld [vmem:[%s189 + $0xd40] sm:$0xf]
        %v874 = vld [vmem:[%s189 + $0xd44] sm:$0xff]
        %v875 = vld [vmem:[%s189 + $0xd4c] sm:$0xf]
        %v876 = vld [vmem:[%s189 + $0xd50] sm:$0xff]
        %v877 = vld [vmem:[%s189 + $0xd58] sm:$0xf]
        %v878 = vld [vmem:[%s189 + $0xd5c] sm:$0xff]
        %v879 = vld [vmem:[%s189 + $0xd64] sm:$0xf]
        %v880 = vld [vmem:[%s189 + $0xd68] sm:$0xff]
        %v881 = vld [vmem:[%s189 + $0xd70] sm:$0xf]
        %v882 = vld [vmem:[%s189 + $0xd74] sm:$0xff]
        %v883 = vld [vmem:[%s189 + $0xd7c] sm:$0xf]
        %v884 = vld [vmem:[%s189 + $0xd80] sm:$0xff]
        %v885 = vld [vmem:[%s189 + $0xd88] sm:$0xf]
        %v886 = vld [vmem:[%s189 + $0xd8c] sm:$0xff]
        %v887 = vld [vmem:[%s189 + $0xd94] sm:$0xf]
        %v888 = vld [vmem:[%s189 + $0xd98] sm:$0xff]
        %v889 = vld [vmem:[%s189 + $0xda0] sm:$0xf]
        %v890 = vld [vmem:[%s189 + $0xda4] sm:$0xff]
        %v891 = vld [vmem:[%s189 + $0xdac] sm:$0xf]
        %v892 = vld [vmem:[%s189 + $0xdb0] sm:$0xff]
        %v893 = vld [vmem:[%s189 + $0xdb8] sm:$0xf]
        %v894 = vld [vmem:[%s189 + $0xdbc] sm:$0xff]
        %v895 = vld [vmem:[%s189 + $0xdc4] sm:$0xf]
        %v896 = vld [vmem:[%s189 + $0xdc8] sm:$0xff]
        %v897 = vld [vmem:[%s189 + $0xdd0] sm:$0xf]
        %v898 = vld [vmem:[%s189 + $0xdd4] sm:$0xff]
        %v899 = vld [vmem:[%s189 + $0xddc] sm:$0xf]
        %v900 = vld [vmem:[%s189 + $0xde0] sm:$0xff]
        %v901 = vld [vmem:[%s189 + $0xde8] sm:$0xf]
        %v902 = vld [vmem:[%s189 + $0xdec] sm:$0xff]
        %v903 = vld [vmem:[%s189 + $0xdf4] sm:$0xf]
        %v904 = vld [vmem:[%s189 + $0xdf8] sm:$0xff]
        %v905 = vld [vmem:[%s189 + $0xe00] sm:$0xf]
        %v906 = vld [vmem:[%s189 + $0xe04] sm:$0xff]
        %v907 = vld [vmem:[%s189 + $0xe0c] sm:$0xf]
        %v908 = vld [vmem:[%s189 + $0xe10] sm:$0xff]
        %v909 = vld [vmem:[%s189 + $0xe18] sm:$0xf]
        %v910 = vld [vmem:[%s189 + $0xe1c] sm:$0xff]
        %v911 = vld [vmem:[%s189 + $0xe24] sm:$0xf]
        %v912 = vld [vmem:[%s189 + $0xe28] sm:$0xff]
        %v913 = vld [vmem:[%s189 + $0xe30] sm:$0xf]
        %v914 = vld [vmem:[%s189 + $0xe34] sm:$0xff]
        %v915 = vld [vmem:[%s189 + $0xe3c] sm:$0xf]
        %v916 = vld [vmem:[%s189 + $0xe40] sm:$0xff]
        %v917 = vld [vmem:[%s189 + $0xe48] sm:$0xf]
        %v918 = vld [vmem:[%s189 + $0xe4c] sm:$0xff]
        %v919 = vld [vmem:[%s189 + $0xe54] sm:$0xf]
        %v920 = vld [vmem:[%s189 + $0xe58] sm:$0xff]
        %v921 = vld [vmem:[%s189 + $0xe60] sm:$0xf]
        %v922 = vld [vmem:[%s189 + $0xe64] sm:$0xff]
        %v923 = vld [vmem:[%s189 + $0xe6c] sm:$0xf]
        %v924 = vld [vmem:[%s189 + $0xe70] sm:$0xff]
        %v925 = vld [vmem:[%s189 + $0xe78] sm:$0xf]
        %v926 = vld [vmem:[%s189 + $0xe7c] sm:$0xff]
        %v927 = vld [vmem:[%s189 + $0xe84] sm:$0xf]
        %v928 = vld [vmem:[%s189 + $0xe88] sm:$0xff]
        %v929 = vld [vmem:[%s189 + $0xe90] sm:$0xf]
        %v930 = vld [vmem:[%s189 + $0xe94] sm:$0xff]
        %v931 = vld [vmem:[%s189 + $0xe9c] sm:$0xf]
        %v932 = vld [vmem:[%s189 + $0xea0] sm:$0xff]
        %v933 = vld [vmem:[%s189 + $0xea8] sm:$0xf]
        %v934 = vld [vmem:[%s189 + $0xeac] sm:$0xff]
        %v935 = vld [vmem:[%s189 + $0xeb4] sm:$0xf]
        %v936 = vld [vmem:[%s189 + $0xeb8] sm:$0xff]
        %v937 = vld [vmem:[%s189 + $0xec0] sm:$0xf]
        %v938 = vld [vmem:[%s189 + $0xec4] sm:$0xff]
        %v939 = vld [vmem:[%s189 + $0xecc] sm:$0xf]
        %v940 = vld [vmem:[%s189 + $0xed0] sm:$0xff]
        %v941 = vld [vmem:[%s189 + $0xed8] sm:$0xf]
        %v942 = vld [vmem:[%s189 + $0xedc] sm:$0xff]
        %v943 = vld [vmem:[%s189 + $0xee4] sm:$0xf]
        %v944 = vld [vmem:[%s189 + $0xee8] sm:$0xff]
        %v945 = vld [vmem:[%s189 + $0xef0] sm:$0xf]
        %v946 = vld [vmem:[%s189 + $0xef4] sm:$0xff]
        %v947 = vld [vmem:[%s189 + $0xefc] sm:$0xf]
        %v948 = vld [vmem:[%s189 + $0xf00] sm:$0xff]
        %v949 = vld [vmem:[%s189 + $0xf08] sm:$0xf]
        %v950 = vld [vmem:[%s189 + $0xf0c] sm:$0xff]
        %v951 = vld [vmem:[%s189 + $0xf14] sm:$0xf]
        %v952 = vld [vmem:[%s189 + $0xf18] sm:$0xff]
        %v953 = vld [vmem:[%s189 + $0xf20] sm:$0xf]
        %v954 = vld [vmem:[%s189 + $0xf24] sm:$0xff]
        %v955 = vld [vmem:[%s189 + $0xf2c] sm:$0xf]
        %v956 = vld [vmem:[%s189 + $0xf30] sm:$0xff]
        %v957 = vld [vmem:[%s189 + $0xf38] sm:$0xf]
        %v958 = vld [vmem:[%s189 + $0xf3c] sm:$0xff]
        %v959 = vld [vmem:[%s189 + $0xf44] sm:$0xf]
        %v960 = vld [vmem:[%s189 + $0xf48] sm:$0xff]
        %v961 = vld [vmem:[%s189 + $0xf50] sm:$0xf]
        %v962 = vld [vmem:[%s189 + $0xf54] sm:$0xff]
        %v963 = vld [vmem:[%s189 + $0xf5c] sm:$0xf]
        %v964 = vld [vmem:[%s189 + $0xf60] sm:$0xff]
        %v965 = vld [vmem:[%s189 + $0xf68] sm:$0xf]
        %v966 = vld [vmem:[%s189 + $0xf6c] sm:$0xff]
        %v967 = vld [vmem:[%s189 + $0xf74] sm:$0xf]
        %v968 = vld [vmem:[%s189 + $0xf78] sm:$0xff]
        %v969 = vld [vmem:[%s189 + $0xf80] sm:$0xf]
        %v970 = vld [vmem:[%s189 + $0xf84] sm:$0xff]
        %v971 = vld [vmem:[%s189 + $0xf8c] sm:$0xf]
        %v972 = vld [vmem:[%s189 + $0xf90] sm:$0xff]
        %v973 = vld [vmem:[%s189 + $0xf98] sm:$0xf]
        %v974 = vld [vmem:[%s189 + $0xf9c] sm:$0xff]
        %v975 = vld [vmem:[%s189 + $0xfa4] sm:$0xf]
        %v976 = vld [vmem:[%s189 + $0xfa8] sm:$0xff]
        %v977 = vld [vmem:[%s189 + $0xfb0] sm:$0xf]
        %v978 = vld [vmem:[%s189 + $0xfb4] sm:$0xff]
        %v979 = vld [vmem:[%s189 + $0xfbc] sm:$0xf]
        %v980 = vld [vmem:[%s189 + $0xfc0] sm:$0xff]
        %v981 = vld [vmem:[%s189 + $0xfc8] sm:$0xf]
        %v982 = vld [vmem:[%s189 + $0xfcc] sm:$0xff]
        %v983 = vld [vmem:[%s189 + $0xfd4] sm:$0xf]
        %v984 = vld [vmem:[%s189 + $0xfd8] sm:$0xff]
        %v985 = vld [vmem:[%s189 + $0xfe0] sm:$0xf]
        %v986 = vld [vmem:[%s189 + $0xfe4] sm:$0xff]
        %v987 = vld [vmem:[%s189 + $0xfec] sm:$0xf]
        %v988 = vld [vmem:[%s189 + $0xff0] sm:$0xff]
        %v989 = vld [vmem:[%s189 + $0xff8] sm:$0xf]
        %v990 = vld [vmem:[%s189 + $0xffc] sm:$0xff]
        %v991 = vld [vmem:[%s189 + $0x1004] sm:$0xf]
        %v992 = vld [vmem:[%s189 + $0x1008] sm:$0xff]
        %v993 = vld [vmem:[%s189 + $0x1010] sm:$0xf]
        %v994 = vld [vmem:[%s189 + $0x1014] sm:$0xff]
        %v995 = vld [vmem:[%s189 + $0x101c] sm:$0xf]
        %v996 = vld [vmem:[%s189 + $0x1020] sm:$0xff]
        %v997 = vld [vmem:[%s189 + $0x1028] sm:$0xf]
        %v998 = vld [vmem:[%s189 + $0x102c] sm:$0xff]
        %v999 = vld [vmem:[%s189 + $0x1034] sm:$0xf]
        %v1000 = vld [vmem:[%s189 + $0x1038] sm:$0xff]
        %v1001 = vld [vmem:[%s189 + $0x1040] sm:$0xf]
        %v1002 = vld [vmem:[%s189 + $0x1044] sm:$0xff]
        %v1003 = vld [vmem:[%s189 + $0x104c] sm:$0xf]
        %v1004 = vld [vmem:[%s189 + $0x1050] sm:$0xff]
        %v1005 = vld [vmem:[%s189 + $0x1058] sm:$0xf]
        %v1006 = vld [vmem:[%s189 + $0x105c] sm:$0xff]
        %v1007 = vld [vmem:[%s189 + $0x1064] sm:$0xf]
        %v1008 = vld [vmem:[%s189 + $0x1068] sm:$0xff]
        %v1009 = vld [vmem:[%s189 + $0x1070] sm:$0xf]
        %v1010 = vld [vmem:[%s189 + $0x1074] sm:$0xff]
        %v1011 = vld [vmem:[%s189 + $0x107c] sm:$0xf]
        %v1012 = vld [vmem:[%s189 + $0x1080] sm:$0xff]
        %v1013 = vld [vmem:[%s189 + $0x1088] sm:$0xf]
        %v1014 = vld [vmem:[%s189 + $0x108c] sm:$0xff]
        %v1015 = vld [vmem:[%s189 + $0x1094] sm:$0xf]
        %v1016 = vld [vmem:[%s189 + $0x1098] sm:$0xff]
        %v1017 = vld [vmem:[%s189 + $0x10a0] sm:$0xf]
        %v1018 = vld [vmem:[%s189 + $0x10a4] sm:$0xff]
        %v1019 = vld [vmem:[%s189 + $0x10ac] sm:$0xf]
        %v1020 = vld [vmem:[%s189 + $0x10b0] sm:$0xff]
        %v1021 = vld [vmem:[%s189 + $0x10b8] sm:$0xf]
        %v1022 = vld [vmem:[%s189 + $0x10bc] sm:$0xff]
        %v1023 = vld [vmem:[%s189 + $0x10c4] sm:$0xf]
        %v1024 = vld [vmem:[%s189 + $0x10c8] sm:$0xff]
        %v1025 = vld [vmem:[%s189 + $0x10d0] sm:$0xf]
        %v1026 = vld [vmem:[%s189 + $0x10d4] sm:$0xff]
        %v1027 = vld [vmem:[%s189 + $0x10dc] sm:$0xf]
        %v1028 = vld [vmem:[%s189 + $0x10e0] sm:$0xff]
        %v1029 = vld [vmem:[%s189 + $0x10e8] sm:$0xf]
        %v1030 = vld [vmem:[%s189 + $0x10ec] sm:$0xff]
        %v1031 = vld [vmem:[%s189 + $0x10f4] sm:$0xf]
        %v1032 = vld [vmem:[%s189 + $0x10f8] sm:$0xff]
        %v1033 = vld [vmem:[%s189 + $0x1100] sm:$0xf]
        %v1034 = vld [vmem:[%s189 + $0x1104] sm:$0xff]
        %v1035 = vld [vmem:[%s189 + $0x110c] sm:$0xf]
        %v1036 = vld [vmem:[%s189 + $0x1110] sm:$0xff]
        %v1037 = vld [vmem:[%s189 + $0x1118] sm:$0xf]
        %v1038 = vld [vmem:[%s189 + $0x111c] sm:$0xff]
        %v1039 = vld [vmem:[%s189 + $0x1124] sm:$0xf]
        %v1040 = vld [vmem:[%s189 + $0x1128] sm:$0xff]
        %v1041 = vld [vmem:[%s189 + $0x1130] sm:$0xf]
        %v1042 = vld [vmem:[%s189 + $0x1134] sm:$0xff]
        %v1043 = vld [vmem:[%s189 + $0x113c] sm:$0xf]
        %v1044 = vld [vmem:[%s189 + $0x1140] sm:$0xff]
        %v1045 = vld [vmem:[%s189 + $0x1148] sm:$0xf]
        %v1046 = vld [vmem:[%s189 + $0x114c] sm:$0xff]
        %v1047 = vld [vmem:[%s189 + $0x1154] sm:$0xf]
        %v1048 = vld [vmem:[%s189 + $0x1158] sm:$0xff]
        %v1049 = vld [vmem:[%s189 + $0x1160] sm:$0xf]
        %v1050 = vld [vmem:[%s189 + $0x1164] sm:$0xff]
        %v1051 = vld [vmem:[%s189 + $0x116c] sm:$0xf]
        %v1052 = vld [vmem:[%s189 + $0x1170] sm:$0xff]
        %v1053 = vld [vmem:[%s189 + $0x1178] sm:$0xf]
        %v1054 = vld [vmem:[%s189 + $0x117c] sm:$0xff]
        %v1055 = vld [vmem:[%s189 + $0x1184] sm:$0xf]
        %v1056 = vld [vmem:[%s189 + $0x1188] sm:$0xff]
        %v1057 = vld [vmem:[%s189 + $0x1190] sm:$0xf]
        %v1058 = vld [vmem:[%s189 + $0x1194] sm:$0xff]
        %v1059 = vld [vmem:[%s189 + $0x119c] sm:$0xf]
        %v1060 = vld [vmem:[%s189 + $0x11a0] sm:$0xff]
        %v1061 = vld [vmem:[%s189 + $0x11a8] sm:$0xf]
        %v1062 = vld [vmem:[%s189 + $0x11ac] sm:$0xff]
        %v1063 = vld [vmem:[%s189 + $0x11b4] sm:$0xf]
        %v1064 = vld [vmem:[%s189 + $0x11b8] sm:$0xff]
        %v1065 = vld [vmem:[%s189 + $0x11c0] sm:$0xf]
        %v1066 = vld [vmem:[%s189 + $0x11c4] sm:$0xff]
        %v1067 = vld [vmem:[%s189 + $0x11cc] sm:$0xf]
        %v1068 = vld [vmem:[%s189 + $0x11d0] sm:$0xff]
        %v1069 = vld [vmem:[%s189 + $0x11d8] sm:$0xf]
        %v1070 = vld [vmem:[%s189 + $0x11dc] sm:$0xff]
        %v1071 = vld [vmem:[%s189 + $0x11e4] sm:$0xf]
        %v1072 = vld [vmem:[%s189 + $0x11e8] sm:$0xff]
        %v1073 = vld [vmem:[%s189 + $0x11f0] sm:$0xf]
        %v1074 = vld [vmem:[%s189 + $0x11f4] sm:$0xff]
        %v1075 = vld [vmem:[%s189 + $0x11fc] sm:$0xf]
        %v1077 = vlaneseq
        %v1078 = vshrl.u32 %v1077, 7
        %v1079 = vsub.s32 0, %v1078
        %v1080 = vrot.slane %v223, %v1079
        %v1081 = vlaneseq
        %v1082 = vshrl.u32 %v1081, 7
        %v1083 = vsub.s32 1, %v1082
        %v1084 = vrot.slane %v223, %v1083
        %v1085 = vlaneseq
        %v1086 = vshrl.u32 %v1085, 7
        %v1087 = vsub.s32 2, %v1086
        %v1088 = vrot.slane %v223, %v1087
        %v1176 = vunpack.c.l.b16 %v224
        %v1177 = vunpack.c.h.b16 %v224
        %v1178 = vunpack.c.l.b16 %v225
        %v1179 = vunpack.c.h.b16 %v225
        %v1180 = vunpack.c.l.b16 %v226
        %v1181 = vunpack.c.h.b16 %v226
        %v1182 = vunpack.c.l.b16 %v227
        %v1183 = vunpack.c.h.b16 %v227
        %v1184 = vunpack.c.l.b16 %v228
        %v1185 = vunpack.c.h.b16 %v228
        %v1186 = vunpack.c.l.b16 %v229
        %v1187 = vunpack.c.h.b16 %v229
        %v1188 = vunpack.c.l.b16 %v230
        %v1189 = vunpack.c.h.b16 %v230
        %v1190 = vunpack.c.l.b16 %v231
        %v1191 = vunpack.c.h.b16 %v231
        %v1192 = vunpack.c.l.b16 %v232
        %v1193 = vunpack.c.h.b16 %v232
        %v1194 = vunpack.c.l.b16 %v233
        %v1195 = vunpack.c.h.b16 %v233
        %v1196 = vunpack.c.l.b16 %v234
        %v1197 = vunpack.c.h.b16 %v234
        %v1198 = vunpack.c.l.b16 %v235
        %v1199 = vunpack.c.h.b16 %v235
        %v1200 = vunpack.c.l.b16 %v236
        %v1201 = vunpack.c.h.b16 %v236
        %v1202 = vunpack.c.l.b16 %v237
        %v1203 = vunpack.c.h.b16 %v237
        %v1204 = vunpack.c.l.b16 %v238
        %v1205 = vunpack.c.h.b16 %v238
        %v1206 = vunpack.c.l.b16 %v239
        %v1207 = vunpack.c.h.b16 %v239
        %v1208 = vunpack.c.l.b16 %v240
        %v1209 = vunpack.c.h.b16 %v240
        %v1210 = vunpack.c.l.b16 %v241
        %v1211 = vunpack.c.h.b16 %v241
        %v1212 = vunpack.c.l.b16 %v242
        %v1213 = vunpack.c.h.b16 %v242
        %v1214 = vunpack.c.l.b16 %v243
        %v1215 = vunpack.c.h.b16 %v243
        %v1216 = vunpack.c.l.b16 %v244
        %v1217 = vunpack.c.h.b16 %v244
        %v1218 = vunpack.c.l.b16 %v245
        %v1219 = vunpack.c.h.b16 %v245
        %v1220 = vunpack.c.l.b16 %v246
        %v1221 = vunpack.c.h.b16 %v246
        %v1222 = vunpack.c.l.b16 %v247
        %v1223 = vunpack.c.h.b16 %v247
        %v1224 = vunpack.c.l.b16 %v248
        %v1225 = vunpack.c.h.b16 %v248
        %v1226 = vunpack.c.l.b16 %v249
        %v1227 = vunpack.c.h.b16 %v249
        %v1228 = vunpack.c.l.b16 %v250
        %v1229 = vunpack.c.h.b16 %v250
        %v1230 = vunpack.c.l.b16 %v251
        %v1231 = vunpack.c.h.b16 %v251
        %v1232 = vunpack.c.l.b16 %v252
        %v1233 = vunpack.c.h.b16 %v252
        %v1234 = vunpack.c.l.b16 %v253
        %v1235 = vunpack.c.h.b16 %v253
        %v1236 = vunpack.c.l.b16 %v254
        %v1237 = vunpack.c.h.b16 %v254
        %v1238 = vunpack.c.l.b16 %v255
        %v1239 = vunpack.c.h.b16 %v255
        %v1240 = vunpack.c.l.b16 %v256
        %v1241 = vunpack.c.h.b16 %v256
        %v1242 = vunpack.c.l.b16 %v257
        %v1243 = vunpack.c.h.b16 %v257
        %v1244 = vunpack.c.l.b16 %v258
        %v1245 = vunpack.c.h.b16 %v258
        %v1246 = vunpack.c.l.b16 %v259
        %v1247 = vunpack.c.h.b16 %v259
        %v1248 = vunpack.c.l.b16 %v260
        %v1249 = vunpack.c.h.b16 %v260
        %v1250 = vunpack.c.l.b16 %v261
        %v1251 = vunpack.c.h.b16 %v261
        %v1252 = vunpack.c.l.b16 %v262
        %v1253 = vunpack.c.h.b16 %v262
        %v1254 = vunpack.c.l.b16 %v263
        %v1255 = vunpack.c.h.b16 %v263
        %v1256 = vunpack.c.l.b16 %v264
        %v1257 = vunpack.c.h.b16 %v264
        %v1258 = vunpack.c.l.b16 %v265
        %v1259 = vunpack.c.h.b16 %v265
        %v1260 = vunpack.c.l.b16 %v266
        %v1261 = vunpack.c.h.b16 %v266
        %v1262 = vunpack.c.l.b16 %v267
        %v1263 = vunpack.c.h.b16 %v267
        %v1264 = vunpack.c.l.b16 %v268
        %v1265 = vunpack.c.h.b16 %v268
        %v1266 = vunpack.c.l.b16 %v269
        %v1267 = vunpack.c.h.b16 %v269
        %v1268 = vunpack.c.l.b16 %v270
        %v1269 = vunpack.c.h.b16 %v270
        %v1270 = vunpack.c.l.b16 %v271
        %v1271 = vunpack.c.h.b16 %v271
        %v1272 = vunpack.c.l.b16 %v272
        %v1273 = vunpack.c.h.b16 %v272
        %v1274 = vunpack.c.l.b16 %v273
        %v1275 = vunpack.c.h.b16 %v273
        %v1276 = vunpack.c.l.b16 %v274
        %v1277 = vunpack.c.h.b16 %v274
        %v1278 = vunpack.c.l.b16 %v275
        %v1279 = vunpack.c.h.b16 %v275
        %v1280 = vunpack.c.l.b16 %v276
        %v1281 = vunpack.c.h.b16 %v276
        %v1282 = vunpack.c.l.b16 %v277
        %v1283 = vunpack.c.h.b16 %v277
        %v1284 = vunpack.c.l.b16 %v278
        %v1285 = vunpack.c.h.b16 %v278
        %v1286 = vunpack.c.l.b16 %v279
        %v1287 = vunpack.c.h.b16 %v279
        %v1288 = vunpack.c.l.b16 %v280
        %v1289 = vunpack.c.h.b16 %v280
        %v1290 = vunpack.c.l.b16 %v281
        %v1291 = vunpack.c.h.b16 %v281
        %v1292 = vunpack.c.l.b16 %v282
        %v1293 = vunpack.c.h.b16 %v282
        %v1294 = vunpack.c.l.b16 %v283
        %v1295 = vunpack.c.h.b16 %v283
        %v1296 = vunpack.c.l.b16 %v284
        %v1297 = vunpack.c.h.b16 %v284
        %v1298 = vunpack.c.l.b16 %v285
        %v1299 = vunpack.c.h.b16 %v285
        %v1300 = vunpack.c.l.b16 %v286
        %v1301 = vunpack.c.h.b16 %v286
        %v1302 = vunpack.c.l.b16 %v287
        %v1303 = vunpack.c.h.b16 %v287
        %v1304 = vunpack.c.l.b16 %v288
        %v1305 = vunpack.c.h.b16 %v288
        %v1306 = vunpack.c.l.b16 %v289
        %v1307 = vunpack.c.h.b16 %v289
        %v1308 = vunpack.c.l.b16 %v290
        %v1309 = vunpack.c.h.b16 %v290
        %v1310 = vunpack.c.l.b16 %v291
        %v1311 = vunpack.c.h.b16 %v291
        %v1312 = vunpack.c.l.b16 %v292
        %v1313 = vunpack.c.h.b16 %v292
        %v1314 = vunpack.c.l.b16 %v293
        %v1315 = vunpack.c.h.b16 %v293
        %v1316 = vunpack.c.l.b16 %v294
        %v1317 = vunpack.c.h.b16 %v294
        %v1318 = vunpack.c.l.b16 %v295
        %v1319 = vunpack.c.h.b16 %v295
        %v1320 = vunpack.c.l.b16 %v296
        %v1321 = vunpack.c.h.b16 %v296
        %v1322 = vunpack.c.l.b16 %v297
        %v1323 = vunpack.c.h.b16 %v297
        %v1324 = vunpack.c.l.b16 %v298
        %v1325 = vunpack.c.h.b16 %v298
        %v1326 = vunpack.c.l.b16 %v299
        %v1327 = vunpack.c.h.b16 %v299
        %v1328 = vunpack.c.l.b16 %v300
        %v1329 = vunpack.c.h.b16 %v300
        %v1330 = vunpack.c.l.b16 %v301
        %v1331 = vunpack.c.h.b16 %v301
        %v1332 = vunpack.c.l.b16 %v302
        %v1333 = vunpack.c.h.b16 %v302
        %v1334 = vunpack.c.l.b16 %v303
        %v1335 = vunpack.c.h.b16 %v303
        %v1336 = vunpack.c.l.b16 %v304
        %v1337 = vunpack.c.h.b16 %v304
        %v1338 = vunpack.c.l.b16 %v305
        %v1339 = vunpack.c.h.b16 %v305
        %v1340 = vunpack.c.l.b16 %v306
        %v1341 = vunpack.c.h.b16 %v306
        %v1342 = vunpack.c.l.b16 %v307
        %v1343 = vunpack.c.h.b16 %v307
        %v1344 = vpack.c.b16 %v1200, %v1176
        %v1345 = vpack.c.b16 %v1201, %v1177
        %v1346 = vpack.c.b16 %v1202, %v1178
        %v1347 = vpack.c.b16 %v1203, %v1179
        %v1348 = vpack.c.b16 %v1204, %v1180
        %v1349 = vpack.c.b16 %v1205, %v1181
        %v1350 = vpack.c.b16 %v1206, %v1182
        %v1351 = vpack.c.b16 %v1207, %v1183
        %v1352 = vpack.c.b16 %v1208, %v1184
        %v1353 = vpack.c.b16 %v1209, %v1185
        %v1354 = vpack.c.b16 %v1210, %v1186
        %v1355 = vpack.c.b16 %v1211, %v1187
        %v1356 = vpack.c.b16 %v1212, %v1188
        %v1357 = vpack.c.b16 %v1213, %v1189
        %v1358 = vpack.c.b16 %v1214, %v1190
        %v1359 = vpack.c.b16 %v1215, %v1191
        %v1360 = vpack.c.b16 %v1216, %v1192
        %v1361 = vpack.c.b16 %v1217, %v1193
        %v1362 = vpack.c.b16 %v1218, %v1194
        %v1363 = vpack.c.b16 %v1219, %v1195
        %v1364 = vpack.c.b16 %v1220, %v1196
        %v1365 = vpack.c.b16 %v1221, %v1197
        %v1366 = vpack.c.b16 %v1222, %v1198
        %v1367 = vpack.c.b16 %v1223, %v1199
        %v1368 = vpack.c.b16 %v1248, %v1224
        %v1369 = vpack.c.b16 %v1249, %v1225
        %v1370 = vpack.c.b16 %v1250, %v1226
        %v1371 = vpack.c.b16 %v1251, %v1227
        %v1372 = vpack.c.b16 %v1252, %v1228
        %v1373 = vpack.c.b16 %v1253, %v1229
        %v1374 = vpack.c.b16 %v1254, %v1230
        %v1375 = vpack.c.b16 %v1255, %v1231
        %v1376 = vpack.c.b16 %v1256, %v1232
        %v1377 = vpack.c.b16 %v1257, %v1233
        %v1378 = vpack.c.b16 %v1258, %v1234
        %v1379 = vpack.c.b16 %v1259, %v1235
        %v1380 = vpack.c.b16 %v1260, %v1236
        %v1381 = vpack.c.b16 %v1261, %v1237
        %v1382 = vpack.c.b16 %v1262, %v1238
        %v1383 = vpack.c.b16 %v1263, %v1239
        %v1384 = vpack.c.b16 %v1264, %v1240
        %v1385 = vpack.c.b16 %v1265, %v1241
        %v1386 = vpack.c.b16 %v1266, %v1242
        %v1387 = vpack.c.b16 %v1267, %v1243
        %v1388 = vpack.c.b16 %v1268, %v1244
        %v1389 = vpack.c.b16 %v1269, %v1245
        %v1390 = vpack.c.b16 %v1270, %v1246
        %v1391 = vpack.c.b16 %v1271, %v1247
        %v1392 = vpack.c.b16 %v1296, %v1272
        %v1393 = vpack.c.b16 %v1297, %v1273
        %v1394 = vpack.c.b16 %v1298, %v1274
        %v1395 = vpack.c.b16 %v1299, %v1275
        %v1396 = vpack.c.b16 %v1300, %v1276
        %v1397 = vpack.c.b16 %v1301, %v1277
        %v1398 = vpack.c.b16 %v1302, %v1278
        %v1399 = vpack.c.b16 %v1303, %v1279
        %v1400 = vpack.c.b16 %v1304, %v1280
        %v1401 = vpack.c.b16 %v1305, %v1281
        %v1402 = vpack.c.b16 %v1306, %v1282
        %v1403 = vpack.c.b16 %v1307, %v1283
        %v1404 = vpack.c.b16 %v1308, %v1284
        %v1405 = vpack.c.b16 %v1309, %v1285
        %v1406 = vpack.c.b16 %v1310, %v1286
        %v1407 = vpack.c.b16 %v1311, %v1287
        %v1408 = vpack.c.b16 %v1312, %v1288
        %v1409 = vpack.c.b16 %v1313, %v1289
        %v1410 = vpack.c.b16 %v1314, %v1290
        %v1411 = vpack.c.b16 %v1315, %v1291
        %v1412 = vpack.c.b16 %v1316, %v1292
        %v1413 = vpack.c.b16 %v1317, %v1293
        %v1414 = vpack.c.b16 %v1318, %v1294
        %v1415 = vpack.c.b16 %v1319, %v1295
        %v1416 = vpack.c.b16 %v1320, %v1320
        %v1417 = vpack.c.b16 %v1321, %v1321
        %v1418 = vpack.c.b16 %v1322, %v1322
        %v1419 = vpack.c.b16 %v1323, %v1323
        %v1420 = vpack.c.b16 %v1324, %v1324
        %v1421 = vpack.c.b16 %v1325, %v1325
        %v1422 = vpack.c.b16 %v1326, %v1326
        %v1423 = vpack.c.b16 %v1327, %v1327
        %v1424 = vpack.c.b16 %v1328, %v1328
        %v1425 = vpack.c.b16 %v1329, %v1329
        %v1426 = vpack.c.b16 %v1330, %v1330
        %v1427 = vpack.c.b16 %v1331, %v1331
        %v1428 = vpack.c.b16 %v1332, %v1332
        %v1429 = vpack.c.b16 %v1333, %v1333
        %v1430 = vpack.c.b16 %v1334, %v1334
        %v1431 = vpack.c.b16 %v1335, %v1335
        %v1432 = vpack.c.b16 %v1336, %v1336
        %v1433 = vpack.c.b16 %v1337, %v1337
        %v1434 = vpack.c.b16 %v1338, %v1338
        %v1435 = vpack.c.b16 %v1339, %v1339
        %v1436 = vpack.c.b16 %v1340, %v1340
        %v1437 = vpack.c.b16 %v1341, %v1341
        %v1438 = vpack.c.b16 %v1342, %v1342
        %v1439 = vpack.c.b16 %v1343, %v1343
        %v2304 = vunpack.c.l.b16 %v308
        %v2305 = vunpack.c.h.b16 %v308
        %v2306 = vunpack.c.l.b16 %v309
        %v2307 = vunpack.c.l.b16 %v310
        %v2308 = vunpack.c.h.b16 %v310
        %v2309 = vunpack.c.l.b16 %v311
        %v2310 = vunpack.c.l.b16 %v312
        %v2311 = vunpack.c.h.b16 %v312
        %v2312 = vunpack.c.l.b16 %v313
        %v2313 = vunpack.c.l.b16 %v314
        %v2314 = vunpack.c.h.b16 %v314
        %v2315 = vunpack.c.l.b16 %v315
        %v2316 = vunpack.c.l.b16 %v316
        %v2317 = vunpack.c.h.b16 %v316
        %v2318 = vunpack.c.l.b16 %v317
        %v2319 = vunpack.c.l.b16 %v318
        %v2320 = vunpack.c.h.b16 %v318
        %v2321 = vunpack.c.l.b16 %v319
        %v2322 = vunpack.c.l.b16 %v320
        %v2323 = vunpack.c.h.b16 %v320
        %v2324 = vunpack.c.l.b16 %v321
        %v2325 = vunpack.c.l.b16 %v322
        %v2326 = vunpack.c.h.b16 %v322
        %v2327 = vunpack.c.l.b16 %v323
        %v2328 = vunpack.c.l.b16 %v324
        %v2329 = vunpack.c.h.b16 %v324
        %v2330 = vunpack.c.l.b16 %v325
        %v2331 = vunpack.c.l.b16 %v326
        %v2332 = vunpack.c.h.b16 %v326
        %v2333 = vunpack.c.l.b16 %v327
        %v2334 = vunpack.c.l.b16 %v328
        %v2335 = vunpack.c.h.b16 %v328
        %v2336 = vunpack.c.l.b16 %v329
        %v2337 = vunpack.c.l.b16 %v330
        %v2338 = vunpack.c.h.b16 %v330
        %v2339 = vunpack.c.l.b16 %v331
        %v2340 = vunpack.c.l.b16 %v332
        %v2341 = vunpack.c.h.b16 %v332
        %v2342 = vunpack.c.l.b16 %v333
        %v2343 = vunpack.c.l.b16 %v334
        %v2344 = vunpack.c.h.b16 %v334
        %v2345 = vunpack.c.l.b16 %v335
        %v2346 = vunpack.c.l.b16 %v336
        %v2347 = vunpack.c.h.b16 %v336
        %v2348 = vunpack.c.l.b16 %v337
        %v2349 = vunpack.c.l.b16 %v338
        %v2350 = vunpack.c.h.b16 %v338
        %v2351 = vunpack.c.l.b16 %v339
        %v2352 = vunpack.c.l.b16 %v340
        %v2353 = vunpack.c.h.b16 %v340
        %v2354 = vunpack.c.l.b16 %v341
        %v2355 = vunpack.c.l.b16 %v342
        %v2356 = vunpack.c.h.b16 %v342
        %v2357 = vunpack.c.l.b16 %v343
        %v2358 = vunpack.c.l.b16 %v344
        %v2359 = vunpack.c.h.b16 %v344
        %v2360 = vunpack.c.l.b16 %v345
        %v2361 = vunpack.c.l.b16 %v346
        %v2362 = vunpack.c.h.b16 %v346
        %v2363 = vunpack.c.l.b16 %v347
        %v2364 = vunpack.c.l.b16 %v348
        %v2365 = vunpack.c.h.b16 %v348
        %v2366 = vunpack.c.l.b16 %v349
        %v2367 = vunpack.c.l.b16 %v350
        %v2368 = vunpack.c.h.b16 %v350
        %v2369 = vunpack.c.l.b16 %v351
        %v2370 = vunpack.c.l.b16 %v352
        %v2371 = vunpack.c.h.b16 %v352
        %v2372 = vunpack.c.l.b16 %v353
        %v2373 = vunpack.c.l.b16 %v354
        %v2374 = vunpack.c.h.b16 %v354
        %v2375 = vunpack.c.l.b16 %v355
        %v2376 = vunpack.c.l.b16 %v356
        %v2377 = vunpack.c.h.b16 %v356
        %v2378 = vunpack.c.l.b16 %v357
        %v2379 = vunpack.c.l.b16 %v358
        %v2380 = vunpack.c.h.b16 %v358
        %v2381 = vunpack.c.l.b16 %v359
        %v2382 = vunpack.c.l.b16 %v360
        %v2383 = vunpack.c.h.b16 %v360
        %v2384 = vunpack.c.l.b16 %v361
        %v2385 = vunpack.c.l.b16 %v362
        %v2386 = vunpack.c.h.b16 %v362
        %v2387 = vunpack.c.l.b16 %v363
        %v2388 = vunpack.c.l.b16 %v364
        %v2389 = vunpack.c.h.b16 %v364
        %v2390 = vunpack.c.l.b16 %v365
        %v2391 = vunpack.c.l.b16 %v366
        %v2392 = vunpack.c.h.b16 %v366
        %v2393 = vunpack.c.l.b16 %v367
        %v2394 = vunpack.c.l.b16 %v368
        %v2395 = vunpack.c.h.b16 %v368
        %v2396 = vunpack.c.l.b16 %v369
        %v2397 = vunpack.c.l.b16 %v370
        %v2398 = vunpack.c.h.b16 %v370
        %v2399 = vunpack.c.l.b16 %v371
        %v2400 = vunpack.c.l.b16 %v372
        %v2401 = vunpack.c.h.b16 %v372
        %v2402 = vunpack.c.l.b16 %v373
        %v2403 = vunpack.c.l.b16 %v374
        %v2404 = vunpack.c.h.b16 %v374
        %v2405 = vunpack.c.l.b16 %v375
        %v2406 = vunpack.c.l.b16 %v376
        %v2407 = vunpack.c.h.b16 %v376
        %v2408 = vunpack.c.l.b16 %v377
        %v2409 = vunpack.c.l.b16 %v378
        %v2410 = vunpack.c.h.b16 %v378
        %v2411 = vunpack.c.l.b16 %v379
        %v2412 = vunpack.c.l.b16 %v380
        %v2413 = vunpack.c.h.b16 %v380
        %v2414 = vunpack.c.l.b16 %v381
        %v2415 = vunpack.c.l.b16 %v382
        %v2416 = vunpack.c.h.b16 %v382
        %v2417 = vunpack.c.l.b16 %v383
        %v2418 = vunpack.c.l.b16 %v384
        %v2419 = vunpack.c.h.b16 %v384
        %v2420 = vunpack.c.l.b16 %v385
        %v2421 = vunpack.c.l.b16 %v386
        %v2422 = vunpack.c.h.b16 %v386
        %v2423 = vunpack.c.l.b16 %v387
        %v2424 = vunpack.c.l.b16 %v388
        %v2425 = vunpack.c.h.b16 %v388
        %v2426 = vunpack.c.l.b16 %v389
        %v2427 = vunpack.c.l.b16 %v390
        %v2428 = vunpack.c.h.b16 %v390
        %v2429 = vunpack.c.l.b16 %v391
        %v2430 = vunpack.c.l.b16 %v392
        %v2431 = vunpack.c.h.b16 %v392
        %v2432 = vunpack.c.l.b16 %v393
        %v2433 = vunpack.c.l.b16 %v394
        %v2434 = vunpack.c.h.b16 %v394
        %v2435 = vunpack.c.l.b16 %v395
        %v2436 = vunpack.c.l.b16 %v396
        %v2437 = vunpack.c.h.b16 %v396
        %v2438 = vunpack.c.l.b16 %v397
        %v2439 = vunpack.c.l.b16 %v398
        %v2440 = vunpack.c.h.b16 %v398
        %v2441 = vunpack.c.l.b16 %v399
        %v2442 = vunpack.c.l.b16 %v400
        %v2443 = vunpack.c.h.b16 %v400
        %v2444 = vunpack.c.l.b16 %v401
        %v2445 = vunpack.c.l.b16 %v402
        %v2446 = vunpack.c.h.b16 %v402
        %v2447 = vunpack.c.l.b16 %v403
        %v2448 = vunpack.c.l.b16 %v404
        %v2449 = vunpack.c.h.b16 %v404
        %v2450 = vunpack.c.l.b16 %v405
        %v2451 = vunpack.c.l.b16 %v406
        %v2452 = vunpack.c.h.b16 %v406
        %v2453 = vunpack.c.l.b16 %v407
        %v2454 = vunpack.c.l.b16 %v408
        %v2455 = vunpack.c.h.b16 %v408
        %v2456 = vunpack.c.l.b16 %v409
        %v2457 = vunpack.c.l.b16 %v410
        %v2458 = vunpack.c.h.b16 %v410
        %v2459 = vunpack.c.l.b16 %v411
        %v2460 = vunpack.c.l.b16 %v412
        %v2461 = vunpack.c.h.b16 %v412
        %v2462 = vunpack.c.l.b16 %v413
        %v2463 = vunpack.c.l.b16 %v414
        %v2464 = vunpack.c.h.b16 %v414
        %v2465 = vunpack.c.l.b16 %v415
        %v2466 = vunpack.c.l.b16 %v416
        %v2467 = vunpack.c.h.b16 %v416
        %v2468 = vunpack.c.l.b16 %v417
        %v2469 = vunpack.c.l.b16 %v418
        %v2470 = vunpack.c.h.b16 %v418
        %v2471 = vunpack.c.l.b16 %v419
        %v2472 = vunpack.c.l.b16 %v420
        %v2473 = vunpack.c.h.b16 %v420
        %v2474 = vunpack.c.l.b16 %v421
        %v2475 = vunpack.c.l.b16 %v422
        %v2476 = vunpack.c.h.b16 %v422
        %v2477 = vunpack.c.l.b16 %v423
        %v2478 = vunpack.c.l.b16 %v424
        %v2479 = vunpack.c.h.b16 %v424
        %v2480 = vunpack.c.l.b16 %v425
        %v2481 = vunpack.c.l.b16 %v426
        %v2482 = vunpack.c.h.b16 %v426
        %v2483 = vunpack.c.l.b16 %v427
        %v2484 = vunpack.c.l.b16 %v428
        %v2485 = vunpack.c.h.b16 %v428
        %v2486 = vunpack.c.l.b16 %v429
        %v2487 = vunpack.c.l.b16 %v430
        %v2488 = vunpack.c.h.b16 %v430
        %v2489 = vunpack.c.l.b16 %v431
        %v2490 = vunpack.c.l.b16 %v432
        %v2491 = vunpack.c.h.b16 %v432
        %v2492 = vunpack.c.l.b16 %v433
        %v2493 = vunpack.c.l.b16 %v434
        %v2494 = vunpack.c.h.b16 %v434
        %v2495 = vunpack.c.l.b16 %v435
        %v2496 = vunpack.c.l.b16 %v436
        %v2497 = vunpack.c.h.b16 %v436
        %v2498 = vunpack.c.l.b16 %v437
        %v2499 = vunpack.c.l.b16 %v438
        %v2500 = vunpack.c.h.b16 %v438
        %v2501 = vunpack.c.l.b16 %v439
        %v2502 = vunpack.c.l.b16 %v440
        %v2503 = vunpack.c.h.b16 %v440
        %v2504 = vunpack.c.l.b16 %v441
        %v2505 = vunpack.c.l.b16 %v442
        %v2506 = vunpack.c.h.b16 %v442
        %v2507 = vunpack.c.l.b16 %v443
        %v2508 = vunpack.c.l.b16 %v444
        %v2509 = vunpack.c.h.b16 %v444
        %v2510 = vunpack.c.l.b16 %v445
        %v2511 = vunpack.c.l.b16 %v446
        %v2512 = vunpack.c.h.b16 %v446
        %v2513 = vunpack.c.l.b16 %v447
        %v2514 = vunpack.c.l.b16 %v448
        %v2515 = vunpack.c.h.b16 %v448
        %v2516 = vunpack.c.l.b16 %v449
        %v2517 = vunpack.c.l.b16 %v450
        %v2518 = vunpack.c.h.b16 %v450
        %v2519 = vunpack.c.l.b16 %v451
        %v2520 = vunpack.c.l.b16 %v452
        %v2521 = vunpack.c.h.b16 %v452
        %v2522 = vunpack.c.l.b16 %v453
        %v2523 = vunpack.c.l.b16 %v454
        %v2524 = vunpack.c.h.b16 %v454
        %v2525 = vunpack.c.l.b16 %v455
        %v2526 = vunpack.c.l.b16 %v456
        %v2527 = vunpack.c.h.b16 %v456
        %v2528 = vunpack.c.l.b16 %v457
        %v2529 = vunpack.c.l.b16 %v458
        %v2530 = vunpack.c.h.b16 %v458
        %v2531 = vunpack.c.l.b16 %v459
        %v2532 = vunpack.c.l.b16 %v460
        %v2533 = vunpack.c.h.b16 %v460
        %v2534 = vunpack.c.l.b16 %v461
        %v2535 = vunpack.c.l.b16 %v462
        %v2536 = vunpack.c.h.b16 %v462
        %v2537 = vunpack.c.l.b16 %v463
        %v2538 = vunpack.c.l.b16 %v464
        %v2539 = vunpack.c.h.b16 %v464
        %v2540 = vunpack.c.l.b16 %v465
        %v2541 = vunpack.c.l.b16 %v466
        %v2542 = vunpack.c.h.b16 %v466
        %v2543 = vunpack.c.l.b16 %v467
        %v2544 = vunpack.c.l.b16 %v468
        %v2545 = vunpack.c.h.b16 %v468
        %v2546 = vunpack.c.l.b16 %v469
        %v2547 = vunpack.c.l.b16 %v470
        %v2548 = vunpack.c.h.b16 %v470
        %v2549 = vunpack.c.l.b16 %v471
        %v2550 = vunpack.c.l.b16 %v472
        %v2551 = vunpack.c.h.b16 %v472
        %v2552 = vunpack.c.l.b16 %v473
        %v2553 = vunpack.c.l.b16 %v474
        %v2554 = vunpack.c.h.b16 %v474
        %v2555 = vunpack.c.l.b16 %v475
        %v2556 = vunpack.c.l.b16 %v476
        %v2557 = vunpack.c.h.b16 %v476
        %v2558 = vunpack.c.l.b16 %v477
        %v2559 = vunpack.c.l.b16 %v478
        %v2560 = vunpack.c.h.b16 %v478
        %v2561 = vunpack.c.l.b16 %v479
        %v2562 = vunpack.c.l.b16 %v480
        %v2563 = vunpack.c.h.b16 %v480
        %v2564 = vunpack.c.l.b16 %v481
        %v2565 = vunpack.c.l.b16 %v482
        %v2566 = vunpack.c.h.b16 %v482
        %v2567 = vunpack.c.l.b16 %v483
        %v2568 = vunpack.c.l.b16 %v484
        %v2569 = vunpack.c.h.b16 %v484
        %v2570 = vunpack.c.l.b16 %v485
        %v2571 = vunpack.c.l.b16 %v486
        %v2572 = vunpack.c.h.b16 %v486
        %v2573 = vunpack.c.l.b16 %v487
        %v2574 = vunpack.c.l.b16 %v488
        %v2575 = vunpack.c.h.b16 %v488
        %v2576 = vunpack.c.l.b16 %v489
        %v2577 = vunpack.c.l.b16 %v490
        %v2578 = vunpack.c.h.b16 %v490
        %v2579 = vunpack.c.l.b16 %v491
        %v2580 = vunpack.c.l.b16 %v492
        %v2581 = vunpack.c.h.b16 %v492
        %v2582 = vunpack.c.l.b16 %v493
        %v2583 = vunpack.c.l.b16 %v494
        %v2584 = vunpack.c.h.b16 %v494
        %v2585 = vunpack.c.l.b16 %v495
        %v2586 = vunpack.c.l.b16 %v496
        %v2587 = vunpack.c.h.b16 %v496
        %v2588 = vunpack.c.l.b16 %v497
        %v2589 = vunpack.c.l.b16 %v498
        %v2590 = vunpack.c.h.b16 %v498
        %v2591 = vunpack.c.l.b16 %v499
        %v2592 = vunpack.c.l.b16 %v500
        %v2593 = vunpack.c.h.b16 %v500
        %v2594 = vunpack.c.l.b16 %v501
        %v2595 = vunpack.c.l.b16 %v502
        %v2596 = vunpack.c.h.b16 %v502
        %v2597 = vunpack.c.l.b16 %v503
        %v2598 = vunpack.c.l.b16 %v504
        %v2599 = vunpack.c.h.b16 %v504
        %v2600 = vunpack.c.l.b16 %v505
        %v2601 = vunpack.c.l.b16 %v506
        %v2602 = vunpack.c.h.b16 %v506
        %v2603 = vunpack.c.l.b16 %v507
        %v2604 = vunpack.c.l.b16 %v508
        %v2605 = vunpack.c.h.b16 %v508
        %v2606 = vunpack.c.l.b16 %v509
        %v2607 = vunpack.c.l.b16 %v510
        %v2608 = vunpack.c.h.b16 %v510
        %v2609 = vunpack.c.l.b16 %v511
        %v2610 = vunpack.c.l.b16 %v512
        %v2611 = vunpack.c.h.b16 %v512
        %v2612 = vunpack.c.l.b16 %v513
        %v2613 = vunpack.c.l.b16 %v514
        %v2614 = vunpack.c.h.b16 %v514
        %v2615 = vunpack.c.l.b16 %v515
        %v2616 = vunpack.c.l.b16 %v516
        %v2617 = vunpack.c.h.b16 %v516
        %v2618 = vunpack.c.l.b16 %v517
        %v2619 = vunpack.c.l.b16 %v518
        %v2620 = vunpack.c.h.b16 %v518
        %v2621 = vunpack.c.l.b16 %v519
        %v2622 = vunpack.c.l.b16 %v520
        %v2623 = vunpack.c.h.b16 %v520
        %v2624 = vunpack.c.l.b16 %v521
        %v2625 = vunpack.c.l.b16 %v522
        %v2626 = vunpack.c.h.b16 %v522
        %v2627 = vunpack.c.l.b16 %v523
        %v2628 = vunpack.c.l.b16 %v524
        %v2629 = vunpack.c.h.b16 %v524
        %v2630 = vunpack.c.l.b16 %v525
        %v2631 = vunpack.c.l.b16 %v526
        %v2632 = vunpack.c.h.b16 %v526
        %v2633 = vunpack.c.l.b16 %v527
        %v2634 = vunpack.c.l.b16 %v528
        %v2635 = vunpack.c.h.b16 %v528
        %v2636 = vunpack.c.l.b16 %v529
        %v2637 = vunpack.c.l.b16 %v530
        %v2638 = vunpack.c.h.b16 %v530
        %v2639 = vunpack.c.l.b16 %v531
        %v2640 = vunpack.c.l.b16 %v532
        %v2641 = vunpack.c.h.b16 %v532
        %v2642 = vunpack.c.l.b16 %v533
        %v2643 = vunpack.c.l.b16 %v534
        %v2644 = vunpack.c.h.b16 %v534
        %v2645 = vunpack.c.l.b16 %v535
        %v2646 = vunpack.c.l.b16 %v536
        %v2647 = vunpack.c.h.b16 %v536
        %v2648 = vunpack.c.l.b16 %v537
        %v2649 = vunpack.c.l.b16 %v538
        %v2650 = vunpack.c.h.b16 %v538
        %v2651 = vunpack.c.l.b16 %v539
        %v2652 = vunpack.c.l.b16 %v540
        %v2653 = vunpack.c.h.b16 %v540
        %v2654 = vunpack.c.l.b16 %v541
        %v2655 = vunpack.c.l.b16 %v542
        %v2656 = vunpack.c.h.b16 %v542
        %v2657 = vunpack.c.l.b16 %v543
        %v2658 = vunpack.c.l.b16 %v544
        %v2659 = vunpack.c.h.b16 %v544
        %v2660 = vunpack.c.l.b16 %v545
        %v2661 = vunpack.c.l.b16 %v546
        %v2662 = vunpack.c.h.b16 %v546
        %v2663 = vunpack.c.l.b16 %v547
        %v2664 = vunpack.c.l.b16 %v548
        %v2665 = vunpack.c.h.b16 %v548
        %v2666 = vunpack.c.l.b16 %v549
        %v2667 = vunpack.c.l.b16 %v550
        %v2668 = vunpack.c.h.b16 %v550
        %v2669 = vunpack.c.l.b16 %v551
        %v2670 = vunpack.c.l.b16 %v552
        %v2671 = vunpack.c.h.b16 %v552
        %v2672 = vunpack.c.l.b16 %v553
        %v2673 = vunpack.c.l.b16 %v554
        %v2674 = vunpack.c.h.b16 %v554
        %v2675 = vunpack.c.l.b16 %v555
        %v2676 = vunpack.c.l.b16 %v556
        %v2677 = vunpack.c.h.b16 %v556
        %v2678 = vunpack.c.l.b16 %v557
        %v2679 = vunpack.c.l.b16 %v558
        %v2680 = vunpack.c.h.b16 %v558
        %v2681 = vunpack.c.l.b16 %v559
        %v2682 = vunpack.c.l.b16 %v560
        %v2683 = vunpack.c.h.b16 %v560
        %v2684 = vunpack.c.l.b16 %v561
        %v2685 = vunpack.c.l.b16 %v562
        %v2686 = vunpack.c.h.b16 %v562
        %v2687 = vunpack.c.l.b16 %v563
        %v2688 = vunpack.c.l.b16 %v564
        %v2689 = vunpack.c.h.b16 %v564
        %v2690 = vunpack.c.l.b16 %v565
        %v2691 = vunpack.c.l.b16 %v566
        %v2692 = vunpack.c.h.b16 %v566
        %v2693 = vunpack.c.l.b16 %v567
        %v2694 = vunpack.c.l.b16 %v568
        %v2695 = vunpack.c.h.b16 %v568
        %v2696 = vunpack.c.l.b16 %v569
        %v2697 = vunpack.c.l.b16 %v570
        %v2698 = vunpack.c.h.b16 %v570
        %v2699 = vunpack.c.l.b16 %v571
        %v2700 = vunpack.c.l.b16 %v572
        %v2701 = vunpack.c.h.b16 %v572
        %v2702 = vunpack.c.l.b16 %v573
        %v2703 = vunpack.c.l.b16 %v574
        %v2704 = vunpack.c.h.b16 %v574
        %v2705 = vunpack.c.l.b16 %v575
        %v2706 = vunpack.c.l.b16 %v576
        %v2707 = vunpack.c.h.b16 %v576
        %v2708 = vunpack.c.l.b16 %v577
        %v2709 = vunpack.c.l.b16 %v578
        %v2710 = vunpack.c.h.b16 %v578
        %v2711 = vunpack.c.l.b16 %v579
        %v2712 = vunpack.c.l.b16 %v580
        %v2713 = vunpack.c.h.b16 %v580
        %v2714 = vunpack.c.l.b16 %v581
        %v2715 = vunpack.c.l.b16 %v582
        %v2716 = vunpack.c.h.b16 %v582
        %v2717 = vunpack.c.l.b16 %v583
        %v2718 = vunpack.c.l.b16 %v584
        %v2719 = vunpack.c.h.b16 %v584
        %v2720 = vunpack.c.l.b16 %v585
        %v2721 = vunpack.c.l.b16 %v586
        %v2722 = vunpack.c.h.b16 %v586
        %v2723 = vunpack.c.l.b16 %v587
        %v2724 = vunpack.c.l.b16 %v588
        %v2725 = vunpack.c.h.b16 %v588
        %v2726 = vunpack.c.l.b16 %v589
        %v2727 = vunpack.c.l.b16 %v590
        %v2728 = vunpack.c.h.b16 %v590
        %v2729 = vunpack.c.l.b16 %v591
        %v2730 = vunpack.c.l.b16 %v592
        %v2731 = vunpack.c.h.b16 %v592
        %v2732 = vunpack.c.l.b16 %v593
        %v2733 = vunpack.c.l.b16 %v594
        %v2734 = vunpack.c.h.b16 %v594
        %v2735 = vunpack.c.l.b16 %v595
        %v2736 = vunpack.c.l.b16 %v596
        %v2737 = vunpack.c.h.b16 %v596
        %v2738 = vunpack.c.l.b16 %v597
        %v2739 = vunpack.c.l.b16 %v598
        %v2740 = vunpack.c.h.b16 %v598
        %v2741 = vunpack.c.l.b16 %v599
        %v2742 = vunpack.c.l.b16 %v600
        %v2743 = vunpack.c.h.b16 %v600
        %v2744 = vunpack.c.l.b16 %v601
        %v2745 = vunpack.c.l.b16 %v602
        %v2746 = vunpack.c.h.b16 %v602
        %v2747 = vunpack.c.l.b16 %v603
        %v2748 = vunpack.c.l.b16 %v604
        %v2749 = vunpack.c.h.b16 %v604
        %v2750 = vunpack.c.l.b16 %v605
        %v2751 = vunpack.c.l.b16 %v606
        %v2752 = vunpack.c.h.b16 %v606
        %v2753 = vunpack.c.l.b16 %v607
        %v2754 = vunpack.c.l.b16 %v608
        %v2755 = vunpack.c.h.b16 %v608
        %v2756 = vunpack.c.l.b16 %v609
        %v2757 = vunpack.c.l.b16 %v610
        %v2758 = vunpack.c.h.b16 %v610
        %v2759 = vunpack.c.l.b16 %v611
        %v2760 = vunpack.c.l.b16 %v612
        %v2761 = vunpack.c.h.b16 %v612
        %v2762 = vunpack.c.l.b16 %v613
        %v2763 = vunpack.c.l.b16 %v614
        %v2764 = vunpack.c.h.b16 %v614
        %v2765 = vunpack.c.l.b16 %v615
        %v2766 = vunpack.c.l.b16 %v616
        %v2767 = vunpack.c.h.b16 %v616
        %v2768 = vunpack.c.l.b16 %v617
        %v2769 = vunpack.c.l.b16 %v618
        %v2770 = vunpack.c.h.b16 %v618
        %v2771 = vunpack.c.l.b16 %v619
        %v2772 = vunpack.c.l.b16 %v620
        %v2773 = vunpack.c.h.b16 %v620
        %v2774 = vunpack.c.l.b16 %v621
        %v2775 = vunpack.c.l.b16 %v622
        %v2776 = vunpack.c.h.b16 %v622
        %v2777 = vunpack.c.l.b16 %v623
        %v2778 = vunpack.c.l.b16 %v624
        %v2779 = vunpack.c.h.b16 %v624
        %v2780 = vunpack.c.l.b16 %v625
        %v2781 = vunpack.c.l.b16 %v626
        %v2782 = vunpack.c.h.b16 %v626
        %v2783 = vunpack.c.l.b16 %v627
        %v2784 = vunpack.c.l.b16 %v628
        %v2785 = vunpack.c.h.b16 %v628
        %v2786 = vunpack.c.l.b16 %v629
        %v2787 = vunpack.c.l.b16 %v630
        %v2788 = vunpack.c.h.b16 %v630
        %v2789 = vunpack.c.l.b16 %v631
        %v2790 = vunpack.c.l.b16 %v632
        %v2791 = vunpack.c.h.b16 %v632
        %v2792 = vunpack.c.l.b16 %v633
        %v2793 = vunpack.c.l.b16 %v634
        %v2794 = vunpack.c.h.b16 %v634
        %v2795 = vunpack.c.l.b16 %v635
        %v2796 = vunpack.c.l.b16 %v636
        %v2797 = vunpack.c.h.b16 %v636
        %v2798 = vunpack.c.l.b16 %v637
        %v2799 = vunpack.c.l.b16 %v638
        %v2800 = vunpack.c.h.b16 %v638
        %v2801 = vunpack.c.l.b16 %v639
        %v2802 = vunpack.c.l.b16 %v640
        %v2803 = vunpack.c.h.b16 %v640
        %v2804 = vunpack.c.l.b16 %v641
        %v2805 = vunpack.c.l.b16 %v642
        %v2806 = vunpack.c.h.b16 %v642
        %v2807 = vunpack.c.l.b16 %v643
        %v2808 = vunpack.c.l.b16 %v644
        %v2809 = vunpack.c.h.b16 %v644
        %v2810 = vunpack.c.l.b16 %v645
        %v2811 = vunpack.c.l.b16 %v646
        %v2812 = vunpack.c.h.b16 %v646
        %v2813 = vunpack.c.l.b16 %v647
        %v2814 = vunpack.c.l.b16 %v648
        %v2815 = vunpack.c.h.b16 %v648
        %v2816 = vunpack.c.l.b16 %v649
        %v2817 = vunpack.c.l.b16 %v650
        %v2818 = vunpack.c.h.b16 %v650
        %v2819 = vunpack.c.l.b16 %v651
        %v2820 = vunpack.c.l.b16 %v652
        %v2821 = vunpack.c.h.b16 %v652
        %v2822 = vunpack.c.l.b16 %v653
        %v2823 = vunpack.c.l.b16 %v654
        %v2824 = vunpack.c.h.b16 %v654
        %v2825 = vunpack.c.l.b16 %v655
        %v2826 = vunpack.c.l.b16 %v656
        %v2827 = vunpack.c.h.b16 %v656
        %v2828 = vunpack.c.l.b16 %v657
        %v2829 = vunpack.c.l.b16 %v658
        %v2830 = vunpack.c.h.b16 %v658
        %v2831 = vunpack.c.l.b16 %v659
        %v2832 = vunpack.c.l.b16 %v660
        %v2833 = vunpack.c.h.b16 %v660
        %v2834 = vunpack.c.l.b16 %v661
        %v2835 = vunpack.c.l.b16 %v662
        %v2836 = vunpack.c.h.b16 %v662
        %v2837 = vunpack.c.l.b16 %v663
        %v2838 = vunpack.c.l.b16 %v664
        %v2839 = vunpack.c.h.b16 %v664
        %v2840 = vunpack.c.l.b16 %v665
        %v2841 = vunpack.c.l.b16 %v666
        %v2842 = vunpack.c.h.b16 %v666
        %v2843 = vunpack.c.l.b16 %v667
        %v2844 = vunpack.c.l.b16 %v668
        %v2845 = vunpack.c.h.b16 %v668
        %v2846 = vunpack.c.l.b16 %v669
        %v2847 = vunpack.c.l.b16 %v670
        %v2848 = vunpack.c.h.b16 %v670
        %v2849 = vunpack.c.l.b16 %v671
        %v2850 = vunpack.c.l.b16 %v672
        %v2851 = vunpack.c.h.b16 %v672
        %v2852 = vunpack.c.l.b16 %v673
        %v2853 = vunpack.c.l.b16 %v674
        %v2854 = vunpack.c.h.b16 %v674
        %v2855 = vunpack.c.l.b16 %v675
        %v2856 = vunpack.c.l.b16 %v676
        %v2857 = vunpack.c.h.b16 %v676
        %v2858 = vunpack.c.l.b16 %v677
        %v2859 = vunpack.c.l.b16 %v678
        %v2860 = vunpack.c.h.b16 %v678
        %v2861 = vunpack.c.l.b16 %v679
        %v2862 = vunpack.c.l.b16 %v680
        %v2863 = vunpack.c.h.b16 %v680
        %v2864 = vunpack.c.l.b16 %v681
        %v2865 = vunpack.c.l.b16 %v682
        %v2866 = vunpack.c.h.b16 %v682
        %v2867 = vunpack.c.l.b16 %v683
        %v2868 = vunpack.c.l.b16 %v684
        %v2869 = vunpack.c.h.b16 %v684
        %v2870 = vunpack.c.l.b16 %v685
        %v2871 = vunpack.c.l.b16 %v686
        %v2872 = vunpack.c.h.b16 %v686
        %v2873 = vunpack.c.l.b16 %v687
        %v2874 = vunpack.c.l.b16 %v688
        %v2875 = vunpack.c.h.b16 %v688
        %v2876 = vunpack.c.l.b16 %v689
        %v2877 = vunpack.c.l.b16 %v690
        %v2878 = vunpack.c.h.b16 %v690
        %v2879 = vunpack.c.l.b16 %v691
        %v2880 = vunpack.c.l.b16 %v692
        %v2881 = vunpack.c.h.b16 %v692
        %v2882 = vunpack.c.l.b16 %v693
        %v2883 = vunpack.c.l.b16 %v694
        %v2884 = vunpack.c.h.b16 %v694
        %v2885 = vunpack.c.l.b16 %v695
        %v2886 = vunpack.c.l.b16 %v696
        %v2887 = vunpack.c.h.b16 %v696
        %v2888 = vunpack.c.l.b16 %v697
        %v2889 = vunpack.c.l.b16 %v698
        %v2890 = vunpack.c.h.b16 %v698
        %v2891 = vunpack.c.l.b16 %v699
        %v2892 = vunpack.c.l.b16 %v700
        %v2893 = vunpack.c.h.b16 %v700
        %v2894 = vunpack.c.l.b16 %v701
        %v2895 = vunpack.c.l.b16 %v702
        %v2896 = vunpack.c.h.b16 %v702
        %v2897 = vunpack.c.l.b16 %v703
        %v2898 = vunpack.c.l.b16 %v704
        %v2899 = vunpack.c.h.b16 %v704
        %v2900 = vunpack.c.l.b16 %v705
        %v2901 = vunpack.c.l.b16 %v706
        %v2902 = vunpack.c.h.b16 %v706
        %v2903 = vunpack.c.l.b16 %v707
        %v2904 = vunpack.c.l.b16 %v708
        %v2905 = vunpack.c.h.b16 %v708
        %v2906 = vunpack.c.l.b16 %v709
        %v2907 = vunpack.c.l.b16 %v710
        %v2908 = vunpack.c.h.b16 %v710
        %v2909 = vunpack.c.l.b16 %v711
        %v2910 = vunpack.c.l.b16 %v712
        %v2911 = vunpack.c.h.b16 %v712
        %v2912 = vunpack.c.l.b16 %v713
        %v2913 = vunpack.c.l.b16 %v714
        %v2914 = vunpack.c.h.b16 %v714
        %v2915 = vunpack.c.l.b16 %v715
        %v2916 = vunpack.c.l.b16 %v716
        %v2917 = vunpack.c.h.b16 %v716
        %v2918 = vunpack.c.l.b16 %v717
        %v2919 = vunpack.c.l.b16 %v718
        %v2920 = vunpack.c.h.b16 %v718
        %v2921 = vunpack.c.l.b16 %v719
        %v2922 = vunpack.c.l.b16 %v720
        %v2923 = vunpack.c.h.b16 %v720
        %v2924 = vunpack.c.l.b16 %v721
        %v2925 = vunpack.c.l.b16 %v722
        %v2926 = vunpack.c.h.b16 %v722
        %v2927 = vunpack.c.l.b16 %v723
        %v2928 = vunpack.c.l.b16 %v724
        %v2929 = vunpack.c.h.b16 %v724
        %v2930 = vunpack.c.l.b16 %v725
        %v2931 = vunpack.c.l.b16 %v726
        %v2932 = vunpack.c.h.b16 %v726
        %v2933 = vunpack.c.l.b16 %v727
        %v2934 = vunpack.c.l.b16 %v728
        %v2935 = vunpack.c.h.b16 %v728
        %v2936 = vunpack.c.l.b16 %v729
        %v2937 = vunpack.c.l.b16 %v730
        %v2938 = vunpack.c.h.b16 %v730
        %v2939 = vunpack.c.l.b16 %v731
        %v2940 = vunpack.c.l.b16 %v732
        %v2941 = vunpack.c.h.b16 %v732
        %v2942 = vunpack.c.l.b16 %v733
        %v2943 = vunpack.c.l.b16 %v734
        %v2944 = vunpack.c.h.b16 %v734
        %v2945 = vunpack.c.l.b16 %v735
        %v2946 = vunpack.c.l.b16 %v736
        %v2947 = vunpack.c.h.b16 %v736
        %v2948 = vunpack.c.l.b16 %v737
        %v2949 = vunpack.c.l.b16 %v738
        %v2950 = vunpack.c.h.b16 %v738
        %v2951 = vunpack.c.l.b16 %v739
        %v2952 = vunpack.c.l.b16 %v740
        %v2953 = vunpack.c.h.b16 %v740
        %v2954 = vunpack.c.l.b16 %v741
        %v2955 = vunpack.c.l.b16 %v742
        %v2956 = vunpack.c.h.b16 %v742
        %v2957 = vunpack.c.l.b16 %v743
        %v2958 = vunpack.c.l.b16 %v744
        %v2959 = vunpack.c.h.b16 %v744
        %v2960 = vunpack.c.l.b16 %v745
        %v2961 = vunpack.c.l.b16 %v746
        %v2962 = vunpack.c.h.b16 %v746
        %v2963 = vunpack.c.l.b16 %v747
        %v2964 = vunpack.c.l.b16 %v748
        %v2965 = vunpack.c.h.b16 %v748
        %v2966 = vunpack.c.l.b16 %v749
        %v2967 = vunpack.c.l.b16 %v750
        %v2968 = vunpack.c.h.b16 %v750
        %v2969 = vunpack.c.l.b16 %v751
        %v2970 = vunpack.c.l.b16 %v752
        %v2971 = vunpack.c.h.b16 %v752
        %v2972 = vunpack.c.l.b16 %v753
        %v2973 = vunpack.c.l.b16 %v754
        %v2974 = vunpack.c.h.b16 %v754
        %v2975 = vunpack.c.l.b16 %v755
        %v2976 = vunpack.c.l.b16 %v756
        %v2977 = vunpack.c.h.b16 %v756
        %v2978 = vunpack.c.l.b16 %v757
        %v2979 = vunpack.c.l.b16 %v758
        %v2980 = vunpack.c.h.b16 %v758
        %v2981 = vunpack.c.l.b16 %v759
        %v2982 = vunpack.c.l.b16 %v760
        %v2983 = vunpack.c.h.b16 %v760
        %v2984 = vunpack.c.l.b16 %v761
        %v2985 = vunpack.c.l.b16 %v762
        %v2986 = vunpack.c.h.b16 %v762
        %v2987 = vunpack.c.l.b16 %v763
        %v2988 = vunpack.c.l.b16 %v764
        %v2989 = vunpack.c.h.b16 %v764
        %v2990 = vunpack.c.l.b16 %v765
        %v2991 = vunpack.c.l.b16 %v766
        %v2992 = vunpack.c.h.b16 %v766
        %v2993 = vunpack.c.l.b16 %v767
        %v2994 = vunpack.c.l.b16 %v768
        %v2995 = vunpack.c.h.b16 %v768
        %v2996 = vunpack.c.l.b16 %v769
        %v2997 = vunpack.c.l.b16 %v770
        %v2998 = vunpack.c.h.b16 %v770
        %v2999 = vunpack.c.l.b16 %v771
        %v3000 = vunpack.c.l.b16 %v772
        %v3001 = vunpack.c.h.b16 %v772
        %v3002 = vunpack.c.l.b16 %v773
        %v3003 = vunpack.c.l.b16 %v774
        %v3004 = vunpack.c.h.b16 %v774
        %v3005 = vunpack.c.l.b16 %v775
        %v3006 = vunpack.c.l.b16 %v776
        %v3007 = vunpack.c.h.b16 %v776
        %v3008 = vunpack.c.l.b16 %v777
        %v3009 = vunpack.c.l.b16 %v778
        %v3010 = vunpack.c.h.b16 %v778
        %v3011 = vunpack.c.l.b16 %v779
        %v3012 = vunpack.c.l.b16 %v780
        %v3013 = vunpack.c.h.b16 %v780
        %v3014 = vunpack.c.l.b16 %v781
        %v3015 = vunpack.c.l.b16 %v782
        %v3016 = vunpack.c.h.b16 %v782
        %v3017 = vunpack.c.l.b16 %v783
        %v3018 = vunpack.c.l.b16 %v784
        %v3019 = vunpack.c.h.b16 %v784
        %v3020 = vunpack.c.l.b16 %v785
        %v3021 = vunpack.c.l.b16 %v786
        %v3022 = vunpack.c.h.b16 %v786
        %v3023 = vunpack.c.l.b16 %v787
        %v3024 = vunpack.c.l.b16 %v788
        %v3025 = vunpack.c.h.b16 %v788
        %v3026 = vunpack.c.l.b16 %v789
        %v3027 = vunpack.c.l.b16 %v790
        %v3028 = vunpack.c.h.b16 %v790
        %v3029 = vunpack.c.l.b16 %v791
        %v3030 = vunpack.c.l.b16 %v792
        %v3031 = vunpack.c.h.b16 %v792
        %v3032 = vunpack.c.l.b16 %v793
        %v3033 = vunpack.c.l.b16 %v794
        %v3034 = vunpack.c.h.b16 %v794
        %v3035 = vunpack.c.l.b16 %v795
        %v3036 = vunpack.c.l.b16 %v796
        %v3037 = vunpack.c.h.b16 %v796
        %v3038 = vunpack.c.l.b16 %v797
        %v3039 = vunpack.c.l.b16 %v798
        %v3040 = vunpack.c.h.b16 %v798
        %v3041 = vunpack.c.l.b16 %v799
        %v3042 = vunpack.c.l.b16 %v800
        %v3043 = vunpack.c.h.b16 %v800
        %v3044 = vunpack.c.l.b16 %v801
        %v3045 = vunpack.c.l.b16 %v802
        %v3046 = vunpack.c.h.b16 %v802
        %v3047 = vunpack.c.l.b16 %v803
        %v3048 = vunpack.c.l.b16 %v804
        %v3049 = vunpack.c.h.b16 %v804
        %v3050 = vunpack.c.l.b16 %v805
        %v3051 = vunpack.c.l.b16 %v806
        %v3052 = vunpack.c.h.b16 %v806
        %v3053 = vunpack.c.l.b16 %v807
        %v3054 = vunpack.c.l.b16 %v808
        %v3055 = vunpack.c.h.b16 %v808
        %v3056 = vunpack.c.l.b16 %v809
        %v3057 = vunpack.c.l.b16 %v810
        %v3058 = vunpack.c.h.b16 %v810
        %v3059 = vunpack.c.l.b16 %v811
        %v3060 = vunpack.c.l.b16 %v812
        %v3061 = vunpack.c.h.b16 %v812
        %v3062 = vunpack.c.l.b16 %v813
        %v3063 = vunpack.c.l.b16 %v814
        %v3064 = vunpack.c.h.b16 %v814
        %v3065 = vunpack.c.l.b16 %v815
        %v3066 = vunpack.c.l.b16 %v816
        %v3067 = vunpack.c.h.b16 %v816
        %v3068 = vunpack.c.l.b16 %v817
        %v3069 = vunpack.c.l.b16 %v818
        %v3070 = vunpack.c.h.b16 %v818
        %v3071 = vunpack.c.l.b16 %v819
        %v3072 = vunpack.c.l.b16 %v820
        %v3073 = vunpack.c.h.b16 %v820
        %v3074 = vunpack.c.l.b16 %v821
        %v3075 = vunpack.c.l.b16 %v822
        %v3076 = vunpack.c.h.b16 %v822
        %v3077 = vunpack.c.l.b16 %v823
        %v3078 = vunpack.c.l.b16 %v824
        %v3079 = vunpack.c.h.b16 %v824
        %v3080 = vunpack.c.l.b16 %v825
        %v3081 = vunpack.c.l.b16 %v826
        %v3082 = vunpack.c.h.b16 %v826
        %v3083 = vunpack.c.l.b16 %v827
        %v3084 = vunpack.c.l.b16 %v828
        %v3085 = vunpack.c.h.b16 %v828
        %v3086 = vunpack.c.l.b16 %v829
        %v3087 = vunpack.c.l.b16 %v830
        %v3088 = vunpack.c.h.b16 %v830
        %v3089 = vunpack.c.l.b16 %v831
        %v3090 = vunpack.c.l.b16 %v832
        %v3091 = vunpack.c.h.b16 %v832
        %v3092 = vunpack.c.l.b16 %v833
        %v3093 = vunpack.c.l.b16 %v834
        %v3094 = vunpack.c.h.b16 %v834
        %v3095 = vunpack.c.l.b16 %v835
        %v3096 = vunpack.c.l.b16 %v836
        %v3097 = vunpack.c.h.b16 %v836
        %v3098 = vunpack.c.l.b16 %v837
        %v3099 = vunpack.c.l.b16 %v838
        %v3100 = vunpack.c.h.b16 %v838
        %v3101 = vunpack.c.l.b16 %v839
        %v3102 = vunpack.c.l.b16 %v840
        %v3103 = vunpack.c.h.b16 %v840
        %v3104 = vunpack.c.l.b16 %v841
        %v3105 = vunpack.c.l.b16 %v842
        %v3106 = vunpack.c.h.b16 %v842
        %v3107 = vunpack.c.l.b16 %v843
        %v3108 = vunpack.c.l.b16 %v844
        %v3109 = vunpack.c.h.b16 %v844
        %v3110 = vunpack.c.l.b16 %v845
        %v3111 = vunpack.c.l.b16 %v846
        %v3112 = vunpack.c.h.b16 %v846
        %v3113 = vunpack.c.l.b16 %v847
        %v3114 = vunpack.c.l.b16 %v848
        %v3115 = vunpack.c.h.b16 %v848
        %v3116 = vunpack.c.l.b16 %v849
        %v3117 = vunpack.c.l.b16 %v850
        %v3118 = vunpack.c.h.b16 %v850
        %v3119 = vunpack.c.l.b16 %v851
        %v3120 = vunpack.c.l.b16 %v852
        %v3121 = vunpack.c.h.b16 %v852
        %v3122 = vunpack.c.l.b16 %v853
        %v3123 = vunpack.c.l.b16 %v854
        %v3124 = vunpack.c.h.b16 %v854
        %v3125 = vunpack.c.l.b16 %v855
        %v3126 = vunpack.c.l.b16 %v856
        %v3127 = vunpack.c.h.b16 %v856
        %v3128 = vunpack.c.l.b16 %v857
        %v3129 = vunpack.c.l.b16 %v858
        %v3130 = vunpack.c.h.b16 %v858
        %v3131 = vunpack.c.l.b16 %v859
        %v3132 = vunpack.c.l.b16 %v860
        %v3133 = vunpack.c.h.b16 %v860
        %v3134 = vunpack.c.l.b16 %v861
        %v3135 = vunpack.c.l.b16 %v862
        %v3136 = vunpack.c.h.b16 %v862
        %v3137 = vunpack.c.l.b16 %v863
        %v3138 = vunpack.c.l.b16 %v864
        %v3139 = vunpack.c.h.b16 %v864
        %v3140 = vunpack.c.l.b16 %v865
        %v3141 = vunpack.c.l.b16 %v866
        %v3142 = vunpack.c.h.b16 %v866
        %v3143 = vunpack.c.l.b16 %v867
        %v3144 = vunpack.c.l.b16 %v868
        %v3145 = vunpack.c.h.b16 %v868
        %v3146 = vunpack.c.l.b16 %v869
        %v3147 = vunpack.c.l.b16 %v870
        %v3148 = vunpack.c.h.b16 %v870
        %v3149 = vunpack.c.l.b16 %v871
        %v3150 = vunpack.c.l.b16 %v872
        %v3151 = vunpack.c.h.b16 %v872
        %v3152 = vunpack.c.l.b16 %v873
        %v3153 = vunpack.c.l.b16 %v874
        %v3154 = vunpack.c.h.b16 %v874
        %v3155 = vunpack.c.l.b16 %v875
        %v3156 = vunpack.c.l.b16 %v876
        %v3157 = vunpack.c.h.b16 %v876
        %v3158 = vunpack.c.l.b16 %v877
        %v3159 = vunpack.c.l.b16 %v878
        %v3160 = vunpack.c.h.b16 %v878
        %v3161 = vunpack.c.l.b16 %v879
        %v3162 = vunpack.c.l.b16 %v880
        %v3163 = vunpack.c.h.b16 %v880
        %v3164 = vunpack.c.l.b16 %v881
        %v3165 = vunpack.c.l.b16 %v882
        %v3166 = vunpack.c.h.b16 %v882
        %v3167 = vunpack.c.l.b16 %v883
        %v3168 = vunpack.c.l.b16 %v884
        %v3169 = vunpack.c.h.b16 %v884
        %v3170 = vunpack.c.l.b16 %v885
        %v3171 = vunpack.c.l.b16 %v886
        %v3172 = vunpack.c.h.b16 %v886
        %v3173 = vunpack.c.l.b16 %v887
        %v3174 = vunpack.c.l.b16 %v888
        %v3175 = vunpack.c.h.b16 %v888
        %v3176 = vunpack.c.l.b16 %v889
        %v3177 = vunpack.c.l.b16 %v890
        %v3178 = vunpack.c.h.b16 %v890
        %v3179 = vunpack.c.l.b16 %v891
        %v3180 = vunpack.c.l.b16 %v892
        %v3181 = vunpack.c.h.b16 %v892
        %v3182 = vunpack.c.l.b16 %v893
        %v3183 = vunpack.c.l.b16 %v894
        %v3184 = vunpack.c.h.b16 %v894
        %v3185 = vunpack.c.l.b16 %v895
        %v3186 = vunpack.c.l.b16 %v896
        %v3187 = vunpack.c.h.b16 %v896
        %v3188 = vunpack.c.l.b16 %v897
        %v3189 = vunpack.c.l.b16 %v898
        %v3190 = vunpack.c.h.b16 %v898
        %v3191 = vunpack.c.l.b16 %v899
        %v3192 = vunpack.c.l.b16 %v900
        %v3193 = vunpack.c.h.b16 %v900
        %v3194 = vunpack.c.l.b16 %v901
        %v3195 = vunpack.c.l.b16 %v902
        %v3196 = vunpack.c.h.b16 %v902
        %v3197 = vunpack.c.l.b16 %v903
        %v3198 = vunpack.c.l.b16 %v904
        %v3199 = vunpack.c.h.b16 %v904
        %v3200 = vunpack.c.l.b16 %v905
        %v3201 = vunpack.c.l.b16 %v906
        %v3202 = vunpack.c.h.b16 %v906
        %v3203 = vunpack.c.l.b16 %v907
        %v3204 = vunpack.c.l.b16 %v908
        %v3205 = vunpack.c.h.b16 %v908
        %v3206 = vunpack.c.l.b16 %v909
        %v3207 = vunpack.c.l.b16 %v910
        %v3208 = vunpack.c.h.b16 %v910
        %v3209 = vunpack.c.l.b16 %v911
        %v3210 = vunpack.c.l.b16 %v912
        %v3211 = vunpack.c.h.b16 %v912
        %v3212 = vunpack.c.l.b16 %v913
        %v3213 = vunpack.c.l.b16 %v914
        %v3214 = vunpack.c.h.b16 %v914
        %v3215 = vunpack.c.l.b16 %v915
        %v3216 = vunpack.c.l.b16 %v916
        %v3217 = vunpack.c.h.b16 %v916
        %v3218 = vunpack.c.l.b16 %v917
        %v3219 = vunpack.c.l.b16 %v918
        %v3220 = vunpack.c.h.b16 %v918
        %v3221 = vunpack.c.l.b16 %v919
        %v3222 = vunpack.c.l.b16 %v920
        %v3223 = vunpack.c.h.b16 %v920
        %v3224 = vunpack.c.l.b16 %v921
        %v3225 = vunpack.c.l.b16 %v922
        %v3226 = vunpack.c.h.b16 %v922
        %v3227 = vunpack.c.l.b16 %v923
        %v3228 = vunpack.c.l.b16 %v924
        %v3229 = vunpack.c.h.b16 %v924
        %v3230 = vunpack.c.l.b16 %v925
        %v3231 = vunpack.c.l.b16 %v926
        %v3232 = vunpack.c.h.b16 %v926
        %v3233 = vunpack.c.l.b16 %v927
        %v3234 = vunpack.c.l.b16 %v928
        %v3235 = vunpack.c.h.b16 %v928
        %v3236 = vunpack.c.l.b16 %v929
        %v3237 = vunpack.c.l.b16 %v930
        %v3238 = vunpack.c.h.b16 %v930
        %v3239 = vunpack.c.l.b16 %v931
        %v3240 = vunpack.c.l.b16 %v932
        %v3241 = vunpack.c.h.b16 %v932
        %v3242 = vunpack.c.l.b16 %v933
        %v3243 = vunpack.c.l.b16 %v934
        %v3244 = vunpack.c.h.b16 %v934
        %v3245 = vunpack.c.l.b16 %v935
        %v3246 = vunpack.c.l.b16 %v936
        %v3247 = vunpack.c.h.b16 %v936
        %v3248 = vunpack.c.l.b16 %v937
        %v3249 = vunpack.c.l.b16 %v938
        %v3250 = vunpack.c.h.b16 %v938
        %v3251 = vunpack.c.l.b16 %v939
        %v3252 = vunpack.c.l.b16 %v940
        %v3253 = vunpack.c.h.b16 %v940
        %v3254 = vunpack.c.l.b16 %v941
        %v3255 = vunpack.c.l.b16 %v942
        %v3256 = vunpack.c.h.b16 %v942
        %v3257 = vunpack.c.l.b16 %v943
        %v3258 = vunpack.c.l.b16 %v944
        %v3259 = vunpack.c.h.b16 %v944
        %v3260 = vunpack.c.l.b16 %v945
        %v3261 = vunpack.c.l.b16 %v946
        %v3262 = vunpack.c.h.b16 %v946
        %v3263 = vunpack.c.l.b16 %v947
        %v3264 = vunpack.c.l.b16 %v948
        %v3265 = vunpack.c.h.b16 %v948
        %v3266 = vunpack.c.l.b16 %v949
        %v3267 = vunpack.c.l.b16 %v950
        %v3268 = vunpack.c.h.b16 %v950
        %v3269 = vunpack.c.l.b16 %v951
        %v3270 = vunpack.c.l.b16 %v952
        %v3271 = vunpack.c.h.b16 %v952
        %v3272 = vunpack.c.l.b16 %v953
        %v3273 = vunpack.c.l.b16 %v954
        %v3274 = vunpack.c.h.b16 %v954
        %v3275 = vunpack.c.l.b16 %v955
        %v3276 = vunpack.c.l.b16 %v956
        %v3277 = vunpack.c.h.b16 %v956
        %v3278 = vunpack.c.l.b16 %v957
        %v3279 = vunpack.c.l.b16 %v958
        %v3280 = vunpack.c.h.b16 %v958
        %v3281 = vunpack.c.l.b16 %v959
        %v3282 = vunpack.c.l.b16 %v960
        %v3283 = vunpack.c.h.b16 %v960
        %v3284 = vunpack.c.l.b16 %v961
        %v3285 = vunpack.c.l.b16 %v962
        %v3286 = vunpack.c.h.b16 %v962
        %v3287 = vunpack.c.l.b16 %v963
        %v3288 = vunpack.c.l.b16 %v964
        %v3289 = vunpack.c.h.b16 %v964
        %v3290 = vunpack.c.l.b16 %v965
        %v3291 = vunpack.c.l.b16 %v966
        %v3292 = vunpack.c.h.b16 %v966
        %v3293 = vunpack.c.l.b16 %v967
        %v3294 = vunpack.c.l.b16 %v968
        %v3295 = vunpack.c.h.b16 %v968
        %v3296 = vunpack.c.l.b16 %v969
        %v3297 = vunpack.c.l.b16 %v970
        %v3298 = vunpack.c.h.b16 %v970
        %v3299 = vunpack.c.l.b16 %v971
        %v3300 = vunpack.c.l.b16 %v972
        %v3301 = vunpack.c.h.b16 %v972
        %v3302 = vunpack.c.l.b16 %v973
        %v3303 = vunpack.c.l.b16 %v974
        %v3304 = vunpack.c.h.b16 %v974
        %v3305 = vunpack.c.l.b16 %v975
        %v3306 = vunpack.c.l.b16 %v976
        %v3307 = vunpack.c.h.b16 %v976
        %v3308 = vunpack.c.l.b16 %v977
        %v3309 = vunpack.c.l.b16 %v978
        %v3310 = vunpack.c.h.b16 %v978
        %v3311 = vunpack.c.l.b16 %v979
        %v3312 = vunpack.c.l.b16 %v980
        %v3313 = vunpack.c.h.b16 %v980
        %v3314 = vunpack.c.l.b16 %v981
        %v3315 = vunpack.c.l.b16 %v982
        %v3316 = vunpack.c.h.b16 %v982
        %v3317 = vunpack.c.l.b16 %v983
        %v3318 = vunpack.c.l.b16 %v984
        %v3319 = vunpack.c.h.b16 %v984
        %v3320 = vunpack.c.l.b16 %v985
        %v3321 = vunpack.c.l.b16 %v986
        %v3322 = vunpack.c.h.b16 %v986
        %v3323 = vunpack.c.l.b16 %v987
        %v3324 = vunpack.c.l.b16 %v988
        %v3325 = vunpack.c.h.b16 %v988
        %v3326 = vunpack.c.l.b16 %v989
        %v3327 = vunpack.c.l.b16 %v990
        %v3328 = vunpack.c.h.b16 %v990
        %v3329 = vunpack.c.l.b16 %v991
        %v3330 = vunpack.c.l.b16 %v992
        %v3331 = vunpack.c.h.b16 %v992
        %v3332 = vunpack.c.l.b16 %v993
        %v3333 = vunpack.c.l.b16 %v994
        %v3334 = vunpack.c.h.b16 %v994
        %v3335 = vunpack.c.l.b16 %v995
        %v3336 = vunpack.c.l.b16 %v996
        %v3337 = vunpack.c.h.b16 %v996
        %v3338 = vunpack.c.l.b16 %v997
        %v3339 = vunpack.c.l.b16 %v998
        %v3340 = vunpack.c.h.b16 %v998
        %v3341 = vunpack.c.l.b16 %v999
        %v3342 = vunpack.c.l.b16 %v1000
        %v3343 = vunpack.c.h.b16 %v1000
        %v3344 = vunpack.c.l.b16 %v1001
        %v3345 = vunpack.c.l.b16 %v1002
        %v3346 = vunpack.c.h.b16 %v1002
        %v3347 = vunpack.c.l.b16 %v1003
        %v3348 = vunpack.c.l.b16 %v1004
        %v3349 = vunpack.c.h.b16 %v1004
        %v3350 = vunpack.c.l.b16 %v1005
        %v3351 = vunpack.c.l.b16 %v1006
        %v3352 = vunpack.c.h.b16 %v1006
        %v3353 = vunpack.c.l.b16 %v1007
        %v3354 = vunpack.c.l.b16 %v1008
        %v3355 = vunpack.c.h.b16 %v1008
        %v3356 = vunpack.c.l.b16 %v1009
        %v3357 = vunpack.c.l.b16 %v1010
        %v3358 = vunpack.c.h.b16 %v1010
        %v3359 = vunpack.c.l.b16 %v1011
        %v3360 = vunpack.c.l.b16 %v1012
        %v3361 = vunpack.c.h.b16 %v1012
        %v3362 = vunpack.c.l.b16 %v1013
        %v3363 = vunpack.c.l.b16 %v1014
        %v3364 = vunpack.c.h.b16 %v1014
        %v3365 = vunpack.c.l.b16 %v1015
        %v3366 = vunpack.c.l.b16 %v1016
        %v3367 = vunpack.c.h.b16 %v1016
        %v3368 = vunpack.c.l.b16 %v1017
        %v3369 = vunpack.c.l.b16 %v1018
        %v3370 = vunpack.c.h.b16 %v1018
        %v3371 = vunpack.c.l.b16 %v1019
        %v3372 = vunpack.c.l.b16 %v1020
        %v3373 = vunpack.c.h.b16 %v1020
        %v3374 = vunpack.c.l.b16 %v1021
        %v3375 = vunpack.c.l.b16 %v1022
        %v3376 = vunpack.c.h.b16 %v1022
        %v3377 = vunpack.c.l.b16 %v1023
        %v3378 = vunpack.c.l.b16 %v1024
        %v3379 = vunpack.c.h.b16 %v1024
        %v3380 = vunpack.c.l.b16 %v1025
        %v3381 = vunpack.c.l.b16 %v1026
        %v3382 = vunpack.c.h.b16 %v1026
        %v3383 = vunpack.c.l.b16 %v1027
        %v3384 = vunpack.c.l.b16 %v1028
        %v3385 = vunpack.c.h.b16 %v1028
        %v3386 = vunpack.c.l.b16 %v1029
        %v3387 = vunpack.c.l.b16 %v1030
        %v3388 = vunpack.c.h.b16 %v1030
        %v3389 = vunpack.c.l.b16 %v1031
        %v3390 = vunpack.c.l.b16 %v1032
        %v3391 = vunpack.c.h.b16 %v1032
        %v3392 = vunpack.c.l.b16 %v1033
        %v3393 = vunpack.c.l.b16 %v1034
        %v3394 = vunpack.c.h.b16 %v1034
        %v3395 = vunpack.c.l.b16 %v1035
        %v3396 = vunpack.c.l.b16 %v1036
        %v3397 = vunpack.c.h.b16 %v1036
        %v3398 = vunpack.c.l.b16 %v1037
        %v3399 = vunpack.c.l.b16 %v1038
        %v3400 = vunpack.c.h.b16 %v1038
        %v3401 = vunpack.c.l.b16 %v1039
        %v3402 = vunpack.c.l.b16 %v1040
        %v3403 = vunpack.c.h.b16 %v1040
        %v3404 = vunpack.c.l.b16 %v1041
        %v3405 = vunpack.c.l.b16 %v1042
        %v3406 = vunpack.c.h.b16 %v1042
        %v3407 = vunpack.c.l.b16 %v1043
        %v3408 = vunpack.c.l.b16 %v1044
        %v3409 = vunpack.c.h.b16 %v1044
        %v3410 = vunpack.c.l.b16 %v1045
        %v3411 = vunpack.c.l.b16 %v1046
        %v3412 = vunpack.c.h.b16 %v1046
        %v3413 = vunpack.c.l.b16 %v1047
        %v3414 = vunpack.c.l.b16 %v1048
        %v3415 = vunpack.c.h.b16 %v1048
        %v3416 = vunpack.c.l.b16 %v1049
        %v3417 = vunpack.c.l.b16 %v1050
        %v3418 = vunpack.c.h.b16 %v1050
        %v3419 = vunpack.c.l.b16 %v1051
        %v3420 = vunpack.c.l.b16 %v1052
        %v3421 = vunpack.c.h.b16 %v1052
        %v3422 = vunpack.c.l.b16 %v1053
        %v3423 = vunpack.c.l.b16 %v1054
        %v3424 = vunpack.c.h.b16 %v1054
        %v3425 = vunpack.c.l.b16 %v1055
        %v3426 = vunpack.c.l.b16 %v1056
        %v3427 = vunpack.c.h.b16 %v1056
        %v3428 = vunpack.c.l.b16 %v1057
        %v3429 = vunpack.c.l.b16 %v1058
        %v3430 = vunpack.c.h.b16 %v1058
        %v3431 = vunpack.c.l.b16 %v1059
        %v3432 = vunpack.c.l.b16 %v1060
        %v3433 = vunpack.c.h.b16 %v1060
        %v3434 = vunpack.c.l.b16 %v1061
        %v3435 = vunpack.c.l.b16 %v1062
        %v3436 = vunpack.c.h.b16 %v1062
        %v3437 = vunpack.c.l.b16 %v1063
        %v3438 = vunpack.c.l.b16 %v1064
        %v3439 = vunpack.c.h.b16 %v1064
        %v3440 = vunpack.c.l.b16 %v1065
        %v3441 = vunpack.c.l.b16 %v1066
        %v3442 = vunpack.c.h.b16 %v1066
        %v3443 = vunpack.c.l.b16 %v1067
        %v3444 = vunpack.c.l.b16 %v1068
        %v3445 = vunpack.c.h.b16 %v1068
        %v3446 = vunpack.c.l.b16 %v1069
        %v3447 = vunpack.c.l.b16 %v1070
        %v3448 = vunpack.c.h.b16 %v1070
        %v3449 = vunpack.c.l.b16 %v1071
        %v3450 = vunpack.c.l.b16 %v1072
        %v3451 = vunpack.c.h.b16 %v1072
        %v3452 = vunpack.c.l.b16 %v1073
        %v3453 = vunpack.c.l.b16 %v1074
        %v3454 = vunpack.c.h.b16 %v1074
        %v3455 = vunpack.c.l.b16 %v1075
        %v3456 = vpack.c.b16 %v2307, %v2304
        %v3457 = vpack.c.b16 %v2308, %v2305
        %v3458 = vpack.c.b16 %v2309, %v2306
        %v3459 = vpack.c.b16 %v2313, %v2310
        %v3460 = vpack.c.b16 %v2314, %v2311
        %v3461 = vpack.c.b16 %v2315, %v2312
        %v3462 = vpack.c.b16 %v2319, %v2316
        %v3463 = vpack.c.b16 %v2320, %v2317
        %v3464 = vpack.c.b16 %v2321, %v2318
        %v3465 = vpack.c.b16 %v2325, %v2322
        %v3466 = vpack.c.b16 %v2326, %v2323
        %v3467 = vpack.c.b16 %v2327, %v2324
        %v3468 = vpack.c.b16 %v2331, %v2328
        %v3469 = vpack.c.b16 %v2332, %v2329
        %v3470 = vpack.c.b16 %v2333, %v2330
        %v3471 = vpack.c.b16 %v2337, %v2334
        %v3472 = vpack.c.b16 %v2338, %v2335
        %v3473 = vpack.c.b16 %v2339, %v2336
        %v3474 = vpack.c.b16 %v2343, %v2340
        %v3475 = vpack.c.b16 %v2344, %v2341
        %v3476 = vpack.c.b16 %v2345, %v2342
        %v3477 = vpack.c.b16 %v2349, %v2346
        %v3478 = vpack.c.b16 %v2350, %v2347
        %v3479 = vpack.c.b16 %v2351, %v2348
        %v3480 = vpack.c.b16 %v2355, %v2352
        %v3481 = vpack.c.b16 %v2356, %v2353
        %v3482 = vpack.c.b16 %v2357, %v2354
        %v3483 = vpack.c.b16 %v2361, %v2358
        %v3484 = vpack.c.b16 %v2362, %v2359
        %v3485 = vpack.c.b16 %v2363, %v2360
        %v3486 = vpack.c.b16 %v2367, %v2364
        %v3487 = vpack.c.b16 %v2368, %v2365
        %v3488 = vpack.c.b16 %v2369, %v2366
        %v3489 = vpack.c.b16 %v2373, %v2370
        %v3490 = vpack.c.b16 %v2374, %v2371
        %v3491 = vpack.c.b16 %v2375, %v2372
        %v3492 = vpack.c.b16 %v2379, %v2376
        %v3493 = vpack.c.b16 %v2380, %v2377
        %v3494 = vpack.c.b16 %v2381, %v2378
        %v3495 = vpack.c.b16 %v2385, %v2382
        %v3496 = vpack.c.b16 %v2386, %v2383
        %v3497 = vpack.c.b16 %v2387, %v2384
        %v3498 = vpack.c.b16 %v2391, %v2388
        %v3499 = vpack.c.b16 %v2392, %v2389
        %v3500 = vpack.c.b16 %v2393, %v2390
        %v3501 = vpack.c.b16 %v2397, %v2394
        %v3502 = vpack.c.b16 %v2398, %v2395
        %v3503 = vpack.c.b16 %v2399, %v2396
        %v3504 = vpack.c.b16 %v2403, %v2400
        %v3505 = vpack.c.b16 %v2404, %v2401
        %v3506 = vpack.c.b16 %v2405, %v2402
        %v3507 = vpack.c.b16 %v2409, %v2406
        %v3508 = vpack.c.b16 %v2410, %v2407
        %v3509 = vpack.c.b16 %v2411, %v2408
        %v3510 = vpack.c.b16 %v2415, %v2412
        %v3511 = vpack.c.b16 %v2416, %v2413
        %v3512 = vpack.c.b16 %v2417, %v2414
        %v3513 = vpack.c.b16 %v2421, %v2418
        %v3514 = vpack.c.b16 %v2422, %v2419
        %v3515 = vpack.c.b16 %v2423, %v2420
        %v3516 = vpack.c.b16 %v2427, %v2424
        %v3517 = vpack.c.b16 %v2428, %v2425
        %v3518 = vpack.c.b16 %v2429, %v2426
        %v3519 = vpack.c.b16 %v2433, %v2430
        %v3520 = vpack.c.b16 %v2434, %v2431
        %v3521 = vpack.c.b16 %v2435, %v2432
        %v3522 = vpack.c.b16 %v2439, %v2436
        %v3523 = vpack.c.b16 %v2440, %v2437
        %v3524 = vpack.c.b16 %v2441, %v2438
        %v3525 = vpack.c.b16 %v2445, %v2442
        %v3526 = vpack.c.b16 %v2446, %v2443
        %v3527 = vpack.c.b16 %v2447, %v2444
        %v3528 = vpack.c.b16 %v2451, %v2448
        %v3529 = vpack.c.b16 %v2452, %v2449
        %v3530 = vpack.c.b16 %v2453, %v2450
        %v3531 = vpack.c.b16 %v2457, %v2454
        %v3532 = vpack.c.b16 %v2458, %v2455
        %v3533 = vpack.c.b16 %v2459, %v2456
        %v3534 = vpack.c.b16 %v2463, %v2460
        %v3535 = vpack.c.b16 %v2464, %v2461
        %v3536 = vpack.c.b16 %v2465, %v2462
        %v3537 = vpack.c.b16 %v2469, %v2466
        %v3538 = vpack.c.b16 %v2470, %v2467
        %v3539 = vpack.c.b16 %v2471, %v2468
        %v3540 = vpack.c.b16 %v2475, %v2472
        %v3541 = vpack.c.b16 %v2476, %v2473
        %v3542 = vpack.c.b16 %v2477, %v2474
        %v3543 = vpack.c.b16 %v2481, %v2478
        %v3544 = vpack.c.b16 %v2482, %v2479
        %v3545 = vpack.c.b16 %v2483, %v2480
        %v3546 = vpack.c.b16 %v2487, %v2484
        %v3547 = vpack.c.b16 %v2488, %v2485
        %v3548 = vpack.c.b16 %v2489, %v2486
        %v3549 = vpack.c.b16 %v2493, %v2490
        %v3550 = vpack.c.b16 %v2494, %v2491
        %v3551 = vpack.c.b16 %v2495, %v2492
        %v3552 = vpack.c.b16 %v2499, %v2496
        %v3553 = vpack.c.b16 %v2500, %v2497
        %v3554 = vpack.c.b16 %v2501, %v2498
        %v3555 = vpack.c.b16 %v2505, %v2502
        %v3556 = vpack.c.b16 %v2506, %v2503
        %v3557 = vpack.c.b16 %v2507, %v2504
        %v3558 = vpack.c.b16 %v2511, %v2508
        %v3559 = vpack.c.b16 %v2512, %v2509
        %v3560 = vpack.c.b16 %v2513, %v2510
        %v3561 = vpack.c.b16 %v2517, %v2514
        %v3562 = vpack.c.b16 %v2518, %v2515
        %v3563 = vpack.c.b16 %v2519, %v2516
        %v3564 = vpack.c.b16 %v2523, %v2520
        %v3565 = vpack.c.b16 %v2524, %v2521
        %v3566 = vpack.c.b16 %v2525, %v2522
        %v3567 = vpack.c.b16 %v2529, %v2526
        %v3568 = vpack.c.b16 %v2530, %v2527
        %v3569 = vpack.c.b16 %v2531, %v2528
        %v3570 = vpack.c.b16 %v2535, %v2532
        %v3571 = vpack.c.b16 %v2536, %v2533
        %v3572 = vpack.c.b16 %v2537, %v2534
        %v3573 = vpack.c.b16 %v2541, %v2538
        %v3574 = vpack.c.b16 %v2542, %v2539
        %v3575 = vpack.c.b16 %v2543, %v2540
        %v3576 = vpack.c.b16 %v2547, %v2544
        %v3577 = vpack.c.b16 %v2548, %v2545
        %v3578 = vpack.c.b16 %v2549, %v2546
        %v3579 = vpack.c.b16 %v2553, %v2550
        %v3580 = vpack.c.b16 %v2554, %v2551
        %v3581 = vpack.c.b16 %v2555, %v2552
        %v3582 = vpack.c.b16 %v2559, %v2556
        %v3583 = vpack.c.b16 %v2560, %v2557
        %v3584 = vpack.c.b16 %v2561, %v2558
        %v3585 = vpack.c.b16 %v2565, %v2562
        %v3586 = vpack.c.b16 %v2566, %v2563
        %v3587 = vpack.c.b16 %v2567, %v2564
        %v3588 = vpack.c.b16 %v2571, %v2568
        %v3589 = vpack.c.b16 %v2572, %v2569
        %v3590 = vpack.c.b16 %v2573, %v2570
        %v3591 = vpack.c.b16 %v2577, %v2574
        %v3592 = vpack.c.b16 %v2578, %v2575
        %v3593 = vpack.c.b16 %v2579, %v2576
        %v3594 = vpack.c.b16 %v2583, %v2580
        %v3595 = vpack.c.b16 %v2584, %v2581
        %v3596 = vpack.c.b16 %v2585, %v2582
        %v3597 = vpack.c.b16 %v2589, %v2586
        %v3598 = vpack.c.b16 %v2590, %v2587
        %v3599 = vpack.c.b16 %v2591, %v2588
        %v3600 = vpack.c.b16 %v2595, %v2592
        %v3601 = vpack.c.b16 %v2596, %v2593
        %v3602 = vpack.c.b16 %v2597, %v2594
        %v3603 = vpack.c.b16 %v2601, %v2598
        %v3604 = vpack.c.b16 %v2602, %v2599
        %v3605 = vpack.c.b16 %v2603, %v2600
        %v3606 = vpack.c.b16 %v2607, %v2604
        %v3607 = vpack.c.b16 %v2608, %v2605
        %v3608 = vpack.c.b16 %v2609, %v2606
        %v3609 = vpack.c.b16 %v2613, %v2610
        %v3610 = vpack.c.b16 %v2614, %v2611
        %v3611 = vpack.c.b16 %v2615, %v2612
        %v3612 = vpack.c.b16 %v2619, %v2616
        %v3613 = vpack.c.b16 %v2620, %v2617
        %v3614 = vpack.c.b16 %v2621, %v2618
        %v3615 = vpack.c.b16 %v2625, %v2622
        %v3616 = vpack.c.b16 %v2626, %v2623
        %v3617 = vpack.c.b16 %v2627, %v2624
        %v3618 = vpack.c.b16 %v2631, %v2628
        %v3619 = vpack.c.b16 %v2632, %v2629
        %v3620 = vpack.c.b16 %v2633, %v2630
        %v3621 = vpack.c.b16 %v2637, %v2634
        %v3622 = vpack.c.b16 %v2638, %v2635
        %v3623 = vpack.c.b16 %v2639, %v2636
        %v3624 = vpack.c.b16 %v2643, %v2640
        %v3625 = vpack.c.b16 %v2644, %v2641
        %v3626 = vpack.c.b16 %v2645, %v2642
        %v3627 = vpack.c.b16 %v2649, %v2646
        %v3628 = vpack.c.b16 %v2650, %v2647
        %v3629 = vpack.c.b16 %v2651, %v2648
        %v3630 = vpack.c.b16 %v2655, %v2652
        %v3631 = vpack.c.b16 %v2656, %v2653
        %v3632 = vpack.c.b16 %v2657, %v2654
        %v3633 = vpack.c.b16 %v2661, %v2658
        %v3634 = vpack.c.b16 %v2662, %v2659
        %v3635 = vpack.c.b16 %v2663, %v2660
        %v3636 = vpack.c.b16 %v2667, %v2664
        %v3637 = vpack.c.b16 %v2668, %v2665
        %v3638 = vpack.c.b16 %v2669, %v2666
        %v3639 = vpack.c.b16 %v2673, %v2670
        %v3640 = vpack.c.b16 %v2674, %v2671
        %v3641 = vpack.c.b16 %v2675, %v2672
        %v3642 = vpack.c.b16 %v2679, %v2676
        %v3643 = vpack.c.b16 %v2680, %v2677
        %v3644 = vpack.c.b16 %v2681, %v2678
        %v3645 = vpack.c.b16 %v2685, %v2682
        %v3646 = vpack.c.b16 %v2686, %v2683
        %v3647 = vpack.c.b16 %v2687, %v2684
        %v3648 = vpack.c.b16 %v2691, %v2688
        %v3649 = vpack.c.b16 %v2692, %v2689
        %v3650 = vpack.c.b16 %v2693, %v2690
        %v3651 = vpack.c.b16 %v2697, %v2694
        %v3652 = vpack.c.b16 %v2698, %v2695
        %v3653 = vpack.c.b16 %v2699, %v2696
        %v3654 = vpack.c.b16 %v2703, %v2700
        %v3655 = vpack.c.b16 %v2704, %v2701
        %v3656 = vpack.c.b16 %v2705, %v2702
        %v3657 = vpack.c.b16 %v2709, %v2706
        %v3658 = vpack.c.b16 %v2710, %v2707
        %v3659 = vpack.c.b16 %v2711, %v2708
        %v3660 = vpack.c.b16 %v2715, %v2712
        %v3661 = vpack.c.b16 %v2716, %v2713
        %v3662 = vpack.c.b16 %v2717, %v2714
        %v3663 = vpack.c.b16 %v2721, %v2718
        %v3664 = vpack.c.b16 %v2722, %v2719
        %v3665 = vpack.c.b16 %v2723, %v2720
        %v3666 = vpack.c.b16 %v2727, %v2724
        %v3667 = vpack.c.b16 %v2728, %v2725
        %v3668 = vpack.c.b16 %v2729, %v2726
        %v3669 = vpack.c.b16 %v2733, %v2730
        %v3670 = vpack.c.b16 %v2734, %v2731
        %v3671 = vpack.c.b16 %v2735, %v2732
        %v3672 = vpack.c.b16 %v2739, %v2736
        %v3673 = vpack.c.b16 %v2740, %v2737
        %v3674 = vpack.c.b16 %v2741, %v2738
        %v3675 = vpack.c.b16 %v2745, %v2742
        %v3676 = vpack.c.b16 %v2746, %v2743
        %v3677 = vpack.c.b16 %v2747, %v2744
        %v3678 = vpack.c.b16 %v2751, %v2748
        %v3679 = vpack.c.b16 %v2752, %v2749
        %v3680 = vpack.c.b16 %v2753, %v2750
        %v3681 = vpack.c.b16 %v2757, %v2754
        %v3682 = vpack.c.b16 %v2758, %v2755
        %v3683 = vpack.c.b16 %v2759, %v2756
        %v3684 = vpack.c.b16 %v2763, %v2760
        %v3685 = vpack.c.b16 %v2764, %v2761
        %v3686 = vpack.c.b16 %v2765, %v2762
        %v3687 = vpack.c.b16 %v2769, %v2766
        %v3688 = vpack.c.b16 %v2770, %v2767
        %v3689 = vpack.c.b16 %v2771, %v2768
        %v3690 = vpack.c.b16 %v2775, %v2772
        %v3691 = vpack.c.b16 %v2776, %v2773
        %v3692 = vpack.c.b16 %v2777, %v2774
        %v3693 = vpack.c.b16 %v2781, %v2778
        %v3694 = vpack.c.b16 %v2782, %v2779
        %v3695 = vpack.c.b16 %v2783, %v2780
        %v3696 = vpack.c.b16 %v2787, %v2784
        %v3697 = vpack.c.b16 %v2788, %v2785
        %v3698 = vpack.c.b16 %v2789, %v2786
        %v3699 = vpack.c.b16 %v2793, %v2790
        %v3700 = vpack.c.b16 %v2794, %v2791
        %v3701 = vpack.c.b16 %v2795, %v2792
        %v3702 = vpack.c.b16 %v2799, %v2796
        %v3703 = vpack.c.b16 %v2800, %v2797
        %v3704 = vpack.c.b16 %v2801, %v2798
        %v3705 = vpack.c.b16 %v2805, %v2802
        %v3706 = vpack.c.b16 %v2806, %v2803
        %v3707 = vpack.c.b16 %v2807, %v2804
        %v3708 = vpack.c.b16 %v2811, %v2808
        %v3709 = vpack.c.b16 %v2812, %v2809
        %v3710 = vpack.c.b16 %v2813, %v2810
        %v3711 = vpack.c.b16 %v2817, %v2814
        %v3712 = vpack.c.b16 %v2818, %v2815
        %v3713 = vpack.c.b16 %v2819, %v2816
        %v3714 = vpack.c.b16 %v2823, %v2820
        %v3715 = vpack.c.b16 %v2824, %v2821
        %v3716 = vpack.c.b16 %v2825, %v2822
        %v3717 = vpack.c.b16 %v2829, %v2826
        %v3718 = vpack.c.b16 %v2830, %v2827
        %v3719 = vpack.c.b16 %v2831, %v2828
        %v3720 = vpack.c.b16 %v2835, %v2832
        %v3721 = vpack.c.b16 %v2836, %v2833
        %v3722 = vpack.c.b16 %v2837, %v2834
        %v3723 = vpack.c.b16 %v2841, %v2838
        %v3724 = vpack.c.b16 %v2842, %v2839
        %v3725 = vpack.c.b16 %v2843, %v2840
        %v3726 = vpack.c.b16 %v2847, %v2844
        %v3727 = vpack.c.b16 %v2848, %v2845
        %v3728 = vpack.c.b16 %v2849, %v2846
        %v3729 = vpack.c.b16 %v2853, %v2850
        %v3730 = vpack.c.b16 %v2854, %v2851
        %v3731 = vpack.c.b16 %v2855, %v2852
        %v3732 = vpack.c.b16 %v2859, %v2856
        %v3733 = vpack.c.b16 %v2860, %v2857
        %v3734 = vpack.c.b16 %v2861, %v2858
        %v3735 = vpack.c.b16 %v2865, %v2862
        %v3736 = vpack.c.b16 %v2866, %v2863
        %v3737 = vpack.c.b16 %v2867, %v2864
        %v3738 = vpack.c.b16 %v2871, %v2868
        %v3739 = vpack.c.b16 %v2872, %v2869
        %v3740 = vpack.c.b16 %v2873, %v2870
        %v3741 = vpack.c.b16 %v2877, %v2874
        %v3742 = vpack.c.b16 %v2878, %v2875
        %v3743 = vpack.c.b16 %v2879, %v2876
        %v3744 = vpack.c.b16 %v2883, %v2880
        %v3745 = vpack.c.b16 %v2884, %v2881
        %v3746 = vpack.c.b16 %v2885, %v2882
        %v3747 = vpack.c.b16 %v2889, %v2886
        %v3748 = vpack.c.b16 %v2890, %v2887
        %v3749 = vpack.c.b16 %v2891, %v2888
        %v3750 = vpack.c.b16 %v2895, %v2892
        %v3751 = vpack.c.b16 %v2896, %v2893
        %v3752 = vpack.c.b16 %v2897, %v2894
        %v3753 = vpack.c.b16 %v2901, %v2898
        %v3754 = vpack.c.b16 %v2902, %v2899
        %v3755 = vpack.c.b16 %v2903, %v2900
        %v3756 = vpack.c.b16 %v2907, %v2904
        %v3757 = vpack.c.b16 %v2908, %v2905
        %v3758 = vpack.c.b16 %v2909, %v2906
        %v3759 = vpack.c.b16 %v2913, %v2910
        %v3760 = vpack.c.b16 %v2914, %v2911
        %v3761 = vpack.c.b16 %v2915, %v2912
        %v3762 = vpack.c.b16 %v2919, %v2916
        %v3763 = vpack.c.b16 %v2920, %v2917
        %v3764 = vpack.c.b16 %v2921, %v2918
        %v3765 = vpack.c.b16 %v2925, %v2922
        %v3766 = vpack.c.b16 %v2926, %v2923
        %v3767 = vpack.c.b16 %v2927, %v2924
        %v3768 = vpack.c.b16 %v2931, %v2928
        %v3769 = vpack.c.b16 %v2932, %v2929
        %v3770 = vpack.c.b16 %v2933, %v2930
        %v3771 = vpack.c.b16 %v2937, %v2934
        %v3772 = vpack.c.b16 %v2938, %v2935
        %v3773 = vpack.c.b16 %v2939, %v2936
        %v3774 = vpack.c.b16 %v2943, %v2940
        %v3775 = vpack.c.b16 %v2944, %v2941
        %v3776 = vpack.c.b16 %v2945, %v2942
        %v3777 = vpack.c.b16 %v2949, %v2946
        %v3778 = vpack.c.b16 %v2950, %v2947
        %v3779 = vpack.c.b16 %v2951, %v2948
        %v3780 = vpack.c.b16 %v2955, %v2952
        %v3781 = vpack.c.b16 %v2956, %v2953
        %v3782 = vpack.c.b16 %v2957, %v2954
        %v3783 = vpack.c.b16 %v2961, %v2958
        %v3784 = vpack.c.b16 %v2962, %v2959
        %v3785 = vpack.c.b16 %v2963, %v2960
        %v3786 = vpack.c.b16 %v2967, %v2964
        %v3787 = vpack.c.b16 %v2968, %v2965
        %v3788 = vpack.c.b16 %v2969, %v2966
        %v3789 = vpack.c.b16 %v2973, %v2970
        %v3790 = vpack.c.b16 %v2974, %v2971
        %v3791 = vpack.c.b16 %v2975, %v2972
        %v3792 = vpack.c.b16 %v2979, %v2976
        %v3793 = vpack.c.b16 %v2980, %v2977
        %v3794 = vpack.c.b16 %v2981, %v2978
        %v3795 = vpack.c.b16 %v2985, %v2982
        %v3796 = vpack.c.b16 %v2986, %v2983
        %v3797 = vpack.c.b16 %v2987, %v2984
        %v3798 = vpack.c.b16 %v2991, %v2988
        %v3799 = vpack.c.b16 %v2992, %v2989
        %v3800 = vpack.c.b16 %v2993, %v2990
        %v3801 = vpack.c.b16 %v2997, %v2994
        %v3802 = vpack.c.b16 %v2998, %v2995
        %v3803 = vpack.c.b16 %v2999, %v2996
        %v3804 = vpack.c.b16 %v3003, %v3000
        %v3805 = vpack.c.b16 %v3004, %v3001
        %v3806 = vpack.c.b16 %v3005, %v3002
        %v3807 = vpack.c.b16 %v3009, %v3006
        %v3808 = vpack.c.b16 %v3010, %v3007
        %v3809 = vpack.c.b16 %v3011, %v3008
        %v3810 = vpack.c.b16 %v3015, %v3012
        %v3811 = vpack.c.b16 %v3016, %v3013
        %v3812 = vpack.c.b16 %v3017, %v3014
        %v3813 = vpack.c.b16 %v3021, %v3018
        %v3814 = vpack.c.b16 %v3022, %v3019
        %v3815 = vpack.c.b16 %v3023, %v3020
        %v3816 = vpack.c.b16 %v3027, %v3024
        %v3817 = vpack.c.b16 %v3028, %v3025
        %v3818 = vpack.c.b16 %v3029, %v3026
        %v3819 = vpack.c.b16 %v3033, %v3030
        %v3820 = vpack.c.b16 %v3034, %v3031
        %v3821 = vpack.c.b16 %v3035, %v3032
        %v3822 = vpack.c.b16 %v3039, %v3036
        %v3823 = vpack.c.b16 %v3040, %v3037
        %v3824 = vpack.c.b16 %v3041, %v3038
        %v3825 = vpack.c.b16 %v3045, %v3042
        %v3826 = vpack.c.b16 %v3046, %v3043
        %v3827 = vpack.c.b16 %v3047, %v3044
        %v3828 = vpack.c.b16 %v3051, %v3048
        %v3829 = vpack.c.b16 %v3052, %v3049
        %v3830 = vpack.c.b16 %v3053, %v3050
        %v3831 = vpack.c.b16 %v3057, %v3054
        %v3832 = vpack.c.b16 %v3058, %v3055
        %v3833 = vpack.c.b16 %v3059, %v3056
        %v3834 = vpack.c.b16 %v3063, %v3060
        %v3835 = vpack.c.b16 %v3064, %v3061
        %v3836 = vpack.c.b16 %v3065, %v3062
        %v3837 = vpack.c.b16 %v3069, %v3066
        %v3838 = vpack.c.b16 %v3070, %v3067
        %v3839 = vpack.c.b16 %v3071, %v3068
        %v3840 = vpack.c.b16 %v3075, %v3072
        %v3841 = vpack.c.b16 %v3076, %v3073
        %v3842 = vpack.c.b16 %v3077, %v3074
        %v3843 = vpack.c.b16 %v3081, %v3078
        %v3844 = vpack.c.b16 %v3082, %v3079
        %v3845 = vpack.c.b16 %v3083, %v3080
        %v3846 = vpack.c.b16 %v3087, %v3084
        %v3847 = vpack.c.b16 %v3088, %v3085
        %v3848 = vpack.c.b16 %v3089, %v3086
        %v3849 = vpack.c.b16 %v3093, %v3090
        %v3850 = vpack.c.b16 %v3094, %v3091
        %v3851 = vpack.c.b16 %v3095, %v3092
        %v3852 = vpack.c.b16 %v3099, %v3096
        %v3853 = vpack.c.b16 %v3100, %v3097
        %v3854 = vpack.c.b16 %v3101, %v3098
        %v3855 = vpack.c.b16 %v3105, %v3102
        %v3856 = vpack.c.b16 %v3106, %v3103
        %v3857 = vpack.c.b16 %v3107, %v3104
        %v3858 = vpack.c.b16 %v3111, %v3108
        %v3859 = vpack.c.b16 %v3112, %v3109
        %v3860 = vpack.c.b16 %v3113, %v3110
        %v3861 = vpack.c.b16 %v3117, %v3114
        %v3862 = vpack.c.b16 %v3118, %v3115
        %v3863 = vpack.c.b16 %v3119, %v3116
        %v3864 = vpack.c.b16 %v3123, %v3120
        %v3865 = vpack.c.b16 %v3124, %v3121
        %v3866 = vpack.c.b16 %v3125, %v3122
        %v3867 = vpack.c.b16 %v3129, %v3126
        %v3868 = vpack.c.b16 %v3130, %v3127
        %v3869 = vpack.c.b16 %v3131, %v3128
        %v3870 = vpack.c.b16 %v3135, %v3132
        %v3871 = vpack.c.b16 %v3136, %v3133
        %v3872 = vpack.c.b16 %v3137, %v3134
        %v3873 = vpack.c.b16 %v3141, %v3138
        %v3874 = vpack.c.b16 %v3142, %v3139
        %v3875 = vpack.c.b16 %v3143, %v3140
        %v3876 = vpack.c.b16 %v3147, %v3144
        %v3877 = vpack.c.b16 %v3148, %v3145
        %v3878 = vpack.c.b16 %v3149, %v3146
        %v3879 = vpack.c.b16 %v3153, %v3150
        %v3880 = vpack.c.b16 %v3154, %v3151
        %v3881 = vpack.c.b16 %v3155, %v3152
        %v3882 = vpack.c.b16 %v3159, %v3156
        %v3883 = vpack.c.b16 %v3160, %v3157
        %v3884 = vpack.c.b16 %v3161, %v3158
        %v3885 = vpack.c.b16 %v3165, %v3162
        %v3886 = vpack.c.b16 %v3166, %v3163
        %v3887 = vpack.c.b16 %v3167, %v3164
        %v3888 = vpack.c.b16 %v3171, %v3168
        %v3889 = vpack.c.b16 %v3172, %v3169
        %v3890 = vpack.c.b16 %v3173, %v3170
        %v3891 = vpack.c.b16 %v3177, %v3174
        %v3892 = vpack.c.b16 %v3178, %v3175
        %v3893 = vpack.c.b16 %v3179, %v3176
        %v3894 = vpack.c.b16 %v3183, %v3180
        %v3895 = vpack.c.b16 %v3184, %v3181
        %v3896 = vpack.c.b16 %v3185, %v3182
        %v3897 = vpack.c.b16 %v3189, %v3186
        %v3898 = vpack.c.b16 %v3190, %v3187
        %v3899 = vpack.c.b16 %v3191, %v3188
        %v3900 = vpack.c.b16 %v3195, %v3192
        %v3901 = vpack.c.b16 %v3196, %v3193
        %v3902 = vpack.c.b16 %v3197, %v3194
        %v3903 = vpack.c.b16 %v3201, %v3198
        %v3904 = vpack.c.b16 %v3202, %v3199
        %v3905 = vpack.c.b16 %v3203, %v3200
        %v3906 = vpack.c.b16 %v3207, %v3204
        %v3907 = vpack.c.b16 %v3208, %v3205
        %v3908 = vpack.c.b16 %v3209, %v3206
        %v3909 = vpack.c.b16 %v3213, %v3210
        %v3910 = vpack.c.b16 %v3214, %v3211
        %v3911 = vpack.c.b16 %v3215, %v3212
        %v3912 = vpack.c.b16 %v3219, %v3216
        %v3913 = vpack.c.b16 %v3220, %v3217
        %v3914 = vpack.c.b16 %v3221, %v3218
        %v3915 = vpack.c.b16 %v3225, %v3222
        %v3916 = vpack.c.b16 %v3226, %v3223
        %v3917 = vpack.c.b16 %v3227, %v3224
        %v3918 = vpack.c.b16 %v3231, %v3228
        %v3919 = vpack.c.b16 %v3232, %v3229
        %v3920 = vpack.c.b16 %v3233, %v3230
        %v3921 = vpack.c.b16 %v3237, %v3234
        %v3922 = vpack.c.b16 %v3238, %v3235
        %v3923 = vpack.c.b16 %v3239, %v3236
        %v3924 = vpack.c.b16 %v3243, %v3240
        %v3925 = vpack.c.b16 %v3244, %v3241
        %v3926 = vpack.c.b16 %v3245, %v3242
        %v3927 = vpack.c.b16 %v3249, %v3246
        %v3928 = vpack.c.b16 %v3250, %v3247
        %v3929 = vpack.c.b16 %v3251, %v3248
        %v3930 = vpack.c.b16 %v3255, %v3252
        %v3931 = vpack.c.b16 %v3256, %v3253
        %v3932 = vpack.c.b16 %v3257, %v3254
        %v3933 = vpack.c.b16 %v3261, %v3258
        %v3934 = vpack.c.b16 %v3262, %v3259
        %v3935 = vpack.c.b16 %v3263, %v3260
        %v3936 = vpack.c.b16 %v3267, %v3264
        %v3937 = vpack.c.b16 %v3268, %v3265
        %v3938 = vpack.c.b16 %v3269, %v3266
        %v3939 = vpack.c.b16 %v3273, %v3270
        %v3940 = vpack.c.b16 %v3274, %v3271
        %v3941 = vpack.c.b16 %v3275, %v3272
        %v3942 = vpack.c.b16 %v3279, %v3276
        %v3943 = vpack.c.b16 %v3280, %v3277
        %v3944 = vpack.c.b16 %v3281, %v3278
        %v3945 = vpack.c.b16 %v3285, %v3282
        %v3946 = vpack.c.b16 %v3286, %v3283
        %v3947 = vpack.c.b16 %v3287, %v3284
        %v3948 = vpack.c.b16 %v3291, %v3288
        %v3949 = vpack.c.b16 %v3292, %v3289
        %v3950 = vpack.c.b16 %v3293, %v3290
        %v3951 = vpack.c.b16 %v3297, %v3294
        %v3952 = vpack.c.b16 %v3298, %v3295
        %v3953 = vpack.c.b16 %v3299, %v3296
        %v3954 = vpack.c.b16 %v3303, %v3300
        %v3955 = vpack.c.b16 %v3304, %v3301
        %v3956 = vpack.c.b16 %v3305, %v3302
        %v3957 = vpack.c.b16 %v3309, %v3306
        %v3958 = vpack.c.b16 %v3310, %v3307
        %v3959 = vpack.c.b16 %v3311, %v3308
        %v3960 = vpack.c.b16 %v3315, %v3312
        %v3961 = vpack.c.b16 %v3316, %v3313
        %v3962 = vpack.c.b16 %v3317, %v3314
        %v3963 = vpack.c.b16 %v3321, %v3318
        %v3964 = vpack.c.b16 %v3322, %v3319
        %v3965 = vpack.c.b16 %v3323, %v3320
        %v3966 = vpack.c.b16 %v3327, %v3324
        %v3967 = vpack.c.b16 %v3328, %v3325
        %v3968 = vpack.c.b16 %v3329, %v3326
        %v3969 = vpack.c.b16 %v3333, %v3330
        %v3970 = vpack.c.b16 %v3334, %v3331
        %v3971 = vpack.c.b16 %v3335, %v3332
        %v3972 = vpack.c.b16 %v3339, %v3336
        %v3973 = vpack.c.b16 %v3340, %v3337
        %v3974 = vpack.c.b16 %v3341, %v3338
        %v3975 = vpack.c.b16 %v3345, %v3342
        %v3976 = vpack.c.b16 %v3346, %v3343
        %v3977 = vpack.c.b16 %v3347, %v3344
        %v3978 = vpack.c.b16 %v3351, %v3348
        %v3979 = vpack.c.b16 %v3352, %v3349
        %v3980 = vpack.c.b16 %v3353, %v3350
        %v3981 = vpack.c.b16 %v3357, %v3354
        %v3982 = vpack.c.b16 %v3358, %v3355
        %v3983 = vpack.c.b16 %v3359, %v3356
        %v3984 = vpack.c.b16 %v3363, %v3360
        %v3985 = vpack.c.b16 %v3364, %v3361
        %v3986 = vpack.c.b16 %v3365, %v3362
        %v3987 = vpack.c.b16 %v3369, %v3366
        %v3988 = vpack.c.b16 %v3370, %v3367
        %v3989 = vpack.c.b16 %v3371, %v3368
        %v3990 = vpack.c.b16 %v3375, %v3372
        %v3991 = vpack.c.b16 %v3376, %v3373
        %v3992 = vpack.c.b16 %v3377, %v3374
        %v3993 = vpack.c.b16 %v3381, %v3378
        %v3994 = vpack.c.b16 %v3382, %v3379
        %v3995 = vpack.c.b16 %v3383, %v3380
        %v3996 = vpack.c.b16 %v3387, %v3384
        %v3997 = vpack.c.b16 %v3388, %v3385
        %v3998 = vpack.c.b16 %v3389, %v3386
        %v3999 = vpack.c.b16 %v3393, %v3390
        %v4000 = vpack.c.b16 %v3394, %v3391
        %v4001 = vpack.c.b16 %v3395, %v3392
        %v4002 = vpack.c.b16 %v3399, %v3396
        %v4003 = vpack.c.b16 %v3400, %v3397
        %v4004 = vpack.c.b16 %v3401, %v3398
        %v4005 = vpack.c.b16 %v3405, %v3402
        %v4006 = vpack.c.b16 %v3406, %v3403
        %v4007 = vpack.c.b16 %v3407, %v3404
        %v4008 = vpack.c.b16 %v3411, %v3408
        %v4009 = vpack.c.b16 %v3412, %v3409
        %v4010 = vpack.c.b16 %v3413, %v3410
        %v4011 = vpack.c.b16 %v3417, %v3414
        %v4012 = vpack.c.b16 %v3418, %v3415
        %v4013 = vpack.c.b16 %v3419, %v3416
        %v4014 = vpack.c.b16 %v3423, %v3420
        %v4015 = vpack.c.b16 %v3424, %v3421
        %v4016 = vpack.c.b16 %v3425, %v3422
        %v4017 = vpack.c.b16 %v3429, %v3426
        %v4018 = vpack.c.b16 %v3430, %v3427
        %v4019 = vpack.c.b16 %v3431, %v3428
        %v4020 = vpack.c.b16 %v3435, %v3432
        %v4021 = vpack.c.b16 %v3436, %v3433
        %v4022 = vpack.c.b16 %v3437, %v3434
        %v4023 = vpack.c.b16 %v3441, %v3438
        %v4024 = vpack.c.b16 %v3442, %v3439
        %v4025 = vpack.c.b16 %v3443, %v3440
        %v4026 = vpack.c.b16 %v3447, %v3444
        %v4027 = vpack.c.b16 %v3448, %v3445
        %v4028 = vpack.c.b16 %v3449, %v3446
        %v4029 = vpack.c.b16 %v3453, %v3450
        %v4030 = vpack.c.b16 %v3454, %v3451
        %v4031 = vpack.c.b16 %v3455, %v3452
        %4608 = vmatprep.subr.bf16.mxu0 %v3457
        %4609 = vmatpush1.bf16.msra.mxu0 %v3456
        %4610 = vmatprep.subr.bf16.mxu0 %v3460
        %4611 = vmatpush1.bf16.msra.mxu0 %v3459
        %4612 = vmatprep.subr.bf16.mxu0 %v3463
        %4613 = vmatpush1.bf16.msra.mxu0 %v3462
        %4614 = vmatprep.subr.bf16.mxu0 %v3466
        %4615 = vmatpush1.bf16.msra.mxu0 %v3465
        %4616 = vmatprep.subr.bf16.mxu0 %v3469
        %4617 = vmatpush1.bf16.msra.mxu0 %v3468
        %4618 = vmatprep.subr.bf16.mxu0 %v3472
        %4619 = vmatpush1.bf16.msra.mxu0 %v3471
        %4620 = vmatprep.subr.bf16.mxu0 %v3475
        %4621 = vmatpush1.bf16.msra.mxu0 %v3474
        %4622 = vmatprep.subr.bf16.mxu0 %v3478
        %4623 = vmatpush1.bf16.msra.mxu0 %v3477
        %4624 = vmatprep.subr.bf16.mxu0 %v3481
        %4625 = vmatpush1.bf16.msra.mxu0 %v3480
        %4626 = vmatprep.subr.bf16.mxu0 %v3484
        %4627 = vmatpush1.bf16.msra.mxu0 %v3483
        %4628 = vmatprep.subr.bf16.mxu0 %v3487
        %4629 = vmatpush1.bf16.msra.mxu0 %v3486
        %4630 = vmatprep.subr.bf16.mxu0 %v3490
        %4631 = vmatpush1.bf16.msra.mxu0 %v3489
        %4632 = vmatprep.subr.bf16.mxu0 %v3493
        %4633 = vmatpush1.bf16.msra.mxu0 %v3492
        %4634 = vmatprep.subr.bf16.mxu0 %v3496
        %4635 = vmatpush1.bf16.msra.mxu0 %v3495
        %4636 = vmatprep.subr.bf16.mxu0 %v3499
        %4637 = vmatpush1.bf16.msra.mxu0 %v3498
        %4638 = vmatprep.subr.bf16.mxu0 %v3502
        %4639 = vmatpush1.bf16.msra.mxu0 %v3501
        %4640 = vmatprep.mubr.bf16.mxu0 %v1345
        %4641 = vmatmul.mubr.bf16.gmra.mrb[0].mxu0 %v1344
        %v4642 = vpop.f32.mrb[0].mxu0
        %v4643 = vadd.f32 %v1080, %v4642
        %v4644 = vpop.f32.mrb[0].mxu0
        %v4645 = vadd.f32 %v1084, %v4644
        %v4646 = vpop.f32.mrb[0].mxu0
        %v4647 = vadd.f32 %v1080, %v4646
        %v4648 = vpop.f32.mrb[0].mxu0
        %v4649 = vadd.f32 %v1084, %v4648
        %4650 = vmatprep.mubr.bf16.mxu0 %v1369
        %4651 = vmatmul.mubr.bf16.gmra.mrb[0].mxu0 %v1368
        %v4652 = vpop.f32.mrb[0].mxu0
        %v4653 = vadd.f32 %v1080, %v4652
        %v4654 = vpop.f32.mrb[0].mxu0
        %v4655 = vadd.f32 %v1084, %v4654
        %v4656 = vpop.f32.mrb[0].mxu0
        %v4657 = vadd.f32 %v1080, %v4656
        %v4658 = vpop.f32.mrb[0].mxu0
        %v4659 = vadd.f32 %v1084, %v4658
        %4660 = vmatprep.mubr.bf16.mxu0 %v1393
        %4661 = vmatmul.mubr.bf16.gmra.mrb[0].mxu0 %v1392
        %v4662 = vpop.f32.mrb[0].mxu0
        %v4663 = vadd.f32 %v1080, %v4662
        %v4664 = vpop.f32.mrb[0].mxu0
        %v4665 = vadd.f32 %v1084, %v4664
        %v4666 = vpop.f32.mrb[0].mxu0
        %v4667 = vadd.f32 %v1080, %v4666
        %v4668 = vpop.f32.mrb[0].mxu0
        %v4669 = vadd.f32 %v1084, %v4668
        %4670 = vmatprep.mubr.bf16.mxu0 %v1417
        %4671 = vmatmul.mubr.bf16.gmra.mrb[0].mxu0 %v1416
        %v4672 = vpop.f32.mrb[0].mxu0
        %v4673 = vadd.f32 %v1080, %v4672
        %v4674 = vpop.f32.mrb[0].mxu0
        %v4675 = vadd.f32 %v1084, %v4674
        %v4676 = vpop.f32.mrb[0].mxu0
        %v4677 = vpop.f32.mrb[0].mxu0
        %4678 = vdwg.mxu0
        %4679 = vmatprep.subr.bf16.mxu0 %v3505
        %4680 = vmatpush1.bf16.msra.mxu0 %v3504
        %4681 = vmatprep.subr.bf16.mxu0 %v3508
        %4682 = vmatpush1.bf16.msra.mxu0 %v3507
        %4683 = vmatprep.subr.bf16.mxu0 %v3511
        %4684 = vmatpush1.bf16.msra.mxu0 %v3510
        %4685 = vmatprep.subr.bf16.mxu0 %v3514
        %4686 = vmatpush1.bf16.msra.mxu0 %v3513
        %4687 = vmatprep.subr.bf16.mxu0 %v3517
        %4688 = vmatpush1.bf16.msra.mxu0 %v3516
        %4689 = vmatprep.subr.bf16.mxu0 %v3520
        %4690 = vmatpush1.bf16.msra.mxu0 %v3519
        %4691 = vmatprep.subr.bf16.mxu0 %v3523
        %4692 = vmatpush1.bf16.msra.mxu0 %v3522
        %4693 = vmatprep.subr.bf16.mxu0 %v3526
        %4694 = vmatpush1.bf16.msra.mxu0 %v3525
        %4695 = vmatprep.subr.bf16.mxu0 %v3529
        %4696 = vmatpush1.bf16.msra.mxu0 %v3528
        %4697 = vmatprep.subr.bf16.mxu0 %v3532
        %4698 = vmatpush1.bf16.msra.mxu0 %v3531
        %4699 = vmatprep.subr.bf16.mxu0 %v3535
        %4700 = vmatpush1.bf16.msra.mxu0 %v3534
        %4701 = vmatprep.subr.bf16.mxu0 %v3538
        %4702 = vmatpush1.bf16.msra.mxu0 %v3537
        %4703 = vmatprep.subr.bf16.mxu0 %v3541
        %4704 = vmatpush1.bf16.msra.mxu0 %v3540
        %4705 = vmatprep.subr.bf16.mxu0 %v3544
        %4706 = vmatpush1.bf16.msra.mxu0 %v3543
        %4707 = vmatprep.subr.bf16.mxu0 %v3547
        %4708 = vmatpush1.bf16.msra.mxu0 %v3546
        %4709 = vmatprep.subr.bf16.mxu0 %v3550
        %4710 = vmatpush1.bf16.msra.mxu0 %v3549
        %4711 = vmatprep.mubr.bf16.mxu0 %v1347
        %4712 = vmatmul.mubr.bf16.gmra.mrb[0].mxu0 %v1346
        %v4713 = vpop.f32.mrb[0].mxu0
        %v4714 = vadd.f32 %v4643, %v4713
        %v4715 = vpop.f32.mrb[0].mxu0
        %v4716 = vadd.f32 %v4645, %v4715
        %v4717 = vpop.f32.mrb[0].mxu0
        %v4718 = vadd.f32 %v4647, %v4717
        %v4719 = vpop.f32.mrb[0].mxu0
        %v4720 = vadd.f32 %v4649, %v4719
        %4721 = vmatprep.mubr.bf16.mxu0 %v1371
        %4722 = vmatmul.mubr.bf16.gmra.mrb[0].mxu0 %v1370
        %v4723 = vpop.f32.mrb[0].mxu0
        %v4724 = vadd.f32 %v4653, %v4723
        %v4725 = vpop.f32.mrb[0].mxu0
        %v4726 = vadd.f32 %v4655, %v4725
        %v4727 = vpop.f32.mrb[0].mxu0
        %v4728 = vadd.f32 %v4657, %v4727
        %v4729 = vpop.f32.mrb[0].mxu0
        %v4730 = vadd.f32 %v4659, %v4729
        %4731 = vmatprep.mubr.bf16.mxu0 %v1395
        %4732 = vmatmul.mubr.bf16.gmra.mrb[0].mxu0 %v1394
        %v4733 = vpop.f32.mrb[0].mxu0
        %v4734 = vadd.f32 %v4663, %v4733
        %v4735 = vpop.f32.mrb[0].mxu0
        %v4736 = vadd.f32 %v4665, %v4735
        %v4737 = vpop.f32.mrb[0].mxu0
        %v4738 = vadd.f32 %v4667, %v4737
        %v4739 = vpop.f32.mrb[0].mxu0
        %v4740 = vadd.f32 %v4669, %v4739
        %4741 = vmatprep.mubr.bf16.mxu0 %v1419
        %4742 = vmatmul.mubr.bf16.gmra.mrb[0].mxu0 %v1418
        %v4743 = vpop.f32.mrb[0].mxu0
        %v4744 = vadd.f32 %v4673, %v4743
        %v4745 = vpop.f32.mrb[0].mxu0
        %v4746 = vadd.f32 %v4675, %v4745
        %v4747 = vpop.f32.mrb[0].mxu0
        %v4748 = vpop.f32.mrb[0].mxu0
        %4749 = vdwg.mxu0
        %4750 = vmatprep.subr.bf16.mxu0 %v3553
        %4751 = vmatpush1.bf16.msra.mxu0 %v3552
        %4752 = vmatprep.subr.bf16.mxu0 %v3556
        %4753 = vmatpush1.bf16.msra.mxu0 %v3555
        %4754 = vmatprep.subr.bf16.mxu0 %v3559
        %4755 = vmatpush1.bf16.msra.mxu0 %v3558
        %4756 = vmatprep.subr.bf16.mxu0 %v3562
        %4757 = vmatpush1.bf16.msra.mxu0 %v3561
        %4758 = vmatprep.subr.bf16.mxu0 %v3565
        %4759 = vmatpush1.bf16.msra.mxu0 %v3564
        %4760 = vmatprep.subr.bf16.mxu0 %v3568
        %4761 = vmatpush1.bf16.msra.mxu0 %v3567
        %4762 = vmatprep.subr.bf16.mxu0 %v3571
        %4763 = vmatpush1.bf16.msra.mxu0 %v3570
        %4764 = vmatprep.subr.bf16.mxu0 %v3574
        %4765 = vmatpush1.bf16.msra.mxu0 %v3573
        %4766 = vmatprep.subr.bf16.mxu0 %v3577
        %4767 = vmatpush1.bf16.msra.mxu0 %v3576
        %4768 = vmatprep.subr.bf16.mxu0 %v3580
        %4769 = vmatpush1.bf16.msra.mxu0 %v3579
        %4770 = vmatprep.subr.bf16.mxu0 %v3583
        %4771 = vmatpush1.bf16.msra.mxu0 %v3582
        %4772 = vmatprep.subr.bf16.mxu0 %v3586
        %4773 = vmatpush1.bf16.msra.mxu0 %v3585
        %4774 = vmatprep.subr.bf16.mxu0 %v3589
        %4775 = vmatpush1.bf16.msra.mxu0 %v3588
        %4776 = vmatprep.subr.bf16.mxu0 %v3592
        %4777 = vmatpush1.bf16.msra.mxu0 %v3591
        %4778 = vmatprep.subr.bf16.mxu0 %v3595
        %4779 = vmatpush1.bf16.msra.mxu0 %v3594
        %4780 = vmatprep.subr.bf16.mxu0 %v3598
        %4781 = vmatpush1.bf16.msra.mxu0 %v3597
        %4782 = vmatprep.mubr.bf16.mxu0 %v1349
        %4783 = vmatmul.mubr.bf16.gmra.mrb[0].mxu0 %v1348
        %v4784 = vpop.f32.mrb[0].mxu0
        %v4785 = vadd.f32 %v4714, %v4784
        %v4786 = vpop.f32.mrb[0].mxu0
        %v4787 = vadd.f32 %v4716, %v4786
        %v4788 = vpop.f32.mrb[0].mxu0
        %v4789 = vadd.f32 %v4718, %v4788
        %v4790 = vpop.f32.mrb[0].mxu0
        %v4791 = vadd.f32 %v4720, %v4790
        %4792 = vmatprep.mubr.bf16.mxu0 %v1373
        %4793 = vmatmul.mubr.bf16.gmra.mrb[0].mxu0 %v1372
        %v4794 = vpop.f32.mrb[0].mxu0
        %v4795 = vadd.f32 %v4724, %v4794
        %v4796 = vpop.f32.mrb[0].mxu0
        %v4797 = vadd.f32 %v4726, %v4796
        %v4798 = vpop.f32.mrb[0].mxu0
        %v4799 = vadd.f32 %v4728, %v4798
        %v4800 = vpop.f32.mrb[0].mxu0
        %v4801 = vadd.f32 %v4730, %v4800
        %4802 = vmatprep.mubr.bf16.mxu0 %v1397
        %4803 = vmatmul.mubr.bf16.gmra.mrb[0].mxu0 %v1396
        %v4804 = vpop.f32.mrb[0].mxu0
        %v4805 = vadd.f32 %v4734, %v4804
        %v4806 = vpop.f32.mrb[0].mxu0
        %v4807 = vadd.f32 %v4736, %v4806
        %v4808 = vpop.f32.mrb[0].mxu0
        %v4809 = vadd.f32 %v4738, %v4808
        %v4810 = vpop.f32.mrb[0].mxu0
        %v4811 = vadd.f32 %v4740, %v4810
        %4812 = vmatprep.mubr.bf16.mxu0 %v1421
        %4813 = vmatmul.mubr.bf16.gmra.mrb[0].mxu0 %v1420
        %v4814 = vpop.f32.mrb[0].mxu0
        %v4815 = vadd.f32 %v4744, %v4814
        %v4816 = vpop.f32.mrb[0].mxu0
        %v4817 = vadd.f32 %v4746, %v4816
        %v4818 = vpop.f32.mrb[0].mxu0
        %v4819 = vpop.f32.mrb[0].mxu0
        %4820 = vdwg.mxu0
        %4821 = vmatprep.subr.bf16.mxu0 %v3601
        %4822 = vmatpush1.bf16.msra.mxu0 %v3600
        %4823 = vmatprep.subr.bf16.mxu0 %v3604
        %4824 = vmatpush1.bf16.msra.mxu0 %v3603
        %4825 = vmatprep.subr.bf16.mxu0 %v3607
        %4826 = vmatpush1.bf16.msra.mxu0 %v3606
        %4827 = vmatprep.subr.bf16.mxu0 %v3610
        %4828 = vmatpush1.bf16.msra.mxu0 %v3609
        %4829 = vmatprep.subr.bf16.mxu0 %v3613
        %4830 = vmatpush1.bf16.msra.mxu0 %v3612
        %4831 = vmatprep.subr.bf16.mxu0 %v3616
        %4832 = vmatpush1.bf16.msra.mxu0 %v3615
        %4833 = vmatprep.subr.bf16.mxu0 %v3619
        %4834 = vmatpush1.bf16.msra.mxu0 %v3618
        %4835 = vmatprep.subr.bf16.mxu0 %v3622
        %4836 = vmatpush1.bf16.msra.mxu0 %v3621
        %4837 = vmatprep.subr.bf16.mxu0 %v3625
        %4838 = vmatpush1.bf16.msra.mxu0 %v3624
        %4839 = vmatprep.subr.bf16.mxu0 %v3628
        %4840 = vmatpush1.bf16.msra.mxu0 %v3627
        %4841 = vmatprep.subr.bf16.mxu0 %v3631
        %4842 = vmatpush1.bf16.msra.mxu0 %v3630
        %4843 = vmatprep.subr.bf16.mxu0 %v3634
        %4844 = vmatpush1.bf16.msra.mxu0 %v3633
        %4845 = vmatprep.subr.bf16.mxu0 %v3637
        %4846 = vmatpush1.bf16.msra.mxu0 %v3636
        %4847 = vmatprep.subr.bf16.mxu0 %v3640
        %4848 = vmatpush1.bf16.msra.mxu0 %v3639
        %4849 = vmatprep.subr.bf16.mxu0 %v3643
        %4850 = vmatpush1.bf16.msra.mxu0 %v3642
        %4851 = vmatprep.subr.bf16.mxu0 %v3646
        %4852 = vmatpush1.bf16.msra.mxu0 %v3645
        %4853 = vmatprep.mubr.bf16.mxu0 %v1351
        %4854 = vmatmul.mubr.bf16.gmra.mrb[0].mxu0 %v1350
        %v4855 = vpop.f32.mrb[0].mxu0
        %v4856 = vadd.f32 %v4785, %v4855
        %v4857 = vpop.f32.mrb[0].mxu0
        %v4858 = vadd.f32 %v4787, %v4857
        %v4859 = vpop.f32.mrb[0].mxu0
        %v4860 = vadd.f32 %v4789, %v4859
        %v4861 = vpop.f32.mrb[0].mxu0
        %v4862 = vadd.f32 %v4791, %v4861
        %4863 = vmatprep.mubr.bf16.mxu0 %v1375
        %4864 = vmatmul.mubr.bf16.gmra.mrb[0].mxu0 %v1374
        %v4865 = vpop.f32.mrb[0].mxu0
        %v4866 = vadd.f32 %v4795, %v4865
        %v4867 = vpop.f32.mrb[0].mxu0
        %v4868 = vadd.f32 %v4797, %v4867
        %v4869 = vpop.f32.mrb[0].mxu0
        %v4870 = vadd.f32 %v4799, %v4869
        %v4871 = vpop.f32.mrb[0].mxu0
        %v4872 = vadd.f32 %v4801, %v4871
        %4873 = vmatprep.mubr.bf16.mxu0 %v1399
        %4874 = vmatmul.mubr.bf16.gmra.mrb[0].mxu0 %v1398
        %v4875 = vpop.f32.mrb[0].mxu0
        %v4876 = vadd.f32 %v4805, %v4875
        %v4877 = vpop.f32.mrb[0].mxu0
        %v4878 = vadd.f32 %v4807, %v4877
        %v4879 = vpop.f32.mrb[0].mxu0
        %v4880 = vadd.f32 %v4809, %v4879
        %v4881 = vpop.f32.mrb[0].mxu0
        %v4882 = vadd.f32 %v4811, %v4881
        %4883 = vmatprep.mubr.bf16.mxu0 %v1423
        %4884 = vmatmul.mubr.bf16.gmra.mrb[0].mxu0 %v1422
        %v4885 = vpop.f32.mrb[0].mxu0
        %v4886 = vadd.f32 %v4815, %v4885
        %v4887 = vpop.f32.mrb[0].mxu0
        %v4888 = vadd.f32 %v4817, %v4887
        %v4889 = vpop.f32.mrb[0].mxu0
        %v4890 = vpop.f32.mrb[0].mxu0
        %4891 = vdwg.mxu0
        %4892 = vmatprep.subr.bf16.mxu0 %v3649
        %4893 = vmatpush1.bf16.msra.mxu0 %v3648
        %4894 = vmatprep.subr.bf16.mxu0 %v3652
        %4895 = vmatpush1.bf16.msra.mxu0 %v3651
        %4896 = vmatprep.subr.bf16.mxu0 %v3655
        %4897 = vmatpush1.bf16.msra.mxu0 %v3654
        %4898 = vmatprep.subr.bf16.mxu0 %v3658
        %4899 = vmatpush1.bf16.msra.mxu0 %v3657
        %4900 = vmatprep.subr.bf16.mxu0 %v3661
        %4901 = vmatpush1.bf16.msra.mxu0 %v3660
        %4902 = vmatprep.subr.bf16.mxu0 %v3664
        %4903 = vmatpush1.bf16.msra.mxu0 %v3663
        %4904 = vmatprep.subr.bf16.mxu0 %v3667
        %4905 = vmatpush1.bf16.msra.mxu0 %v3666
        %4906 = vmatprep.subr.bf16.mxu0 %v3670
        %4907 = vmatpush1.bf16.msra.mxu0 %v3669
        %4908 = vmatprep.subr.bf16.mxu0 %v3673
        %4909 = vmatpush1.bf16.msra.mxu0 %v3672
        %4910 = vmatprep.subr.bf16.mxu0 %v3676
        %4911 = vmatpush1.bf16.msra.mxu0 %v3675
        %4912 = vmatprep.subr.bf16.mxu0 %v3679
        %4913 = vmatpush1.bf16.msra.mxu0 %v3678
        %4914 = vmatprep.subr.bf16.mxu0 %v3682
        %4915 = vmatpush1.bf16.msra.mxu0 %v3681
        %4916 = vmatprep.subr.bf16.mxu0 %v3685
        %4917 = vmatpush1.bf16.msra.mxu0 %v3684
        %4918 = vmatprep.subr.bf16.mxu0 %v3688
        %4919 = vmatpush1.bf16.msra.mxu0 %v3687
        %4920 = vmatprep.subr.bf16.mxu0 %v3691
        %4921 = vmatpush1.bf16.msra.mxu0 %v3690
        %4922 = vmatprep.subr.bf16.mxu0 %v3694
        %4923 = vmatpush1.bf16.msra.mxu0 %v3693
        %4924 = vmatprep.mubr.bf16.mxu0 %v1353
        %4925 = vmatmul.mubr.bf16.gmra.mrb[0].mxu0 %v1352
        %v4926 = vpop.f32.mrb[0].mxu0
        %v4927 = vadd.f32 %v4856, %v4926
        %v4928 = vpop.f32.mrb[0].mxu0
        %v4929 = vadd.f32 %v4858, %v4928
        %v4930 = vpop.f32.mrb[0].mxu0
        %v4931 = vadd.f32 %v4860, %v4930
        %v4932 = vpop.f32.mrb[0].mxu0
        %v4933 = vadd.f32 %v4862, %v4932
        %4934 = vmatprep.mubr.bf16.mxu0 %v1377
        %4935 = vmatmul.mubr.bf16.gmra.mrb[0].mxu0 %v1376
        %v4936 = vpop.f32.mrb[0].mxu0
        %v4937 = vadd.f32 %v4866, %v4936
        %v4938 = vpop.f32.mrb[0].mxu0
        %v4939 = vadd.f32 %v4868, %v4938
        %v4940 = vpop.f32.mrb[0].mxu0
        %v4941 = vadd.f32 %v4870, %v4940
        %v4942 = vpop.f32.mrb[0].mxu0
        %v4943 = vadd.f32 %v4872, %v4942
        %4944 = vmatprep.mubr.bf16.mxu0 %v1401
        %4945 = vmatmul.mubr.bf16.gmra.mrb[0].mxu0 %v1400
        %v4946 = vpop.f32.mrb[0].mxu0
        %v4947 = vadd.f32 %v4876, %v4946
        %v4948 = vpop.f32.mrb[0].mxu0
        %v4949 = vadd.f32 %v4878, %v4948
        %v4950 = vpop.f32.mrb[0].mxu0
        %v4951 = vadd.f32 %v4880, %v4950
        %v4952 = vpop.f32.mrb[0].mxu0
        %v4953 = vadd.f32 %v4882, %v4952
        %4954 = vmatprep.mubr.bf16.mxu0 %v1425
        %4955 = vmatmul.mubr.bf16.gmra.mrb[0].mxu0 %v1424
        %v4956 = vpop.f32.mrb[0].mxu0
        %v4957 = vadd.f32 %v4886, %v4956
        %v4958 = vpop.f32.mrb[0].mxu0
        %v4959 = vadd.f32 %v4888, %v4958
        %v4960 = vpop.f32.mrb[0].mxu0
        %v4961 = vpop.f32.mrb[0].mxu0
        %4962 = vdwg.mxu0
        %4963 = vmatprep.subr.bf16.mxu0 %v3697
        %4964 = vmatpush1.bf16.msra.mxu0 %v3696
        %4965 = vmatprep.subr.bf16.mxu0 %v3700
        %4966 = vmatpush1.bf16.msra.mxu0 %v3699
        %4967 = vmatprep.subr.bf16.mxu0 %v3703
        %4968 = vmatpush1.bf16.msra.mxu0 %v3702
        %4969 = vmatprep.subr.bf16.mxu0 %v3706
        %4970 = vmatpush1.bf16.msra.mxu0 %v3705
        %4971 = vmatprep.subr.bf16.mxu0 %v3709
        %4972 = vmatpush1.bf16.msra.mxu0 %v3708
        %4973 = vmatprep.subr.bf16.mxu0 %v3712
        %4974 = vmatpush1.bf16.msra.mxu0 %v3711
        %4975 = vmatprep.subr.bf16.mxu0 %v3715
        %4976 = vmatpush1.bf16.msra.mxu0 %v3714
        %4977 = vmatprep.subr.bf16.mxu0 %v3718
        %4978 = vmatpush1.bf16.msra.mxu0 %v3717
        %4979 = vmatprep.subr.bf16.mxu0 %v3721
        %4980 = vmatpush1.bf16.msra.mxu0 %v3720
        %4981 = vmatprep.subr.bf16.mxu0 %v3724
        %4982 = vmatpush1.bf16.msra.mxu0 %v3723
        %4983 = vmatprep.subr.bf16.mxu0 %v3727
        %4984 = vmatpush1.bf16.msra.mxu0 %v3726
        %4985 = vmatprep.subr.bf16.mxu0 %v3730
        %4986 = vmatpush1.bf16.msra.mxu0 %v3729
        %4987 = vmatprep.subr.bf16.mxu0 %v3733
        %4988 = vmatpush1.bf16.msra.mxu0 %v3732
        %4989 = vmatprep.subr.bf16.mxu0 %v3736
        %4990 = vmatpush1.bf16.msra.mxu0 %v3735
        %4991 = vmatprep.subr.bf16.mxu0 %v3739
        %4992 = vmatpush1.bf16.msra.mxu0 %v3738
        %4993 = vmatprep.subr.bf16.mxu0 %v3742
        %4994 = vmatpush1.bf16.msra.mxu0 %v3741
        %4995 = vmatprep.mubr.bf16.mxu0 %v1355
        %4996 = vmatmul.mubr.bf16.gmra.mrb[0].mxu0 %v1354
        %v4997 = vpop.f32.mrb[0].mxu0
        %v4998 = vadd.f32 %v4927, %v4997
        %v4999 = vpop.f32.mrb[0].mxu0
        %v5000 = vadd.f32 %v4929, %v4999
        %v5001 = vpop.f32.mrb[0].mxu0
        %v5002 = vadd.f32 %v4931, %v5001
        %v5003 = vpop.f32.mrb[0].mxu0
        %v5004 = vadd.f32 %v4933, %v5003
        %5005 = vmatprep.mubr.bf16.mxu0 %v1379
        %5006 = vmatmul.mubr.bf16.gmra.mrb[0].mxu0 %v1378
        %v5007 = vpop.f32.mrb[0].mxu0
        %v5008 = vadd.f32 %v4937, %v5007
        %v5009 = vpop.f32.mrb[0].mxu0
        %v5010 = vadd.f32 %v4939, %v5009
        %v5011 = vpop.f32.mrb[0].mxu0
        %v5012 = vadd.f32 %v4941, %v5011
        %v5013 = vpop.f32.mrb[0].mxu0
        %v5014 = vadd.f32 %v4943, %v5013
        %5015 = vmatprep.mubr.bf16.mxu0 %v1403
        %5016 = vmatmul.mubr.bf16.gmra.mrb[0].mxu0 %v1402
        %v5017 = vpop.f32.mrb[0].mxu0
        %v5018 = vadd.f32 %v4947, %v5017
        %v5019 = vpop.f32.mrb[0].mxu0
        %v5020 = vadd.f32 %v4949, %v5019
        %v5021 = vpop.f32.mrb[0].mxu0
        %v5022 = vadd.f32 %v4951, %v5021
        %v5023 = vpop.f32.mrb[0].mxu0
        %v5024 = vadd.f32 %v4953, %v5023
        %5025 = vmatprep.mubr.bf16.mxu0 %v1427
        %5026 = vmatmul.mubr.bf16.gmra.mrb[0].mxu0 %v1426
        %v5027 = vpop.f32.mrb[0].mxu0
        %v5028 = vadd.f32 %v4957, %v5027
        %v5029 = vpop.f32.mrb[0].mxu0
        %v5030 = vadd.f32 %v4959, %v5029
        %v5031 = vpop.f32.mrb[0].mxu0
        %v5032 = vpop.f32.mrb[0].mxu0
        %5033 = vdwg.mxu0
        %5034 = vmatprep.subr.bf16.mxu0 %v3745
        %5035 = vmatpush1.bf16.msra.mxu0 %v3744
        %5036 = vmatprep.subr.bf16.mxu0 %v3748
        %5037 = vmatpush1.bf16.msra.mxu0 %v3747
        %5038 = vmatprep.subr.bf16.mxu0 %v3751
        %5039 = vmatpush1.bf16.msra.mxu0 %v3750
        %5040 = vmatprep.subr.bf16.mxu0 %v3754
        %5041 = vmatpush1.bf16.msra.mxu0 %v3753
        %5042 = vmatprep.subr.bf16.mxu0 %v3757
        %5043 = vmatpush1.bf16.msra.mxu0 %v3756
        %5044 = vmatprep.subr.bf16.mxu0 %v3760
        %5045 = vmatpush1.bf16.msra.mxu0 %v3759
        %5046 = vmatprep.subr.bf16.mxu0 %v3763
        %5047 = vmatpush1.bf16.msra.mxu0 %v3762
        %5048 = vmatprep.subr.bf16.mxu0 %v3766
        %5049 = vmatpush1.bf16.msra.mxu0 %v3765
        %5050 = vmatprep.subr.bf16.mxu0 %v3769
        %5051 = vmatpush1.bf16.msra.mxu0 %v3768
        %5052 = vmatprep.subr.bf16.mxu0 %v3772
        %5053 = vmatpush1.bf16.msra.mxu0 %v3771
        %5054 = vmatprep.subr.bf16.mxu0 %v3775
        %5055 = vmatpush1.bf16.msra.mxu0 %v3774
        %5056 = vmatprep.subr.bf16.mxu0 %v3778
        %5057 = vmatpush1.bf16.msra.mxu0 %v3777
        %5058 = vmatprep.subr.bf16.mxu0 %v3781
        %5059 = vmatpush1.bf16.msra.mxu0 %v3780
        %5060 = vmatprep.subr.bf16.mxu0 %v3784
        %5061 = vmatpush1.bf16.msra.mxu0 %v3783
        %5062 = vmatprep.subr.bf16.mxu0 %v3787
        %5063 = vmatpush1.bf16.msra.mxu0 %v3786
        %5064 = vmatprep.subr.bf16.mxu0 %v3790
        %5065 = vmatpush1.bf16.msra.mxu0 %v3789
        %5066 = vmatprep.mubr.bf16.mxu0 %v1357
        %5067 = vmatmul.mubr.bf16.gmra.mrb[0].mxu0 %v1356
        %v5068 = vpop.f32.mrb[0].mxu0
        %v5069 = vadd.f32 %v4998, %v5068
        %v5070 = vpop.f32.mrb[0].mxu0
        %v5071 = vadd.f32 %v5000, %v5070
        %v5072 = vpop.f32.mrb[0].mxu0
        %v5073 = vadd.f32 %v5002, %v5072
        %v5074 = vpop.f32.mrb[0].mxu0
        %v5075 = vadd.f32 %v5004, %v5074
        %5076 = vmatprep.mubr.bf16.mxu0 %v1381
        %5077 = vmatmul.mubr.bf16.gmra.mrb[0].mxu0 %v1380
        %v5078 = vpop.f32.mrb[0].mxu0
        %v5079 = vadd.f32 %v5008, %v5078
        %v5080 = vpop.f32.mrb[0].mxu0
        %v5081 = vadd.f32 %v5010, %v5080
        %v5082 = vpop.f32.mrb[0].mxu0
        %v5083 = vadd.f32 %v5012, %v5082
        %v5084 = vpop.f32.mrb[0].mxu0
        %v5085 = vadd.f32 %v5014, %v5084
        %5086 = vmatprep.mubr.bf16.mxu0 %v1405
        %5087 = vmatmul.mubr.bf16.gmra.mrb[0].mxu0 %v1404
        %v5088 = vpop.f32.mrb[0].mxu0
        %v5089 = vadd.f32 %v5018, %v5088
        %v5090 = vpop.f32.mrb[0].mxu0
        %v5091 = vadd.f32 %v5020, %v5090
        %v5092 = vpop.f32.mrb[0].mxu0
        %v5093 = vadd.f32 %v5022, %v5092
        %v5094 = vpop.f32.mrb[0].mxu0
        %v5095 = vadd.f32 %v5024, %v5094
        %5096 = vmatprep.mubr.bf16.mxu0 %v1429
        %5097 = vmatmul.mubr.bf16.gmra.mrb[0].mxu0 %v1428
        %v5098 = vpop.f32.mrb[0].mxu0
        %v5099 = vadd.f32 %v5028, %v5098
        %v5100 = vpop.f32.mrb[0].mxu0
        %v5101 = vadd.f32 %v5030, %v5100
        %v5102 = vpop.f32.mrb[0].mxu0
        %v5103 = vpop.f32.mrb[0].mxu0
        %5104 = vdwg.mxu0
        %5105 = vmatprep.subr.bf16.mxu0 %v3793
        %5106 = vmatpush1.bf16.msra.mxu0 %v3792
        %5107 = vmatprep.subr.bf16.mxu0 %v3796
        %5108 = vmatpush1.bf16.msra.mxu0 %v3795
        %5109 = vmatprep.subr.bf16.mxu0 %v3799
        %5110 = vmatpush1.bf16.msra.mxu0 %v3798
        %5111 = vmatprep.subr.bf16.mxu0 %v3802
        %5112 = vmatpush1.bf16.msra.mxu0 %v3801
        %5113 = vmatprep.subr.bf16.mxu0 %v3805
        %5114 = vmatpush1.bf16.msra.mxu0 %v3804
        %5115 = vmatprep.subr.bf16.mxu0 %v3808
        %5116 = vmatpush1.bf16.msra.mxu0 %v3807
        %5117 = vmatprep.subr.bf16.mxu0 %v3811
        %5118 = vmatpush1.bf16.msra.mxu0 %v3810
        %5119 = vmatprep.subr.bf16.mxu0 %v3814
        %5120 = vmatpush1.bf16.msra.mxu0 %v3813
        %5121 = vmatprep.subr.bf16.mxu0 %v3817
        %5122 = vmatpush1.bf16.msra.mxu0 %v3816
        %5123 = vmatprep.subr.bf16.mxu0 %v3820
        %5124 = vmatpush1.bf16.msra.mxu0 %v3819
        %5125 = vmatprep.subr.bf16.mxu0 %v3823
        %5126 = vmatpush1.bf16.msra.mxu0 %v3822
        %5127 = vmatprep.subr.bf16.mxu0 %v3826
        %5128 = vmatpush1.bf16.msra.mxu0 %v3825
        %5129 = vmatprep.subr.bf16.mxu0 %v3829
        %5130 = vmatpush1.bf16.msra.mxu0 %v3828
        %5131 = vmatprep.subr.bf16.mxu0 %v3832
        %5132 = vmatpush1.bf16.msra.mxu0 %v3831
        %5133 = vmatprep.subr.bf16.mxu0 %v3835
        %5134 = vmatpush1.bf16.msra.mxu0 %v3834
        %5135 = vmatprep.subr.bf16.mxu0 %v3838
        %5136 = vmatpush1.bf16.msra.mxu0 %v3837
        %5137 = vmatprep.mubr.bf16.mxu0 %v1359
        %5138 = vmatmul.mubr.bf16.gmra.mrb[0].mxu0 %v1358
        %v5139 = vpop.f32.mrb[0].mxu0
        %v5140 = vadd.f32 %v5069, %v5139
        %v5141 = vpop.f32.mrb[0].mxu0
        %v5142 = vadd.f32 %v5071, %v5141
        %v5143 = vpop.f32.mrb[0].mxu0
        %v5144 = vadd.f32 %v5073, %v5143
        %v5145 = vpop.f32.mrb[0].mxu0
        %v5146 = vadd.f32 %v5075, %v5145
        %5147 = vmatprep.mubr.bf16.mxu0 %v1383
        %5148 = vmatmul.mubr.bf16.gmra.mrb[0].mxu0 %v1382
        %v5149 = vpop.f32.mrb[0].mxu0
        %v5150 = vadd.f32 %v5079, %v5149
        %v5151 = vpop.f32.mrb[0].mxu0
        %v5152 = vadd.f32 %v5081, %v5151
        %v5153 = vpop.f32.mrb[0].mxu0
        %v5154 = vadd.f32 %v5083, %v5153
        %v5155 = vpop.f32.mrb[0].mxu0
        %v5156 = vadd.f32 %v5085, %v5155
        %5157 = vmatprep.mubr.bf16.mxu0 %v1407
        %5158 = vmatmul.mubr.bf16.gmra.mrb[0].mxu0 %v1406
        %v5159 = vpop.f32.mrb[0].mxu0
        %v5160 = vadd.f32 %v5089, %v5159
        %v5161 = vpop.f32.mrb[0].mxu0
        %v5162 = vadd.f32 %v5091, %v5161
        %v5163 = vpop.f32.mrb[0].mxu0
        %v5164 = vadd.f32 %v5093, %v5163
        %v5165 = vpop.f32.mrb[0].mxu0
        %v5166 = vadd.f32 %v5095, %v5165
        %5167 = vmatprep.mubr.bf16.mxu0 %v1431
        %5168 = vmatmul.mubr.bf16.gmra.mrb[0].mxu0 %v1430
        %v5169 = vpop.f32.mrb[0].mxu0
        %v5170 = vadd.f32 %v5099, %v5169
        %v5171 = vpop.f32.mrb[0].mxu0
        %v5172 = vadd.f32 %v5101, %v5171
        %v5173 = vpop.f32.mrb[0].mxu0
        %v5174 = vpop.f32.mrb[0].mxu0
        %5175 = vdwg.mxu0
        %5176 = vmatprep.subr.bf16.mxu0 %v3841
        %5177 = vmatpush1.bf16.msra.mxu0 %v3840
        %5178 = vmatprep.subr.bf16.mxu0 %v3844
        %5179 = vmatpush1.bf16.msra.mxu0 %v3843
        %5180 = vmatprep.subr.bf16.mxu0 %v3847
        %5181 = vmatpush1.bf16.msra.mxu0 %v3846
        %5182 = vmatprep.subr.bf16.mxu0 %v3850
        %5183 = vmatpush1.bf16.msra.mxu0 %v3849
        %5184 = vmatprep.subr.bf16.mxu0 %v3853
        %5185 = vmatpush1.bf16.msra.mxu0 %v3852
        %5186 = vmatprep.subr.bf16.mxu0 %v3856
        %5187 = vmatpush1.bf16.msra.mxu0 %v3855
        %5188 = vmatprep.subr.bf16.mxu0 %v3859
        %5189 = vmatpush1.bf16.msra.mxu0 %v3858
        %5190 = vmatprep.subr.bf16.mxu0 %v3862
        %5191 = vmatpush1.bf16.msra.mxu0 %v3861
        %5192 = vmatprep.subr.bf16.mxu0 %v3865
        %5193 = vmatpush1.bf16.msra.mxu0 %v3864
        %5194 = vmatprep.subr.bf16.mxu0 %v3868
        %5195 = vmatpush1.bf16.msra.mxu0 %v3867
        %5196 = vmatprep.subr.bf16.mxu0 %v3871
        %5197 = vmatpush1.bf16.msra.mxu0 %v3870
        %5198 = vmatprep.subr.bf16.mxu0 %v3874
        %5199 = vmatpush1.bf16.msra.mxu0 %v3873
        %5200 = vmatprep.subr.bf16.mxu0 %v3877
        %5201 = vmatpush1.bf16.msra.mxu0 %v3876
        %5202 = vmatprep.subr.bf16.mxu0 %v3880
        %5203 = vmatpush1.bf16.msra.mxu0 %v3879
        %5204 = vmatprep.subr.bf16.mxu0 %v3883
        %5205 = vmatpush1.bf16.msra.mxu0 %v3882
        %5206 = vmatprep.subr.bf16.mxu0 %v3886
        %5207 = vmatpush1.bf16.msra.mxu0 %v3885
        %5208 = vmatprep.mubr.bf16.mxu0 %v1361
        %5209 = vmatmul.mubr.bf16.gmra.mrb[0].mxu0 %v1360
        %v5210 = vpop.f32.mrb[0].mxu0
        %v5211 = vadd.f32 %v5140, %v5210
        %v5212 = vpop.f32.mrb[0].mxu0
        %v5213 = vadd.f32 %v5142, %v5212
        %v5214 = vpop.f32.mrb[0].mxu0
        %v5215 = vadd.f32 %v5144, %v5214
        %v5216 = vpop.f32.mrb[0].mxu0
        %v5217 = vadd.f32 %v5146, %v5216
        %5218 = vmatprep.mubr.bf16.mxu0 %v1385
        %5219 = vmatmul.mubr.bf16.gmra.mrb[0].mxu0 %v1384
        %v5220 = vpop.f32.mrb[0].mxu0
        %v5221 = vadd.f32 %v5150, %v5220
        %v5222 = vpop.f32.mrb[0].mxu0
        %v5223 = vadd.f32 %v5152, %v5222
        %v5224 = vpop.f32.mrb[0].mxu0
        %v5225 = vadd.f32 %v5154, %v5224
        %v5226 = vpop.f32.mrb[0].mxu0
        %v5227 = vadd.f32 %v5156, %v5226
        %5228 = vmatprep.mubr.bf16.mxu0 %v1409
        %5229 = vmatmul.mubr.bf16.gmra.mrb[0].mxu0 %v1408
        %v5230 = vpop.f32.mrb[0].mxu0
        %v5231 = vadd.f32 %v5160, %v5230
        %v5232 = vpop.f32.mrb[0].mxu0
        %v5233 = vadd.f32 %v5162, %v5232
        %v5234 = vpop.f32.mrb[0].mxu0
        %v5235 = vadd.f32 %v5164, %v5234
        %v5236 = vpop.f32.mrb[0].mxu0
        %v5237 = vadd.f32 %v5166, %v5236
        %5238 = vmatprep.mubr.bf16.mxu0 %v1433
        %5239 = vmatmul.mubr.bf16.gmra.mrb[0].mxu0 %v1432
        %v5240 = vpop.f32.mrb[0].mxu0
        %v5241 = vadd.f32 %v5170, %v5240
        %v5242 = vpop.f32.mrb[0].mxu0
        %v5243 = vadd.f32 %v5172, %v5242
        %v5244 = vpop.f32.mrb[0].mxu0
        %v5245 = vpop.f32.mrb[0].mxu0
        %5246 = vdwg.mxu0
        %5247 = vmatprep.subr.bf16.mxu0 %v3889
        %5248 = vmatpush1.bf16.msra.mxu0 %v3888
        %5249 = vmatprep.subr.bf16.mxu0 %v3892
        %5250 = vmatpush1.bf16.msra.mxu0 %v3891
        %5251 = vmatprep.subr.bf16.mxu0 %v3895
        %5252 = vmatpush1.bf16.msra.mxu0 %v3894
        %5253 = vmatprep.subr.bf16.mxu0 %v3898
        %5254 = vmatpush1.bf16.msra.mxu0 %v3897
        %5255 = vmatprep.subr.bf16.mxu0 %v3901
        %5256 = vmatpush1.bf16.msra.mxu0 %v3900
        %5257 = vmatprep.subr.bf16.mxu0 %v3904
        %5258 = vmatpush1.bf16.msra.mxu0 %v3903
        %5259 = vmatprep.subr.bf16.mxu0 %v3907
        %5260 = vmatpush1.bf16.msra.mxu0 %v3906
        %5261 = vmatprep.subr.bf16.mxu0 %v3910
        %5262 = vmatpush1.bf16.msra.mxu0 %v3909
        %5263 = vmatprep.subr.bf16.mxu0 %v3913
        %5264 = vmatpush1.bf16.msra.mxu0 %v3912
        %5265 = vmatprep.subr.bf16.mxu0 %v3916
        %5266 = vmatpush1.bf16.msra.mxu0 %v3915
        %5267 = vmatprep.subr.bf16.mxu0 %v3919
        %5268 = vmatpush1.bf16.msra.mxu0 %v3918
        %5269 = vmatprep.subr.bf16.mxu0 %v3922
        %5270 = vmatpush1.bf16.msra.mxu0 %v3921
        %5271 = vmatprep.subr.bf16.mxu0 %v3925
        %5272 = vmatpush1.bf16.msra.mxu0 %v3924
        %5273 = vmatprep.subr.bf16.mxu0 %v3928
        %5274 = vmatpush1.bf16.msra.mxu0 %v3927
        %5275 = vmatprep.subr.bf16.mxu0 %v3931
        %5276 = vmatpush1.bf16.msra.mxu0 %v3930
        %5277 = vmatprep.subr.bf16.mxu0 %v3934
        %5278 = vmatpush1.bf16.msra.mxu0 %v3933
        %5279 = vmatprep.mubr.bf16.mxu0 %v1363
        %5280 = vmatmul.mubr.bf16.gmra.mrb[0].mxu0 %v1362
        %v5281 = vpop.f32.mrb[0].mxu0
        %v5282 = vadd.f32 %v5211, %v5281
        %v5283 = vpop.f32.mrb[0].mxu0
        %v5284 = vadd.f32 %v5213, %v5283
        %v5285 = vpop.f32.mrb[0].mxu0
        %v5286 = vadd.f32 %v5215, %v5285
        %v5287 = vpop.f32.mrb[0].mxu0
        %v5288 = vadd.f32 %v5217, %v5287
        %5289 = vmatprep.mubr.bf16.mxu0 %v1387
        %5290 = vmatmul.mubr.bf16.gmra.mrb[0].mxu0 %v1386
        %v5291 = vpop.f32.mrb[0].mxu0
        %v5292 = vadd.f32 %v5221, %v5291
        %v5293 = vpop.f32.mrb[0].mxu0
        %v5294 = vadd.f32 %v5223, %v5293
        %v5295 = vpop.f32.mrb[0].mxu0
        %v5296 = vadd.f32 %v5225, %v5295
        %v5297 = vpop.f32.mrb[0].mxu0
        %v5298 = vadd.f32 %v5227, %v5297
        %5299 = vmatprep.mubr.bf16.mxu0 %v1411
        %5300 = vmatmul.mubr.bf16.gmra.mrb[0].mxu0 %v1410
        %v5301 = vpop.f32.mrb[0].mxu0
        %v5302 = vadd.f32 %v5231, %v5301
        %v5303 = vpop.f32.mrb[0].mxu0
        %v5304 = vadd.f32 %v5233, %v5303
        %v5305 = vpop.f32.mrb[0].mxu0
        %v5306 = vadd.f32 %v5235, %v5305
        %v5307 = vpop.f32.mrb[0].mxu0
        %v5308 = vadd.f32 %v5237, %v5307
        %5309 = vmatprep.mubr.bf16.mxu0 %v1435
        %5310 = vmatmul.mubr.bf16.gmra.mrb[0].mxu0 %v1434
        %v5311 = vpop.f32.mrb[0].mxu0
        %v5312 = vadd.f32 %v5241, %v5311
        %v5313 = vpop.f32.mrb[0].mxu0
        %v5314 = vadd.f32 %v5243, %v5313
        %v5315 = vpop.f32.mrb[0].mxu0
        %v5316 = vpop.f32.mrb[0].mxu0
        %5317 = vdwg.mxu0
        %5318 = vmatprep.subr.bf16.mxu0 %v3937
        %5319 = vmatpush1.bf16.msra.mxu0 %v3936
        %5320 = vmatprep.subr.bf16.mxu0 %v3940
        %5321 = vmatpush1.bf16.msra.mxu0 %v3939
        %5322 = vmatprep.subr.bf16.mxu0 %v3943
        %5323 = vmatpush1.bf16.msra.mxu0 %v3942
        %5324 = vmatprep.subr.bf16.mxu0 %v3946
        %5325 = vmatpush1.bf16.msra.mxu0 %v3945
        %5326 = vmatprep.subr.bf16.mxu0 %v3949
        %5327 = vmatpush1.bf16.msra.mxu0 %v3948
        %5328 = vmatprep.subr.bf16.mxu0 %v3952
        %5329 = vmatpush1.bf16.msra.mxu0 %v3951
        %5330 = vmatprep.subr.bf16.mxu0 %v3955
        %5331 = vmatpush1.bf16.msra.mxu0 %v3954
        %5332 = vmatprep.subr.bf16.mxu0 %v3958
        %5333 = vmatpush1.bf16.msra.mxu0 %v3957
        %5334 = vmatprep.subr.bf16.mxu0 %v3961
        %5335 = vmatpush1.bf16.msra.mxu0 %v3960
        %5336 = vmatprep.subr.bf16.mxu0 %v3964
        %5337 = vmatpush1.bf16.msra.mxu0 %v3963
        %5338 = vmatprep.subr.bf16.mxu0 %v3967
        %5339 = vmatpush1.bf16.msra.mxu0 %v3966
        %5340 = vmatprep.subr.bf16.mxu0 %v3970
        %5341 = vmatpush1.bf16.msra.mxu0 %v3969
        %5342 = vmatprep.subr.bf16.mxu0 %v3973
        %5343 = vmatpush1.bf16.msra.mxu0 %v3972
        %5344 = vmatprep.subr.bf16.mxu0 %v3976
        %5345 = vmatpush1.bf16.msra.mxu0 %v3975
        %5346 = vmatprep.subr.bf16.mxu0 %v3979
        %5347 = vmatpush1.bf16.msra.mxu0 %v3978
        %5348 = vmatprep.subr.bf16.mxu0 %v3982
        %5349 = vmatpush1.bf16.msra.mxu0 %v3981
        %5350 = vmatprep.mubr.bf16.mxu0 %v1365
        %5351 = vmatmul.mubr.bf16.gmra.mrb[0].mxu0 %v1364
        %v5352 = vpop.f32.mrb[0].mxu0
        %v5353 = vadd.f32 %v5282, %v5352
        %v5354 = vpop.f32.mrb[0].mxu0
        %v5355 = vadd.f32 %v5284, %v5354
        %v5356 = vpop.f32.mrb[0].mxu0
        %v5357 = vadd.f32 %v5286, %v5356
        %v5358 = vpop.f32.mrb[0].mxu0
        %v5359 = vadd.f32 %v5288, %v5358
        %5360 = vmatprep.mubr.bf16.mxu0 %v1389
        %5361 = vmatmul.mubr.bf16.gmra.mrb[0].mxu0 %v1388
        %v5362 = vpop.f32.mrb[0].mxu0
        %v5363 = vadd.f32 %v5292, %v5362
        %v5364 = vpop.f32.mrb[0].mxu0
        %v5365 = vadd.f32 %v5294, %v5364
        %v5366 = vpop.f32.mrb[0].mxu0
        %v5367 = vadd.f32 %v5296, %v5366
        %v5368 = vpop.f32.mrb[0].mxu0
        %v5369 = vadd.f32 %v5298, %v5368
        %5370 = vmatprep.mubr.bf16.mxu0 %v1413
        %5371 = vmatmul.mubr.bf16.gmra.mrb[0].mxu0 %v1412
        %v5372 = vpop.f32.mrb[0].mxu0
        %v5373 = vadd.f32 %v5302, %v5372
        %v5374 = vpop.f32.mrb[0].mxu0
        %v5375 = vadd.f32 %v5304, %v5374
        %v5376 = vpop.f32.mrb[0].mxu0
        %v5377 = vadd.f32 %v5306, %v5376
        %v5378 = vpop.f32.mrb[0].mxu0
        %v5379 = vadd.f32 %v5308, %v5378
        %5380 = vmatprep.mubr.bf16.mxu0 %v1437
        %5381 = vmatmul.mubr.bf16.gmra.mrb[0].mxu0 %v1436
        %v5382 = vpop.f32.mrb[0].mxu0
        %v5383 = vadd.f32 %v5312, %v5382
        %v5384 = vpop.f32.mrb[0].mxu0
        %v5385 = vadd.f32 %v5314, %v5384
        %v5386 = vpop.f32.mrb[0].mxu0
        %v5387 = vpop.f32.mrb[0].mxu0
        %5388 = vdwg.mxu0
        %5389 = vmatprep.subr.bf16.mxu0 %v3985
        %5390 = vmatpush1.bf16.msra.mxu0 %v3984
        %5391 = vmatprep.subr.bf16.mxu0 %v3988
        %5392 = vmatpush1.bf16.msra.mxu0 %v3987
        %5393 = vmatprep.subr.bf16.mxu0 %v3991
        %5394 = vmatpush1.bf16.msra.mxu0 %v3990
        %5395 = vmatprep.subr.bf16.mxu0 %v3994
        %5396 = vmatpush1.bf16.msra.mxu0 %v3993
        %5397 = vmatprep.subr.bf16.mxu0 %v3997
        %5398 = vmatpush1.bf16.msra.mxu0 %v3996
        %5399 = vmatprep.subr.bf16.mxu0 %v4000
        %5400 = vmatpush1.bf16.msra.mxu0 %v3999
        %5401 = vmatprep.subr.bf16.mxu0 %v4003
        %5402 = vmatpush1.bf16.msra.mxu0 %v4002
        %5403 = vmatprep.subr.bf16.mxu0 %v4006
        %5404 = vmatpush1.bf16.msra.mxu0 %v4005
        %5405 = vmatprep.subr.bf16.mxu0 %v4009
        %5406 = vmatpush1.bf16.msra.mxu0 %v4008
        %5407 = vmatprep.subr.bf16.mxu0 %v4012
        %5408 = vmatpush1.bf16.msra.mxu0 %v4011
        %5409 = vmatprep.subr.bf16.mxu0 %v4015
        %5410 = vmatpush1.bf16.msra.mxu0 %v4014
        %5411 = vmatprep.subr.bf16.mxu0 %v4018
        %5412 = vmatpush1.bf16.msra.mxu0 %v4017
        %5413 = vmatprep.subr.bf16.mxu0 %v4021
        %5414 = vmatpush1.bf16.msra.mxu0 %v4020
        %5415 = vmatprep.subr.bf16.mxu0 %v4024
        %5416 = vmatpush1.bf16.msra.mxu0 %v4023
        %5417 = vmatprep.subr.bf16.mxu0 %v4027
        %5418 = vmatpush1.bf16.msra.mxu0 %v4026
        %5419 = vmatprep.subr.bf16.mxu0 %v4030
        %5420 = vmatpush1.bf16.msra.mxu0 %v4029
        %5421 = vmatprep.mubr.bf16.mxu0 %v1367
        %5422 = vmatmul.mubr.bf16.gmra.mrb[0].mxu0 %v1366
        %v5423 = vpop.f32.mrb[0].mxu0
        %v5424 = vadd.f32 %v5353, %v5423
        %v5425 = vpop.f32.mrb[0].mxu0
        %v5426 = vadd.f32 %v5355, %v5425
        %v5427 = vpop.f32.mrb[0].mxu0
        %v5428 = vadd.f32 %v5357, %v5427
        %v5429 = vpop.f32.mrb[0].mxu0
        %v5430 = vadd.f32 %v5359, %v5429
        %5431 = vmatprep.mubr.bf16.mxu0 %v1391
        %5432 = vmatmul.mubr.bf16.gmra.mrb[0].mxu0 %v1390
        %v5433 = vpop.f32.mrb[0].mxu0
        %v5434 = vadd.f32 %v5363, %v5433
        %v5435 = vpop.f32.mrb[0].mxu0
        %v5436 = vadd.f32 %v5365, %v5435
        %v5437 = vpop.f32.mrb[0].mxu0
        %v5438 = vadd.f32 %v5367, %v5437
        %v5439 = vpop.f32.mrb[0].mxu0
        %v5440 = vadd.f32 %v5369, %v5439
        %5441 = vmatprep.mubr.bf16.mxu0 %v1415
        %5442 = vmatmul.mubr.bf16.gmra.mrb[0].mxu0 %v1414
        %v5443 = vpop.f32.mrb[0].mxu0
        %v5444 = vadd.f32 %v5373, %v5443
        %v5445 = vpop.f32.mrb[0].mxu0
        %v5446 = vadd.f32 %v5375, %v5445
        %v5447 = vpop.f32.mrb[0].mxu0
        %v5448 = vadd.f32 %v5377, %v5447
        %v5449 = vpop.f32.mrb[0].mxu0
        %v5450 = vadd.f32 %v5379, %v5449
        %5451 = vmatprep.mubr.bf16.mxu0 %v1439
        %5452 = vmatmul.mubr.bf16.gmra.mrb[0].mxu0 %v1438
        %v5453 = vpop.f32.mrb[0].mxu0
        %v5454 = vadd.f32 %v5383, %v5453
        %v5455 = vpop.f32.mrb[0].mxu0
        %v5456 = vadd.f32 %v5385, %v5455
        %v5457 = vpop.f32.mrb[0].mxu0
        %v5458 = vpop.f32.mrb[0].mxu0
        %5459 = vdwg.mxu0
        %5460 = vmatprep.subr.bf16.mxu0 0
        %5461 = vmatpush1.bf16.msra.mxu0 %v3458
        %5462 = vmatprep.subr.bf16.mxu0 0
        %5463 = vmatpush1.bf16.msra.mxu0 %v3461
        %5464 = vmatprep.subr.bf16.mxu0 0
        %5465 = vmatpush1.bf16.msra.mxu0 %v3464
        %5466 = vmatprep.subr.bf16.mxu0 0
        %5467 = vmatpush1.bf16.msra.mxu0 %v3467
        %5468 = vmatprep.subr.bf16.mxu0 0
        %5469 = vmatpush1.bf16.msra.mxu0 %v3470
        %5470 = vmatprep.subr.bf16.mxu0 0
        %5471 = vmatpush1.bf16.msra.mxu0 %v3473
        %5472 = vmatprep.subr.bf16.mxu0 0
        %5473 = vmatpush1.bf16.msra.mxu0 %v3476
        %5474 = vmatprep.subr.bf16.mxu0 0
        %5475 = vmatpush1.bf16.msra.mxu0 %v3479
        %5476 = vmatprep.subr.bf16.mxu0 0
        %5477 = vmatpush1.bf16.msra.mxu0 %v3482
        %5478 = vmatprep.subr.bf16.mxu0 0
        %5479 = vmatpush1.bf16.msra.mxu0 %v3485
        %5480 = vmatprep.subr.bf16.mxu0 0
        %5481 = vmatpush1.bf16.msra.mxu0 %v3488
        %5482 = vmatprep.subr.bf16.mxu0 0
        %5483 = vmatpush1.bf16.msra.mxu0 %v3491
        %5484 = vmatprep.subr.bf16.mxu0 0
        %5485 = vmatpush1.bf16.msra.mxu0 %v3494
        %5486 = vmatprep.subr.bf16.mxu0 0
        %5487 = vmatpush1.bf16.msra.mxu0 %v3497
        %5488 = vmatprep.subr.bf16.mxu0 0
        %5489 = vmatpush1.bf16.msra.mxu0 %v3500
        %5490 = vmatprep.subr.bf16.mxu0 0
        %5491 = vmatpush1.bf16.msra.mxu0 %v3503
        %5492 = vmatprep.mubr.bf16.mxu0 %v1345
        %5493 = vmatmul.mubr.bf16.gmra.mrb[0].mxu0 %v1344
        %v5494 = vpop.f32.mrb[0].mxu0
        %v5495 = vadd.f32 %v1088, %v5494
        %v5496 = vpop.f32.mrb[0].mxu0
        %v5497 = vpop.f32.mrb[0].mxu0
        %v5498 = vadd.f32 %v1088, %v5497
        %v5499 = vpop.f32.mrb[0].mxu0
        %5500 = vmatprep.mubr.bf16.mxu0 %v1369
        %5501 = vmatmul.mubr.bf16.gmra.mrb[0].mxu0 %v1368
        %v5502 = vpop.f32.mrb[0].mxu0
        %v5503 = vadd.f32 %v1088, %v5502
        %v5504 = vpop.f32.mrb[0].mxu0
        %v5505 = vpop.f32.mrb[0].mxu0
        %v5506 = vadd.f32 %v1088, %v5505
        %v5507 = vpop.f32.mrb[0].mxu0
        %5508 = vmatprep.mubr.bf16.mxu0 %v1393
        %5509 = vmatmul.mubr.bf16.gmra.mrb[0].mxu0 %v1392
        %v5510 = vpop.f32.mrb[0].mxu0
        %v5511 = vadd.f32 %v1088, %v5510
        %v5512 = vpop.f32.mrb[0].mxu0
        %v5513 = vpop.f32.mrb[0].mxu0
        %v5514 = vadd.f32 %v1088, %v5513
        %v5515 = vpop.f32.mrb[0].mxu0
        %5516 = vmatprep.mubr.bf16.mxu0 %v1417
        %5517 = vmatmul.mubr.bf16.gmra.mrb[0].mxu0 %v1416
        %v5518 = vpop.f32.mrb[0].mxu0
        %v5519 = vadd.f32 %v1088, %v5518
        %v5520 = vpop.f32.mrb[0].mxu0
        %v5521 = vpop.f32.mrb[0].mxu0
        %v5522 = vpop.f32.mrb[0].mxu0
        %5523 = vdwg.mxu0
        %5524 = vmatprep.subr.bf16.mxu0 0
        %5525 = vmatpush1.bf16.msra.mxu0 %v3506
        %5526 = vmatprep.subr.bf16.mxu0 0
        %5527 = vmatpush1.bf16.msra.mxu0 %v3509
        %5528 = vmatprep.subr.bf16.mxu0 0
        %5529 = vmatpush1.bf16.msra.mxu0 %v3512
        %5530 = vmatprep.subr.bf16.mxu0 0
        %5531 = vmatpush1.bf16.msra.mxu0 %v3515
        %5532 = vmatprep.subr.bf16.mxu0 0
        %5533 = vmatpush1.bf16.msra.mxu0 %v3518
        %5534 = vmatprep.subr.bf16.mxu0 0
        %5535 = vmatpush1.bf16.msra.mxu0 %v3521
        %5536 = vmatprep.subr.bf16.mxu0 0
        %5537 = vmatpush1.bf16.msra.mxu0 %v3524
        %5538 = vmatprep.subr.bf16.mxu0 0
        %5539 = vmatpush1.bf16.msra.mxu0 %v3527
        %5540 = vmatprep.subr.bf16.mxu0 0
        %5541 = vmatpush1.bf16.msra.mxu0 %v3530
        %5542 = vmatprep.subr.bf16.mxu0 0
        %5543 = vmatpush1.bf16.msra.mxu0 %v3533
        %5544 = vmatprep.subr.bf16.mxu0 0
        %5545 = vmatpush1.bf16.msra.mxu0 %v3536
        %5546 = vmatprep.subr.bf16.mxu0 0
        %5547 = vmatpush1.bf16.msra.mxu0 %v3539
        %5548 = vmatprep.subr.bf16.mxu0 0
        %5549 = vmatpush1.bf16.msra.mxu0 %v3542
        %5550 = vmatprep.subr.bf16.mxu0 0
        %5551 = vmatpush1.bf16.msra.mxu0 %v3545
        %5552 = vmatprep.subr.bf16.mxu0 0
        %5553 = vmatpush1.bf16.msra.mxu0 %v3548
        %5554 = vmatprep.subr.bf16.mxu0 0
        %5555 = vmatpush1.bf16.msra.mxu0 %v3551
        %5556 = vmatprep.mubr.bf16.mxu0 %v1347
        %5557 = vmatmul.mubr.bf16.gmra.mrb[0].mxu0 %v1346
        %v5558 = vpop.f32.mrb[0].mxu0
        %v5559 = vadd.f32 %v5495, %v5558
        %v5560 = vpop.f32.mrb[0].mxu0
        %v5561 = vpop.f32.mrb[0].mxu0
        %v5562 = vadd.f32 %v5498, %v5561
        %v5563 = vpop.f32.mrb[0].mxu0
        %5564 = vmatprep.mubr.bf16.mxu0 %v1371
        %5565 = vmatmul.mubr.bf16.gmra.mrb[0].mxu0 %v1370
        %v5566 = vpop.f32.mrb[0].mxu0
        %v5567 = vadd.f32 %v5503, %v5566
        %v5568 = vpop.f32.mrb[0].mxu0
        %v5569 = vpop.f32.mrb[0].mxu0
        %v5570 = vadd.f32 %v5506, %v5569
        %v5571 = vpop.f32.mrb[0].mxu0
        %5572 = vmatprep.mubr.bf16.mxu0 %v1395
        %5573 = vmatmul.mubr.bf16.gmra.mrb[0].mxu0 %v1394
        %v5574 = vpop.f32.mrb[0].mxu0
        %v5575 = vadd.f32 %v5511, %v5574
        %v5576 = vpop.f32.mrb[0].mxu0
        %v5577 = vpop.f32.mrb[0].mxu0
        %v5578 = vadd.f32 %v5514, %v5577
        %v5579 = vpop.f32.mrb[0].mxu0
        %5580 = vmatprep.mubr.bf16.mxu0 %v1419
        %5581 = vmatmul.mubr.bf16.gmra.mrb[0].mxu0 %v1418
        %v5582 = vpop.f32.mrb[0].mxu0
        %v5583 = vadd.f32 %v5519, %v5582
        %v5584 = vpop.f32.mrb[0].mxu0
        %v5585 = vpop.f32.mrb[0].mxu0
        %v5586 = vpop.f32.mrb[0].mxu0
        %5587 = vdwg.mxu0
        %5588 = vmatprep.subr.bf16.mxu0 0
        %5589 = vmatpush1.bf16.msra.mxu0 %v3554
        %5590 = vmatprep.subr.bf16.mxu0 0
        %5591 = vmatpush1.bf16.msra.mxu0 %v3557
        %5592 = vmatprep.subr.bf16.mxu0 0
        %5593 = vmatpush1.bf16.msra.mxu0 %v3560
        %5594 = vmatprep.subr.bf16.mxu0 0
        %5595 = vmatpush1.bf16.msra.mxu0 %v3563
        %5596 = vmatprep.subr.bf16.mxu0 0
        %5597 = vmatpush1.bf16.msra.mxu0 %v3566
        %5598 = vmatprep.subr.bf16.mxu0 0
        %5599 = vmatpush1.bf16.msra.mxu0 %v3569
        %5600 = vmatprep.subr.bf16.mxu0 0
        %5601 = vmatpush1.bf16.msra.mxu0 %v3572
        %5602 = vmatprep.subr.bf16.mxu0 0
        %5603 = vmatpush1.bf16.msra.mxu0 %v3575
        %5604 = vmatprep.subr.bf16.mxu0 0
        %5605 = vmatpush1.bf16.msra.mxu0 %v3578
        %5606 = vmatprep.subr.bf16.mxu0 0
        %5607 = vmatpush1.bf16.msra.mxu0 %v3581
        %5608 = vmatprep.subr.bf16.mxu0 0
        %5609 = vmatpush1.bf16.msra.mxu0 %v3584
        %5610 = vmatprep.subr.bf16.mxu0 0
        %5611 = vmatpush1.bf16.msra.mxu0 %v3587
        %5612 = vmatprep.subr.bf16.mxu0 0
        %5613 = vmatpush1.bf16.msra.mxu0 %v3590
        %5614 = vmatprep.subr.bf16.mxu0 0
        %5615 = vmatpush1.bf16.msra.mxu0 %v3593
        %5616 = vmatprep.subr.bf16.mxu0 0
        %5617 = vmatpush1.bf16.msra.mxu0 %v3596
        %5618 = vmatprep.subr.bf16.mxu0 0
        %5619 = vmatpush1.bf16.msra.mxu0 %v3599
        %5620 = vmatprep.mubr.bf16.mxu0 %v1349
        %5621 = vmatmul.mubr.bf16.gmra.mrb[0].mxu0 %v1348
        %v5622 = vpop.f32.mrb[0].mxu0
        %v5623 = vadd.f32 %v5559, %v5622
        %v5624 = vpop.f32.mrb[0].mxu0
        %v5625 = vpop.f32.mrb[0].mxu0
        %v5626 = vadd.f32 %v5562, %v5625
        %v5627 = vpop.f32.mrb[0].mxu0
        %5628 = vmatprep.mubr.bf16.mxu0 %v1373
        %5629 = vmatmul.mubr.bf16.gmra.mrb[0].mxu0 %v1372
        %v5630 = vpop.f32.mrb[0].mxu0
        %v5631 = vadd.f32 %v5567, %v5630
        %v5632 = vpop.f32.mrb[0].mxu0
        %v5633 = vpop.f32.mrb[0].mxu0
        %v5634 = vadd.f32 %v5570, %v5633
        %v5635 = vpop.f32.mrb[0].mxu0
        %5636 = vmatprep.mubr.bf16.mxu0 %v1397
        %5637 = vmatmul.mubr.bf16.gmra.mrb[0].mxu0 %v1396
        %v5638 = vpop.f32.mrb[0].mxu0
        %v5639 = vadd.f32 %v5575, %v5638
        %v5640 = vpop.f32.mrb[0].mxu0
        %v5641 = vpop.f32.mrb[0].mxu0
        %v5642 = vadd.f32 %v5578, %v5641
        %v5643 = vpop.f32.mrb[0].mxu0
        %5644 = vmatprep.mubr.bf16.mxu0 %v1421
        %5645 = vmatmul.mubr.bf16.gmra.mrb[0].mxu0 %v1420
        %v5646 = vpop.f32.mrb[0].mxu0
        %v5647 = vadd.f32 %v5583, %v5646
        %v5648 = vpop.f32.mrb[0].mxu0
        %v5649 = vpop.f32.mrb[0].mxu0
        %v5650 = vpop.f32.mrb[0].mxu0
        %5651 = vdwg.mxu0
        %5652 = vmatprep.subr.bf16.mxu0 0
        %5653 = vmatpush1.bf16.msra.mxu0 %v3602
        %5654 = vmatprep.subr.bf16.mxu0 0
        %5655 = vmatpush1.bf16.msra.mxu0 %v3605
        %5656 = vmatprep.subr.bf16.mxu0 0
        %5657 = vmatpush1.bf16.msra.mxu0 %v3608
        %5658 = vmatprep.subr.bf16.mxu0 0
        %5659 = vmatpush1.bf16.msra.mxu0 %v3611
        %5660 = vmatprep.subr.bf16.mxu0 0
        %5661 = vmatpush1.bf16.msra.mxu0 %v3614
        %5662 = vmatprep.subr.bf16.mxu0 0
        %5663 = vmatpush1.bf16.msra.mxu0 %v3617
        %5664 = vmatprep.subr.bf16.mxu0 0
        %5665 = vmatpush1.bf16.msra.mxu0 %v3620
        %5666 = vmatprep.subr.bf16.mxu0 0
        %5667 = vmatpush1.bf16.msra.mxu0 %v3623
        %5668 = vmatprep.subr.bf16.mxu0 0
        %5669 = vmatpush1.bf16.msra.mxu0 %v3626
        %5670 = vmatprep.subr.bf16.mxu0 0
        %5671 = vmatpush1.bf16.msra.mxu0 %v3629
        %5672 = vmatprep.subr.bf16.mxu0 0
        %5673 = vmatpush1.bf16.msra.mxu0 %v3632
        %5674 = vmatprep.subr.bf16.mxu0 0
        %5675 = vmatpush1.bf16.msra.mxu0 %v3635
        %5676 = vmatprep.subr.bf16.mxu0 0
        %5677 = vmatpush1.bf16.msra.mxu0 %v3638
        %5678 = vmatprep.subr.bf16.mxu0 0
        %5679 = vmatpush1.bf16.msra.mxu0 %v3641
        %5680 = vmatprep.subr.bf16.mxu0 0
        %5681 = vmatpush1.bf16.msra.mxu0 %v3644
        %5682 = vmatprep.subr.bf16.mxu0 0
        %5683 = vmatpush1.bf16.msra.mxu0 %v3647
        %5684 = vmatprep.mubr.bf16.mxu0 %v1351
        %5685 = vmatmul.mubr.bf16.gmra.mrb[0].mxu0 %v1350
        %v5686 = vpop.f32.mrb[0].mxu0
        %v5687 = vadd.f32 %v5623, %v5686
        %v5688 = vpop.f32.mrb[0].mxu0
        %v5689 = vpop.f32.mrb[0].mxu0
        %v5690 = vadd.f32 %v5626, %v5689
        %v5691 = vpop.f32.mrb[0].mxu0
        %5692 = vmatprep.mubr.bf16.mxu0 %v1375
        %5693 = vmatmul.mubr.bf16.gmra.mrb[0].mxu0 %v1374
        %v5694 = vpop.f32.mrb[0].mxu0
        %v5695 = vadd.f32 %v5631, %v5694
        %v5696 = vpop.f32.mrb[0].mxu0
        %v5697 = vpop.f32.mrb[0].mxu0
        %v5698 = vadd.f32 %v5634, %v5697
        %v5699 = vpop.f32.mrb[0].mxu0
        %5700 = vmatprep.mubr.bf16.mxu0 %v1399
        %5701 = vmatmul.mubr.bf16.gmra.mrb[0].mxu0 %v1398
        %v5702 = vpop.f32.mrb[0].mxu0
        %v5703 = vadd.f32 %v5639, %v5702
        %v5704 = vpop.f32.mrb[0].mxu0
        %v5705 = vpop.f32.mrb[0].mxu0
        %v5706 = vadd.f32 %v5642, %v5705
        %v5707 = vpop.f32.mrb[0].mxu0
        %5708 = vmatprep.mubr.bf16.mxu0 %v1423
        %5709 = vmatmul.mubr.bf16.gmra.mrb[0].mxu0 %v1422
        %v5710 = vpop.f32.mrb[0].mxu0
        %v5711 = vadd.f32 %v5647, %v5710
        %v5712 = vpop.f32.mrb[0].mxu0
        %v5713 = vpop.f32.mrb[0].mxu0
        %v5714 = vpop.f32.mrb[0].mxu0
        %5715 = vdwg.mxu0
        %5716 = vmatprep.subr.bf16.mxu0 0
        %5717 = vmatpush1.bf16.msra.mxu0 %v3650
        %5718 = vmatprep.subr.bf16.mxu0 0
        %5719 = vmatpush1.bf16.msra.mxu0 %v3653
        %5720 = vmatprep.subr.bf16.mxu0 0
        %5721 = vmatpush1.bf16.msra.mxu0 %v3656
        %5722 = vmatprep.subr.bf16.mxu0 0
        %5723 = vmatpush1.bf16.msra.mxu0 %v3659
        %5724 = vmatprep.subr.bf16.mxu0 0
        %5725 = vmatpush1.bf16.msra.mxu0 %v3662
        %5726 = vmatprep.subr.bf16.mxu0 0
        %5727 = vmatpush1.bf16.msra.mxu0 %v3665
        %5728 = vmatprep.subr.bf16.mxu0 0
        %5729 = vmatpush1.bf16.msra.mxu0 %v3668
        %5730 = vmatprep.subr.bf16.mxu0 0
        %5731 = vmatpush1.bf16.msra.mxu0 %v3671
        %5732 = vmatprep.subr.bf16.mxu0 0
        %5733 = vmatpush1.bf16.msra.mxu0 %v3674
        %5734 = vmatprep.subr.bf16.mxu0 0
        %5735 = vmatpush1.bf16.msra.mxu0 %v3677
        %5736 = vmatprep.subr.bf16.mxu0 0
        %5737 = vmatpush1.bf16.msra.mxu0 %v3680
        %5738 = vmatprep.subr.bf16.mxu0 0
        %5739 = vmatpush1.bf16.msra.mxu0 %v3683
        %5740 = vmatprep.subr.bf16.mxu0 0
        %5741 = vmatpush1.bf16.msra.mxu0 %v3686
        %5742 = vmatprep.subr.bf16.mxu0 0
        %5743 = vmatpush1.bf16.msra.mxu0 %v3689
        %5744 = vmatprep.subr.bf16.mxu0 0
        %5745 = vmatpush1.bf16.msra.mxu0 %v3692
        %5746 = vmatprep.subr.bf16.mxu0 0
        %5747 = vmatpush1.bf16.msra.mxu0 %v3695
        %5748 = vmatprep.mubr.bf16.mxu0 %v1353
        %5749 = vmatmul.mubr.bf16.gmra.mrb[0].mxu0 %v1352
        %v5750 = vpop.f32.mrb[0].mxu0
        %v5751 = vadd.f32 %v5687, %v5750
        %v5752 = vpop.f32.mrb[0].mxu0
        %v5753 = vpop.f32.mrb[0].mxu0
        %v5754 = vadd.f32 %v5690, %v5753
        %v5755 = vpop.f32.mrb[0].mxu0
        %5756 = vmatprep.mubr.bf16.mxu0 %v1377
        %5757 = vmatmul.mubr.bf16.gmra.mrb[0].mxu0 %v1376
        %v5758 = vpop.f32.mrb[0].mxu0
        %v5759 = vadd.f32 %v5695, %v5758
        %v5760 = vpop.f32.mrb[0].mxu0
        %v5761 = vpop.f32.mrb[0].mxu0
        %v5762 = vadd.f32 %v5698, %v5761
        %v5763 = vpop.f32.mrb[0].mxu0
        %5764 = vmatprep.mubr.bf16.mxu0 %v1401
        %5765 = vmatmul.mubr.bf16.gmra.mrb[0].mxu0 %v1400
        %v5766 = vpop.f32.mrb[0].mxu0
        %v5767 = vadd.f32 %v5703, %v5766
        %v5768 = vpop.f32.mrb[0].mxu0
        %v5769 = vpop.f32.mrb[0].mxu0
        %v5770 = vadd.f32 %v5706, %v5769
        %v5771 = vpop.f32.mrb[0].mxu0
        %5772 = vmatprep.mubr.bf16.mxu0 %v1425
        %5773 = vmatmul.mubr.bf16.gmra.mrb[0].mxu0 %v1424
        %v5774 = vpop.f32.mrb[0].mxu0
        %v5775 = vadd.f32 %v5711, %v5774
        %v5776 = vpop.f32.mrb[0].mxu0
        %v5777 = vpop.f32.mrb[0].mxu0
        %v5778 = vpop.f32.mrb[0].mxu0
        %5779 = vdwg.mxu0
        %5780 = vmatprep.subr.bf16.mxu0 0
        %5781 = vmatpush1.bf16.msra.mxu0 %v3698
        %5782 = vmatprep.subr.bf16.mxu0 0
        %5783 = vmatpush1.bf16.msra.mxu0 %v3701
        %5784 = vmatprep.subr.bf16.mxu0 0
        %5785 = vmatpush1.bf16.msra.mxu0 %v3704
        %5786 = vmatprep.subr.bf16.mxu0 0
        %5787 = vmatpush1.bf16.msra.mxu0 %v3707
        %5788 = vmatprep.subr.bf16.mxu0 0
        %5789 = vmatpush1.bf16.msra.mxu0 %v3710
        %5790 = vmatprep.subr.bf16.mxu0 0
        %5791 = vmatpush1.bf16.msra.mxu0 %v3713
        %5792 = vmatprep.subr.bf16.mxu0 0
        %5793 = vmatpush1.bf16.msra.mxu0 %v3716
        %5794 = vmatprep.subr.bf16.mxu0 0
        %5795 = vmatpush1.bf16.msra.mxu0 %v3719
        %5796 = vmatprep.subr.bf16.mxu0 0
        %5797 = vmatpush1.bf16.msra.mxu0 %v3722
        %5798 = vmatprep.subr.bf16.mxu0 0
        %5799 = vmatpush1.bf16.msra.mxu0 %v3725
        %5800 = vmatprep.subr.bf16.mxu0 0
        %5801 = vmatpush1.bf16.msra.mxu0 %v3728
        %5802 = vmatprep.subr.bf16.mxu0 0
        %5803 = vmatpush1.bf16.msra.mxu0 %v3731
        %5804 = vmatprep.subr.bf16.mxu0 0
        %5805 = vmatpush1.bf16.msra.mxu0 %v3734
        %5806 = vmatprep.subr.bf16.mxu0 0
        %5807 = vmatpush1.bf16.msra.mxu0 %v3737
        %5808 = vmatprep.subr.bf16.mxu0 0
        %5809 = vmatpush1.bf16.msra.mxu0 %v3740
        %5810 = vmatprep.subr.bf16.mxu0 0
        %5811 = vmatpush1.bf16.msra.mxu0 %v3743
        %5812 = vmatprep.mubr.bf16.mxu0 %v1355
        %5813 = vmatmul.mubr.bf16.gmra.mrb[0].mxu0 %v1354
        %v5814 = vpop.f32.mrb[0].mxu0
        %v5815 = vadd.f32 %v5751, %v5814
        %v5816 = vpop.f32.mrb[0].mxu0
        %v5817 = vpop.f32.mrb[0].mxu0
        %v5818 = vadd.f32 %v5754, %v5817
        %v5819 = vpop.f32.mrb[0].mxu0
        %5820 = vmatprep.mubr.bf16.mxu0 %v1379
        %5821 = vmatmul.mubr.bf16.gmra.mrb[0].mxu0 %v1378
        %v5822 = vpop.f32.mrb[0].mxu0
        %v5823 = vadd.f32 %v5759, %v5822
        %v5824 = vpop.f32.mrb[0].mxu0
        %v5825 = vpop.f32.mrb[0].mxu0
        %v5826 = vadd.f32 %v5762, %v5825
        %v5827 = vpop.f32.mrb[0].mxu0
        %5828 = vmatprep.mubr.bf16.mxu0 %v1403
        %5829 = vmatmul.mubr.bf16.gmra.mrb[0].mxu0 %v1402
        %v5830 = vpop.f32.mrb[0].mxu0
        %v5831 = vadd.f32 %v5767, %v5830
        %v5832 = vpop.f32.mrb[0].mxu0
        %v5833 = vpop.f32.mrb[0].mxu0
        %v5834 = vadd.f32 %v5770, %v5833
        %v5835 = vpop.f32.mrb[0].mxu0
        %5836 = vmatprep.mubr.bf16.mxu0 %v1427
        %5837 = vmatmul.mubr.bf16.gmra.mrb[0].mxu0 %v1426
        %v5838 = vpop.f32.mrb[0].mxu0
        %v5839 = vadd.f32 %v5775, %v5838
        %v5840 = vpop.f32.mrb[0].mxu0
        %v5841 = vpop.f32.mrb[0].mxu0
        %v5842 = vpop.f32.mrb[0].mxu0
        %5843 = vdwg.mxu0
        %5844 = vmatprep.subr.bf16.mxu0 0
        %5845 = vmatpush1.bf16.msra.mxu0 %v3746
        %5846 = vmatprep.subr.bf16.mxu0 0
        %5847 = vmatpush1.bf16.msra.mxu0 %v3749
        %5848 = vmatprep.subr.bf16.mxu0 0
        %5849 = vmatpush1.bf16.msra.mxu0 %v3752
        %5850 = vmatprep.subr.bf16.mxu0 0
        %5851 = vmatpush1.bf16.msra.mxu0 %v3755
        %5852 = vmatprep.subr.bf16.mxu0 0
        %5853 = vmatpush1.bf16.msra.mxu0 %v3758
        %5854 = vmatprep.subr.bf16.mxu0 0
        %5855 = vmatpush1.bf16.msra.mxu0 %v3761
        %5856 = vmatprep.subr.bf16.mxu0 0
        %5857 = vmatpush1.bf16.msra.mxu0 %v3764
        %5858 = vmatprep.subr.bf16.mxu0 0
        %5859 = vmatpush1.bf16.msra.mxu0 %v3767
        %5860 = vmatprep.subr.bf16.mxu0 0
        %5861 = vmatpush1.bf16.msra.mxu0 %v3770
        %5862 = vmatprep.subr.bf16.mxu0 0
        %5863 = vmatpush1.bf16.msra.mxu0 %v3773
        %5864 = vmatprep.subr.bf16.mxu0 0
        %5865 = vmatpush1.bf16.msra.mxu0 %v3776
        %5866 = vmatprep.subr.bf16.mxu0 0
        %5867 = vmatpush1.bf16.msra.mxu0 %v3779
        %5868 = vmatprep.subr.bf16.mxu0 0
        %5869 = vmatpush1.bf16.msra.mxu0 %v3782
        %5870 = vmatprep.subr.bf16.mxu0 0
        %5871 = vmatpush1.bf16.msra.mxu0 %v3785
        %5872 = vmatprep.subr.bf16.mxu0 0
        %5873 = vmatpush1.bf16.msra.mxu0 %v3788
        %5874 = vmatprep.subr.bf16.mxu0 0
        %5875 = vmatpush1.bf16.msra.mxu0 %v3791
        %5876 = vmatprep.mubr.bf16.mxu0 %v1357
        %5877 = vmatmul.mubr.bf16.gmra.mrb[0].mxu0 %v1356
        %v5878 = vpop.f32.mrb[0].mxu0
        %v5879 = vadd.f32 %v5815, %v5878
        %v5880 = vpop.f32.mrb[0].mxu0
        %v5881 = vpop.f32.mrb[0].mxu0
        %v5882 = vadd.f32 %v5818, %v5881
        %v5883 = vpop.f32.mrb[0].mxu0
        %5884 = vmatprep.mubr.bf16.mxu0 %v1381
        %5885 = vmatmul.mubr.bf16.gmra.mrb[0].mxu0 %v1380
        %v5886 = vpop.f32.mrb[0].mxu0
        %v5887 = vadd.f32 %v5823, %v5886
        %v5888 = vpop.f32.mrb[0].mxu0
        %v5889 = vpop.f32.mrb[0].mxu0
        %v5890 = vadd.f32 %v5826, %v5889
        %v5891 = vpop.f32.mrb[0].mxu0
        %5892 = vmatprep.mubr.bf16.mxu0 %v1405
        %5893 = vmatmul.mubr.bf16.gmra.mrb[0].mxu0 %v1404
        %v5894 = vpop.f32.mrb[0].mxu0
        %v5895 = vadd.f32 %v5831, %v5894
        %v5896 = vpop.f32.mrb[0].mxu0
        %v5897 = vpop.f32.mrb[0].mxu0
        %v5898 = vadd.f32 %v5834, %v5897
        %v5899 = vpop.f32.mrb[0].mxu0
        %5900 = vmatprep.mubr.bf16.mxu0 %v1429
        %5901 = vmatmul.mubr.bf16.gmra.mrb[0].mxu0 %v1428
        %v5902 = vpop.f32.mrb[0].mxu0
        %v5903 = vadd.f32 %v5839, %v5902
        %v5904 = vpop.f32.mrb[0].mxu0
        %v5905 = vpop.f32.mrb[0].mxu0
        %v5906 = vpop.f32.mrb[0].mxu0
        %5907 = vdwg.mxu0
        %5908 = vmatprep.subr.bf16.mxu0 0
        %5909 = vmatpush1.bf16.msra.mxu0 %v3794
        %5910 = vmatprep.subr.bf16.mxu0 0
        %5911 = vmatpush1.bf16.msra.mxu0 %v3797
        %5912 = vmatprep.subr.bf16.mxu0 0
        %5913 = vmatpush1.bf16.msra.mxu0 %v3800
        %5914 = vmatprep.subr.bf16.mxu0 0
        %5915 = vmatpush1.bf16.msra.mxu0 %v3803
        %5916 = vmatprep.subr.bf16.mxu0 0
        %5917 = vmatpush1.bf16.msra.mxu0 %v3806
        %5918 = vmatprep.subr.bf16.mxu0 0
        %5919 = vmatpush1.bf16.msra.mxu0 %v3809
        %5920 = vmatprep.subr.bf16.mxu0 0
        %5921 = vmatpush1.bf16.msra.mxu0 %v3812
        %5922 = vmatprep.subr.bf16.mxu0 0
        %5923 = vmatpush1.bf16.msra.mxu0 %v3815
        %5924 = vmatprep.subr.bf16.mxu0 0
        %5925 = vmatpush1.bf16.msra.mxu0 %v3818
        %5926 = vmatprep.subr.bf16.mxu0 0
        %5927 = vmatpush1.bf16.msra.mxu0 %v3821
        %5928 = vmatprep.subr.bf16.mxu0 0
        %5929 = vmatpush1.bf16.msra.mxu0 %v3824
        %5930 = vmatprep.subr.bf16.mxu0 0
        %5931 = vmatpush1.bf16.msra.mxu0 %v3827
        %5932 = vmatprep.subr.bf16.mxu0 0
        %5933 = vmatpush1.bf16.msra.mxu0 %v3830
        %5934 = vmatprep.subr.bf16.mxu0 0
        %5935 = vmatpush1.bf16.msra.mxu0 %v3833
        %5936 = vmatprep.subr.bf16.mxu0 0
        %5937 = vmatpush1.bf16.msra.mxu0 %v3836
        %5938 = vmatprep.subr.bf16.mxu0 0
        %5939 = vmatpush1.bf16.msra.mxu0 %v3839
        %5940 = vmatprep.mubr.bf16.mxu0 %v1359
        %5941 = vmatmul.mubr.bf16.gmra.mrb[0].mxu0 %v1358
        %v5942 = vpop.f32.mrb[0].mxu0
        %v5943 = vadd.f32 %v5879, %v5942
        %v5944 = vpop.f32.mrb[0].mxu0
        %v5945 = vpop.f32.mrb[0].mxu0
        %v5946 = vadd.f32 %v5882, %v5945
        %v5947 = vpop.f32.mrb[0].mxu0
        %5948 = vmatprep.mubr.bf16.mxu0 %v1383
        %5949 = vmatmul.mubr.bf16.gmra.mrb[0].mxu0 %v1382
        %v5950 = vpop.f32.mrb[0].mxu0
        %v5951 = vadd.f32 %v5887, %v5950
        %v5952 = vpop.f32.mrb[0].mxu0
        %v5953 = vpop.f32.mrb[0].mxu0
        %v5954 = vadd.f32 %v5890, %v5953
        %v5955 = vpop.f32.mrb[0].mxu0
        %5956 = vmatprep.mubr.bf16.mxu0 %v1407
        %5957 = vmatmul.mubr.bf16.gmra.mrb[0].mxu0 %v1406
        %v5958 = vpop.f32.mrb[0].mxu0
        %v5959 = vadd.f32 %v5895, %v5958
        %v5960 = vpop.f32.mrb[0].mxu0
        %v5961 = vpop.f32.mrb[0].mxu0
        %v5962 = vadd.f32 %v5898, %v5961
        %v5963 = vpop.f32.mrb[0].mxu0
        %5964 = vmatprep.mubr.bf16.mxu0 %v1431
        %5965 = vmatmul.mubr.bf16.gmra.mrb[0].mxu0 %v1430
        %v5966 = vpop.f32.mrb[0].mxu0
        %v5967 = vadd.f32 %v5903, %v5966
        %v5968 = vpop.f32.mrb[0].mxu0
        %v5969 = vpop.f32.mrb[0].mxu0
        %v5970 = vpop.f32.mrb[0].mxu0
        %5971 = vdwg.mxu0
        %5972 = vmatprep.subr.bf16.mxu0 0
        %5973 = vmatpush1.bf16.msra.mxu0 %v3842
        %5974 = vmatprep.subr.bf16.mxu0 0
        %5975 = vmatpush1.bf16.msra.mxu0 %v3845
        %5976 = vmatprep.subr.bf16.mxu0 0
        %5977 = vmatpush1.bf16.msra.mxu0 %v3848
        %5978 = vmatprep.subr.bf16.mxu0 0
        %5979 = vmatpush1.bf16.msra.mxu0 %v3851
        %5980 = vmatprep.subr.bf16.mxu0 0
        %5981 = vmatpush1.bf16.msra.mxu0 %v3854
        %5982 = vmatprep.subr.bf16.mxu0 0
        %5983 = vmatpush1.bf16.msra.mxu0 %v3857
        %5984 = vmatprep.subr.bf16.mxu0 0
        %5985 = vmatpush1.bf16.msra.mxu0 %v3860
        %5986 = vmatprep.subr.bf16.mxu0 0
        %5987 = vmatpush1.bf16.msra.mxu0 %v3863
        %5988 = vmatprep.subr.bf16.mxu0 0
        %5989 = vmatpush1.bf16.msra.mxu0 %v3866
        %5990 = vmatprep.subr.bf16.mxu0 0
        %5991 = vmatpush1.bf16.msra.mxu0 %v3869
        %5992 = vmatprep.subr.bf16.mxu0 0
        %5993 = vmatpush1.bf16.msra.mxu0 %v3872
        %5994 = vmatprep.subr.bf16.mxu0 0
        %5995 = vmatpush1.bf16.msra.mxu0 %v3875
        %5996 = vmatprep.subr.bf16.mxu0 0
        %5997 = vmatpush1.bf16.msra.mxu0 %v3878
        %5998 = vmatprep.subr.bf16.mxu0 0
        %5999 = vmatpush1.bf16.msra.mxu0 %v3881
        %6000 = vmatprep.subr.bf16.mxu0 0
        %6001 = vmatpush1.bf16.msra.mxu0 %v3884
        %6002 = vmatprep.subr.bf16.mxu0 0
        %6003 = vmatpush1.bf16.msra.mxu0 %v3887
        %6004 = vmatprep.mubr.bf16.mxu0 %v1361
        %6005 = vmatmul.mubr.bf16.gmra.mrb[0].mxu0 %v1360
        %v6006 = vpop.f32.mrb[0].mxu0
        %v6007 = vadd.f32 %v5943, %v6006
        %v6008 = vpop.f32.mrb[0].mxu0
        %v6009 = vpop.f32.mrb[0].mxu0
        %v6010 = vadd.f32 %v5946, %v6009
        %v6011 = vpop.f32.mrb[0].mxu0
        %6012 = vmatprep.mubr.bf16.mxu0 %v1385
        %6013 = vmatmul.mubr.bf16.gmra.mrb[0].mxu0 %v1384
        %v6014 = vpop.f32.mrb[0].mxu0
        %v6015 = vadd.f32 %v5951, %v6014
        %v6016 = vpop.f32.mrb[0].mxu0
        %v6017 = vpop.f32.mrb[0].mxu0
        %v6018 = vadd.f32 %v5954, %v6017
        %v6019 = vpop.f32.mrb[0].mxu0
        %6020 = vmatprep.mubr.bf16.mxu0 %v1409
        %6021 = vmatmul.mubr.bf16.gmra.mrb[0].mxu0 %v1408
        %v6022 = vpop.f32.mrb[0].mxu0
        %v6023 = vadd.f32 %v5959, %v6022
        %v6024 = vpop.f32.mrb[0].mxu0
        %v6025 = vpop.f32.mrb[0].mxu0
        %v6026 = vadd.f32 %v5962, %v6025
        %v6027 = vpop.f32.mrb[0].mxu0
        %6028 = vmatprep.mubr.bf16.mxu0 %v1433
        %6029 = vmatmul.mubr.bf16.gmra.mrb[0].mxu0 %v1432
        %v6030 = vpop.f32.mrb[0].mxu0
        %v6031 = vadd.f32 %v5967, %v6030
        %v6032 = vpop.f32.mrb[0].mxu0
        %v6033 = vpop.f32.mrb[0].mxu0
        %v6034 = vpop.f32.mrb[0].mxu0
        %6035 = vdwg.mxu0
        %6036 = vmatprep.subr.bf16.mxu0 0
        %6037 = vmatpush1.bf16.msra.mxu0 %v3890
        %6038 = vmatprep.subr.bf16.mxu0 0
        %6039 = vmatpush1.bf16.msra.mxu0 %v3893
        %6040 = vmatprep.subr.bf16.mxu0 0
        %6041 = vmatpush1.bf16.msra.mxu0 %v3896
        %6042 = vmatprep.subr.bf16.mxu0 0
        %6043 = vmatpush1.bf16.msra.mxu0 %v3899
        %6044 = vmatprep.subr.bf16.mxu0 0
        %6045 = vmatpush1.bf16.msra.mxu0 %v3902
        %6046 = vmatprep.subr.bf16.mxu0 0
        %6047 = vmatpush1.bf16.msra.mxu0 %v3905
        %6048 = vmatprep.subr.bf16.mxu0 0
        %6049 = vmatpush1.bf16.msra.mxu0 %v3908
        %6050 = vmatprep.subr.bf16.mxu0 0
        %6051 = vmatpush1.bf16.msra.mxu0 %v3911
        %6052 = vmatprep.subr.bf16.mxu0 0
        %6053 = vmatpush1.bf16.msra.mxu0 %v3914
        %6054 = vmatprep.subr.bf16.mxu0 0
        %6055 = vmatpush1.bf16.msra.mxu0 %v3917
        %6056 = vmatprep.subr.bf16.mxu0 0
        %6057 = vmatpush1.bf16.msra.mxu0 %v3920
        %6058 = vmatprep.subr.bf16.mxu0 0
        %6059 = vmatpush1.bf16.msra.mxu0 %v3923
        %6060 = vmatprep.subr.bf16.mxu0 0
        %6061 = vmatpush1.bf16.msra.mxu0 %v3926
        %6062 = vmatprep.subr.bf16.mxu0 0
        %6063 = vmatpush1.bf16.msra.mxu0 %v3929
        %6064 = vmatprep.subr.bf16.mxu0 0
        %6065 = vmatpush1.bf16.msra.mxu0 %v3932
        %6066 = vmatprep.subr.bf16.mxu0 0
        %6067 = vmatpush1.bf16.msra.mxu0 %v3935
        %6068 = vmatprep.mubr.bf16.mxu0 %v1363
        %6069 = vmatmul.mubr.bf16.gmra.mrb[0].mxu0 %v1362
        %v6070 = vpop.f32.mrb[0].mxu0
        %v6071 = vadd.f32 %v6007, %v6070
        %v6072 = vpop.f32.mrb[0].mxu0
        %v6073 = vpop.f32.mrb[0].mxu0
        %v6074 = vadd.f32 %v6010, %v6073
        %v6075 = vpop.f32.mrb[0].mxu0
        %6076 = vmatprep.mubr.bf16.mxu0 %v1387
        %6077 = vmatmul.mubr.bf16.gmra.mrb[0].mxu0 %v1386
        %v6078 = vpop.f32.mrb[0].mxu0
        %v6079 = vadd.f32 %v6015, %v6078
        %v6080 = vpop.f32.mrb[0].mxu0
        %v6081 = vpop.f32.mrb[0].mxu0
        %v6082 = vadd.f32 %v6018, %v6081
        %v6083 = vpop.f32.mrb[0].mxu0
        %6084 = vmatprep.mubr.bf16.mxu0 %v1411
        %6085 = vmatmul.mubr.bf16.gmra.mrb[0].mxu0 %v1410
        %v6086 = vpop.f32.mrb[0].mxu0
        %v6087 = vadd.f32 %v6023, %v6086
        %v6088 = vpop.f32.mrb[0].mxu0
        %v6089 = vpop.f32.mrb[0].mxu0
        %v6090 = vadd.f32 %v6026, %v6089
        %v6091 = vpop.f32.mrb[0].mxu0
        %6092 = vmatprep.mubr.bf16.mxu0 %v1435
        %6093 = vmatmul.mubr.bf16.gmra.mrb[0].mxu0 %v1434
        %v6094 = vpop.f32.mrb[0].mxu0
        %v6095 = vadd.f32 %v6031, %v6094
        %v6096 = vpop.f32.mrb[0].mxu0
        %v6097 = vpop.f32.mrb[0].mxu0
        %v6098 = vpop.f32.mrb[0].mxu0
        %6099 = vdwg.mxu0
        %6100 = vmatprep.subr.bf16.mxu0 0
        %6101 = vmatpush1.bf16.msra.mxu0 %v3938
        %6102 = vmatprep.subr.bf16.mxu0 0
        %6103 = vmatpush1.bf16.msra.mxu0 %v3941
        %6104 = vmatprep.subr.bf16.mxu0 0
        %6105 = vmatpush1.bf16.msra.mxu0 %v3944
        %6106 = vmatprep.subr.bf16.mxu0 0
        %6107 = vmatpush1.bf16.msra.mxu0 %v3947
        %6108 = vmatprep.subr.bf16.mxu0 0
        %6109 = vmatpush1.bf16.msra.mxu0 %v3950
        %6110 = vmatprep.subr.bf16.mxu0 0
        %6111 = vmatpush1.bf16.msra.mxu0 %v3953
        %6112 = vmatprep.subr.bf16.mxu0 0
        %6113 = vmatpush1.bf16.msra.mxu0 %v3956
        %6114 = vmatprep.subr.bf16.mxu0 0
        %6115 = vmatpush1.bf16.msra.mxu0 %v3959
        %6116 = vmatprep.subr.bf16.mxu0 0
        %6117 = vmatpush1.bf16.msra.mxu0 %v3962
        %6118 = vmatprep.subr.bf16.mxu0 0
        %6119 = vmatpush1.bf16.msra.mxu0 %v3965
        %6120 = vmatprep.subr.bf16.mxu0 0
        %6121 = vmatpush1.bf16.msra.mxu0 %v3968
        %6122 = vmatprep.subr.bf16.mxu0 0
        %6123 = vmatpush1.bf16.msra.mxu0 %v3971
        %6124 = vmatprep.subr.bf16.mxu0 0
        %6125 = vmatpush1.bf16.msra.mxu0 %v3974
        %6126 = vmatprep.subr.bf16.mxu0 0
        %6127 = vmatpush1.bf16.msra.mxu0 %v3977
        %6128 = vmatprep.subr.bf16.mxu0 0
        %6129 = vmatpush1.bf16.msra.mxu0 %v3980
        %6130 = vmatprep.subr.bf16.mxu0 0
        %6131 = vmatpush1.bf16.msra.mxu0 %v3983
        %6132 = vmatprep.mubr.bf16.mxu0 %v1365
        %6133 = vmatmul.mubr.bf16.gmra.mrb[0].mxu0 %v1364
        %v6134 = vpop.f32.mrb[0].mxu0
        %v6135 = vadd.f32 %v6071, %v6134
        %v6136 = vpop.f32.mrb[0].mxu0
        %v6137 = vpop.f32.mrb[0].mxu0
        %v6138 = vadd.f32 %v6074, %v6137
        %v6139 = vpop.f32.mrb[0].mxu0
        %6140 = vmatprep.mubr.bf16.mxu0 %v1389
        %6141 = vmatmul.mubr.bf16.gmra.mrb[0].mxu0 %v1388
        %v6142 = vpop.f32.mrb[0].mxu0
        %v6143 = vadd.f32 %v6079, %v6142
        %v6144 = vpop.f32.mrb[0].mxu0
        %v6145 = vpop.f32.mrb[0].mxu0
        %v6146 = vadd.f32 %v6082, %v6145
        %v6147 = vpop.f32.mrb[0].mxu0
        %6148 = vmatprep.mubr.bf16.mxu0 %v1413
        %6149 = vmatmul.mubr.bf16.gmra.mrb[0].mxu0 %v1412
        %v6150 = vpop.f32.mrb[0].mxu0
        %v6151 = vadd.f32 %v6087, %v6150
        %v6152 = vpop.f32.mrb[0].mxu0
        %v6153 = vpop.f32.mrb[0].mxu0
        %v6154 = vadd.f32 %v6090, %v6153
        %v6155 = vpop.f32.mrb[0].mxu0
        %6156 = vmatprep.mubr.bf16.mxu0 %v1437
        %6157 = vmatmul.mubr.bf16.gmra.mrb[0].mxu0 %v1436
        %v6158 = vpop.f32.mrb[0].mxu0
        %v6159 = vadd.f32 %v6095, %v6158
        %v6160 = vpop.f32.mrb[0].mxu0
        %v6161 = vpop.f32.mrb[0].mxu0
        %v6162 = vpop.f32.mrb[0].mxu0
        %6163 = vdwg.mxu0
        %6164 = vmatprep.subr.bf16.mxu0 0
        %6165 = vmatpush1.bf16.msra.mxu0 %v3986
        %6166 = vmatprep.subr.bf16.mxu0 0
        %6167 = vmatpush1.bf16.msra.mxu0 %v3989
        %6168 = vmatprep.subr.bf16.mxu0 0
        %6169 = vmatpush1.bf16.msra.mxu0 %v3992
        %6170 = vmatprep.subr.bf16.mxu0 0
        %6171 = vmatpush1.bf16.msra.mxu0 %v3995
        %6172 = vmatprep.subr.bf16.mxu0 0
        %6173 = vmatpush1.bf16.msra.mxu0 %v3998
        %6174 = vmatprep.subr.bf16.mxu0 0
        %6175 = vmatpush1.bf16.msra.mxu0 %v4001
        %6176 = vmatprep.subr.bf16.mxu0 0
        %6177 = vmatpush1.bf16.msra.mxu0 %v4004
        %6178 = vmatprep.subr.bf16.mxu0 0
        %6179 = vmatpush1.bf16.msra.mxu0 %v4007
        %6180 = vmatprep.subr.bf16.mxu0 0
        %6181 = vmatpush1.bf16.msra.mxu0 %v4010
        %6182 = vmatprep.subr.bf16.mxu0 0
        %6183 = vmatpush1.bf16.msra.mxu0 %v4013
        %6184 = vmatprep.subr.bf16.mxu0 0
        %6185 = vmatpush1.bf16.msra.mxu0 %v4016
        %6186 = vmatprep.subr.bf16.mxu0 0
        %6187 = vmatpush1.bf16.msra.mxu0 %v4019
        %6188 = vmatprep.subr.bf16.mxu0 0
        %6189 = vmatpush1.bf16.msra.mxu0 %v4022
        %6190 = vmatprep.subr.bf16.mxu0 0
        %6191 = vmatpush1.bf16.msra.mxu0 %v4025
        %6192 = vmatprep.subr.bf16.mxu0 0
        %6193 = vmatpush1.bf16.msra.mxu0 %v4028
        %6194 = vmatprep.subr.bf16.mxu0 0
        %6195 = vmatpush1.bf16.msra.mxu0 %v4031
        %6196 = vmatprep.mubr.bf16.mxu0 %v1367
        %6197 = vmatmul.mubr.bf16.gmra.mrb[0].mxu0 %v1366
        %v6198 = vpop.f32.mrb[0].mxu0
        %v6199 = vadd.f32 %v6135, %v6198
        %v6200 = vpop.f32.mrb[0].mxu0
        %v6201 = vpop.f32.mrb[0].mxu0
        %v6202 = vadd.f32 %v6138, %v6201
        %v6203 = vpop.f32.mrb[0].mxu0
        %6204 = vmatprep.mubr.bf16.mxu0 %v1391
        %6205 = vmatmul.mubr.bf16.gmra.mrb[0].mxu0 %v1390
        %v6206 = vpop.f32.mrb[0].mxu0
        %v6207 = vadd.f32 %v6143, %v6206
        %v6208 = vpop.f32.mrb[0].mxu0
        %v6209 = vpop.f32.mrb[0].mxu0
        %v6210 = vadd.f32 %v6146, %v6209
        %v6211 = vpop.f32.mrb[0].mxu0
        %6212 = vmatprep.mubr.bf16.mxu0 %v1415
        %6213 = vmatmul.mubr.bf16.gmra.mrb[0].mxu0 %v1414
        %v6214 = vpop.f32.mrb[0].mxu0
        %v6215 = vadd.f32 %v6151, %v6214
        %v6216 = vpop.f32.mrb[0].mxu0
        %v6217 = vpop.f32.mrb[0].mxu0
        %v6218 = vadd.f32 %v6154, %v6217
        %v6219 = vpop.f32.mrb[0].mxu0
        %6220 = vmatprep.mubr.bf16.mxu0 %v1439
        %6221 = vmatmul.mubr.bf16.gmra.mrb[0].mxu0 %v1438
        %v6222 = vpop.f32.mrb[0].mxu0
        %v6223 = vadd.f32 %v6159, %v6222
        %v6224 = vpop.f32.mrb[0].mxu0
        %v6225 = vpop.f32.mrb[0].mxu0
        %v6226 = vpop.f32.mrb[0].mxu0
        %6227 = vdwg.mxu0
        %6228 = vst [vmem:[%s215] sm:$0xff] %v5424
        %6229 = vst [vmem:[%s215 + $0x8] sm:$0xff] %v5426
        %6230 = vst [vmem:[%s215 + $0x10] sm:$0xff] %v6199
        %6231 = vst [vmem:[%s215 + $0x18] sm:$0xff] %v5428
        %6232 = vst [vmem:[%s215 + $0x20] sm:$0xff] %v5430
        %6233 = vst [vmem:[%s215 + $0x28] sm:$0xff] %v6202
        %6234 = vst [vmem:[%s215 + $0x30] sm:$0xff] %v5434
        %6235 = vst [vmem:[%s215 + $0x38] sm:$0xff] %v5436
        %6236 = vst [vmem:[%s215 + $0x40] sm:$0xff] %v6207
        %6237 = vst [vmem:[%s215 + $0x48] sm:$0xff] %v5438
        %6238 = vst [vmem:[%s215 + $0x50] sm:$0xff] %v5440
        %6239 = vst [vmem:[%s215 + $0x58] sm:$0xff] %v6210
        %6240 = vst [vmem:[%s215 + $0x60] sm:$0xff] %v5444
        %6241 = vst [vmem:[%s215 + $0x68] sm:$0xff] %v5446
        %6242 = vst [vmem:[%s215 + $0x70] sm:$0xff] %v6215
        %6243 = vst [vmem:[%s215 + $0x78] sm:$0xff] %v5448
        %6244 = vst [vmem:[%s215 + $0x80] sm:$0xff] %v5450
        %6245 = vst [vmem:[%s215 + $0x88] sm:$0xff] %v6218
        %6246 = vst [vmem:[%s215 + $0x90] sm:$0x1] %v5454
        %6247 = vst [vmem:[%s215 + $0x98] sm:$0x1] %v5456
        %6248 = vst [vmem:[%s215 + $0xa0] sm:$0x1] %v6223
        %s6249 = sand.u32 %s97, 1
        %s6250 = scalar_lea.sflag [#allocation4], %s6249
        %s6251 = sand.u32 %s97, 1
        %s6252 = smul.addr %s6251, 168
        %s6253 = scalar_lea.vmem [#allocation8], %s6252
        // Predicated region
        $region45: #{tpu_custom_call.1} parent=31 // pred_check
          %p6254 = pneg %p107
        $region46: #{tpu_custom_call.1} parent=31 // pred_check_branch
          %6256 = sbr.rel (%p6254) target = $region48
        $region47: #{tpu_custom_call.1} parent=31 // pred_region
          %s6257 = smul.u32 3, %s21
          %s6259 = ssub.s32 2688, 2688
          %6260 = vsyncadd %s6250, %s6259
          %s6261 = smul.addr %s6257, 128
          %s6262 = scalar_lea.hbm %s3, %s6261
          %s6263 = sshll.u32 %s6253, 4
          %s6264 = int_to_ptr.vmem [resolvable:$true] %s6263
          %6269 = dma.vmem_to_hbm [thread:$0]  %s6264, 2688, %s6262, %s6250, 384, 768, 24
        $region48: #{tpu_custom_call.1} parent=31 // pred_fallthru
          _
      $region32: #{tpu_custom_call.1} parent=5 // pred_fallthru
        _
      %p6270 = scmp.le.s32.totalorder 2, %s16
      // Predicated region
      $region49: #{tpu_custom_call.1} parent=5 // pred_check
        %p6271 = pneg %p6270
      $region50: #{tpu_custom_call.1} parent=5 // pred_check_branch
        %6273 = sbr.rel (%p6271) target = $region52
      $region51: #{tpu_custom_call.1} parent=5 // pred_region
        %s6274 = ssub.s32 %s16, 2
        // Predicated region
        $region53: #{tpu_custom_call.1} parent=51 // pred_check
          %p6275 = pneg %p113
        $region54: #{tpu_custom_call.1} parent=51 // pred_check_branch
          %6277 = sbr.rel (%p6275) target = $region56
        $region55: #{tpu_custom_call.1} parent=51 // pred_region
          %s6278 = sand.u32 %s98, 1
          %s6279 = scalar_lea.sflag [#allocation4], %s6278
          %s6280 = sand.u32 %s98, 1
          %s6281 = smul.addr %s6280, 168
          %s6282 = scalar_lea.vmem [#allocation8], %s6281
          %6283 = dma.done %s6279, 2688
        $region56: #{tpu_custom_call.1} parent=51 // pred_fallthru
          _
      $region52: #{tpu_custom_call.1} parent=5 // pred_fallthru
        _
    $region6: #{tpu_custom_call.1} parent=1 // loop_footer
      %s20 = sadd.s32 1, %s16
    $region7: #{tpu_custom_call.1} parent=1 // loop_footer_branch
      %15 = sbr.rel target = $region3
    $region8: #{tpu_custom_call.1} parent=1 // loop_exit
      _
    %6284 = vsyncpa [#allocation3], 1
    %s6285 = scalar_lea.sflag [#allocation3], 1
    %6286 = vsyncpa %s6285, 1
    %6287 = vsyncpa [#allocation6], 1
    %s6288 = scalar_lea.sflag [#allocation6], 1
    %6289 = vsyncpa %s6288, 1
    %6290 = vsyncpa [#allocation4], 1
    %s6291 = scalar_lea.sflag [#allocation4], 1
    %6292 = vsyncpa %s6291, 1

</llo_original>
